<compile_context>
chip_gen: v7x
topology: tpu7x:2x2x1
jax: 0.10.0
libtpu: 0.0.40
codegen_flags: <defaults>
</compile_context>

<pallas_src>
import math
from functools import partial

import numpy as np
import jax
import jax.numpy as jnp
from jax import lax
from jax.experimental import pallas as pl
from jax.experimental.pallas import tpu as pltpu


_LANES = 1024        # output row width (multiple of 128 lanes)
_CHUNK_ROWS = 16     # rows per inner-loop chunk (temps stay mostly in vregs)


def _round_up(x: int, m: int) -> int:
    return ((x + m - 1) // m) * m


def _cdiv(a: int, b: int) -> int:
    return -(-a // b)


def _jnp_reference(x, dim=16, M=10000):
    """Plain-XLA SinusoidalPosEmb.forward (also used as the small-N bypass)."""
    half_dim = dim // 2
    scale = math.log(M) / half_dim
    freq = jnp.exp(jnp.arange(half_dim, dtype=jnp.float32) * -scale)
    emb = x[..., None].astype(jnp.float32) * freq
    return jnp.concatenate([jnp.sin(emb), jnp.cos(emb)], axis=-1)


def _sin_pos_emb_kernel(bmat_ref, freq_ref, phase_ref, x_ref, o_ref, *, chunk_rows):
    # bmat_ref : (P, LANES) 0/1 selection matrix, xb[r,l] = x[r, l//dim]
    # freq_ref : (1, LANES) per-lane frequency  freq[(l % dim) % half_dim]
    # phase_ref: (1, LANES) 0.0 on sin lanes, pi/2 on cos lanes (cos z = sin(z+pi/2))
    # x_ref    : (tile_r, P) positions, o_ref: (tile_r, LANES) packed embeddings
    bmat = bmat_ref[...]
    freq = freq_ref[...]
    phase = phase_ref[...]
    n_chunks = x_ref.shape[0] // chunk_rows

    def body(c, carry):
        r0 = pl.multiple_of(c * chunk_rows, chunk_rows)
        xk = x_ref[pl.ds(r0, chunk_rows), :]                      # (CH, P)
        # Exact lane-broadcast on the (otherwise idle) MXU: bmat is 0/1 so the
        # HIGHEST-precision f32 matmul reproduces x bit-exactly.
        xb = jnp.dot(xk, bmat, precision=lax.Precision.HIGHEST,
                     preferred_element_type=jnp.float32)          # (CH, LANES)
        o_ref[pl.ds(r0, chunk_rows), :] = (
            jnp.sin(xb * freq + phase).astype(o_ref.dtype))
        return carry

    lax.fori_loop(0, n_chunks, body, 0)


def sinusoidal_pos_emb(x, dim: int = 16, M: int = 10000, *,
                       tile_positions: int = 32768,
                       out_dtype=jnp.float32,
                       min_pallas_n: int = 1024):
    """JAX/Pallas equivalent of SinusoidalPosEmb.forward."""
    orig_shape = x.shape
    xf = jnp.asarray(x, jnp.float32).reshape(-1)
    n = int(xf.shape[0])
    half_dim = dim // 2
    feat = 2 * half_dim  # matches torch's cat(sin, cos)

    pallas_ok = (dim % 2 == 0 and 0 < dim <= 128 and _LANES % dim == 0
                 and n >= max(min_pallas_n, 1))
    if not pallas_ok:
        # Tiny inputs (typical diffusion-timestep batches) or odd/unpackable
        # dims: plain XLA fuses this for free; Pallas launch cost would dominate.
        emb = _jnp_reference(xf, dim=dim, M=M).astype(out_dtype)
        return emb.reshape(orig_shape + (feat,))

    P = _LANES // dim                 # positions packed per output row
    R = _cdiv(n, P)                   # rows needed

    # Tile selection: ~2 MiB output tiles to amortize per-step overhead, and
    # >=2 grid steps whenever possible so v7x megacore splits the work.
    target_rows = max(_CHUNK_ROWS, (tile_positions * dim) // _LANES)
    steps = max(1, _cdiv(R, target_rows))
    if R > _CHUNK_ROWS:
        steps = max(steps, 2)
    tile_r = max(_CHUNK_ROWS, _round_up(_cdiv(R, steps), _CHUNK_ROWS))
    R_pad = _round_up(R, tile_r)
    grid = (R_pad // tile_r,)
    n_pad = R_pad * P

    if n_pad != n:
        xf = jnp.pad(xf, (0, n_pad - n))
    x2d = xf.reshape(R_pad, P)

    # Hoisted constants (resident VMEM inputs; fetched once, index_map -> (0,0)).
    lane = np.arange(_LANES)
    d_lane = lane % dim
    scale = math.log(M) / half_dim
    freq = jnp.exp(jnp.arange(half_dim, dtype=jnp.float32) * -scale)   # same expr as reference
    freq_row = freq[np.asarray(d_lane % half_dim)][None, :]            # (1, LANES)
    phase_row = jnp.asarray(
        np.where(d_lane < half_dim, 0.0, np.pi / 2.0), dtype=jnp.float32)[None, :]
    bmat = jnp.asarray((lane[None, :] // dim) == np.arange(P)[:, None],
                       dtype=jnp.float32)                              # (P, LANES)

    out_itemsize = jnp.dtype(out_dtype).itemsize
    in_tile_vmem = (tile_r // 8) * max(1, _cdiv(P, 128)) * (8 * 128 * 4)
    out_tile_vmem = tile_r * _LANES * out_itemsize
    const_vmem = (P + 2) * _LANES * 4
    vmem_limit = min(96 * 1024 * 1024,
                     2 * (in_tile_vmem + out_tile_vmem) + const_vmem + (4 << 20))

    kernel = partial(_sin_pos_emb_kernel, chunk_rows=_CHUNK_ROWS)

    out = pl.pallas_call(
        kernel,
        out_shape=jax.ShapeDtypeStruct((R_pad, _LANES), out_dtype),
        grid=grid,
        in_specs=[
            pl.BlockSpec((P, _LANES), lambda i: (0, 0)),       # bmat (resident)
            pl.BlockSpec((1, _LANES), lambda i: (0, 0)),       # freq (resident)
            pl.BlockSpec((1, _LANES), lambda i: (0, 0)),       # phase (resident)
            pl.BlockSpec((tile_r, P), lambda i: (i, 0)),       # positions
        ],
        out_specs=pl.BlockSpec((tile_r, _LANES), lambda i: (i, 0)),
        compiler_params=pltpu.CompilerParams(
            dimension_semantics=("parallel",),
            vmem_limit_bytes=int(vmem_limit),
        ),
        cost_estimate=pl.CostEstimate(
            flops=R_pad * _LANES * (2 * P + 2),
            transcendentals=R_pad * _LANES,
            bytes_accessed=n_pad * 4 + R_pad * _LANES * out_itemsize,
        ),
    )(bmat, freq_row, phase_row, x2d)

    # (R_pad, LANES) is already row-major (n_pad, dim): free reshape, no transpose.
    emb = out.reshape(n_pad, dim)
    if n_pad != n:
        emb = emb[:n]   # only copies when n is not tile-aligned
    return emb.reshape(orig_shape + (feat,))


if __name__ == "__main__":
    key = jax.random.PRNGKey(0)
    k1, k2, k3 = jax.random.split(key, 3)

    # 1) typical use: small batch of timestep-like scalars -> XLA bypass path
    x_small = jax.random.uniform(k1, (8,), dtype=jnp.float32) * 100.0
    out_small = jax.block_until_ready(sinusoidal_pos_emb(x_small, dim=16, M=10000))
    ref_small = _jnp_reference(x_small, dim=16, M=10000)
    assert out_small.shape == (8, 16), out_small.shape
    assert jnp.allclose(out_small, ref_small, atol=2e-5, rtol=2e-5), "bypass mismatch"

    # 2) same input, forced through the Pallas kernel
    out_forced = jax.block_until_ready(
        sinusoidal_pos_emb(x_small, dim=16, M=10000, min_pallas_n=0))
    assert out_forced.shape == (8, 16), out_forced.shape
    assert jnp.allclose(out_forced, ref_small, atol=2e-5, rtol=2e-5), "pallas mismatch (1-D)"

    # 3) multi-dim input through the Pallas kernel
    x_md = jax.random.uniform(k2, (2, 4), dtype=jnp.float32) * 100.0
    out_md = jax.block_until_ready(
        sinusoidal_pos_emb(x_md, dim=16, M=10000, min_pallas_n=0))
    ref_md = _jnp_reference(x_md, dim=16, M=10000)
    assert out_md.shape == (2, 4, 16), out_md.shape
    assert jnp.allclose(out_md, ref_md, atol=2e-5, rtol=2e-5), "pallas mismatch (2-D)"

    # 4) larger 1-D input: default path uses the kernel with a 2-step parallel grid
    x_big = jax.random.uniform(k3, (2048,), dtype=jnp.float32) * 100.0
    out_big = jax.block_until_ready(sinusoidal_pos_emb(x_big, dim=16, M=10000))
    ref_big = _jnp_reference(x_big, dim=16, M=10000)
    assert out_big.shape == (2048, 16), out_big.shape
    assert jnp.allclose(out_big, ref_big, atol=2e-5, rtol=2e-5), "pallas mismatch (large)"

    print("KERNEL_OK")
</pallas_src>

<mosaic_0001>
module attributes {stable_mosaic.version = 11 : i64} {
  func.func @_sin_pos_emb_kernel(%arg0: i32, %arg1: memref<64x1024xf32, #tpu.memory_space<vmem>>, %arg2: memref<1x1024xf32, #tpu.memory_space<vmem>>, %arg3: memref<1x1024xf32, #tpu.memory_space<vmem>>, %arg4: memref<16x64xf32, #tpu.memory_space<vmem>>, %arg5: memref<16x1024xf32, #tpu.memory_space<vmem>>) attributes {dimension_semantics = [#tpu.dimension_semantics<parallel>], iteration_bounds = array<i64: 1>, scalar_prefetch = 0 : i64, scratch_operands = 0 : i64, tpu.core_type = #tpu.core_type<tc>, window_params = [{pipeline_mode = #tpu.pipeline_mode<synchronous>, transform_indices = @transform_0, window_bounds = array<i64: 64, 1024>}, {pipeline_mode = #tpu.pipeline_mode<synchronous>, transform_indices = @transform_1, window_bounds = array<i64: 1, 1024>}, {pipeline_mode = #tpu.pipeline_mode<synchronous>, transform_indices = @transform_2, window_bounds = array<i64: 1, 1024>}, {transform_indices = @transform_3, window_bounds = array<i64: 16, 64>}, {transform_indices = @transform_4, window_bounds = array<i64: 16, 1024>}]} {
    %c0 = arith.constant 0 : index
    %c0_0 = arith.constant 0 : index
    %0 = vector.load %arg1[%c0, %c0_0] : memref<64x1024xf32, #tpu.memory_space<vmem>>, vector<64x1024xf32>
    %c0_1 = arith.constant 0 : index
    %c0_2 = arith.constant 0 : index
    %1 = vector.load %arg2[%c0_1, %c0_2] : memref<1x1024xf32, #tpu.memory_space<vmem>>, vector<1x1024xf32>
    %c0_3 = arith.constant 0 : index
    %c0_4 = arith.constant 0 : index
    %2 = vector.load %arg3[%c0_3, %c0_4] : memref<1x1024xf32, #tpu.memory_space<vmem>>, vector<1x1024xf32>
    %c0_i32 = arith.constant 0 : i32
    %c16_i32 = arith.constant 16 : i32
    %3 = arith.muli %c0_i32, %c16_i32 : i32
    %4 = tpu.assume_multiple %3, 16 : i32
    %5 = arith.index_cast %4 : i32 to index
    %c0_5 = arith.constant 0 : index
    %6 = vector.load %arg4[%5, %c0_5] : memref<16x64xf32, #tpu.memory_space<vmem>>, vector<16x64xf32>
    %cst = arith.constant dense<0.000000e+00> : vector<16x1024xf32>
    %7 = tpu.matmul %6, %0, %cst {dimension_numbers = #tpu.dot_dimension_numbers<[1], [0], [0], [1], [0, 0, 1, 1], [], []>, precision = #tpu.contract_precision<fp32>} : vector<16x64xf32>, vector<64x1024xf32>, vector<16x1024xf32> -> vector<16x1024xf32>
    %8 = vector.broadcast %1 : vector<1x1024xf32> to vector<16x1024xf32>
    %9 = arith.mulf %7, %8 : vector<16x1024xf32>
    %10 = vector.broadcast %2 : vector<1x1024xf32> to vector<16x1024xf32>
    %11 = arith.addf %9, %10 : vector<16x1024xf32>
    %12 = math.sin %11 : vector<16x1024xf32>
    %13 = arith.index_cast %4 : i32 to index
    %c0_6 = arith.constant 0 : index
    %14 = vector.load %arg5[%13, %c0_6] : memref<16x1024xf32, #tpu.memory_space<vmem>>, vector<16x1024xf32>
    tpu.vector_store %arg5[%13, %c0_6], %12 {strides = array<i32>} : memref<16x1024xf32, #tpu.memory_space<vmem>>, vector<16x1024xf32>,
    %c1_i32 = arith.constant 1 : i32
    return
  }
  func.func @transform_0(%arg0: i32) -> (i32, i32) {
    %c0_i32 = arith.constant 0 : i32
    %c0_i32_0 = arith.constant 0 : i32
    %c0_i32_1 = arith.constant 0 : i32
    return %c0_i32, %c0_i32_0 : i32, i32
  }
  func.func @transform_1(%arg0: i32) -> (i32, i32) {
    %c0_i32 = arith.constant 0 : i32
    %c0_i32_0 = arith.constant 0 : i32
    %c0_i32_1 = arith.constant 0 : i32
    return %c0_i32, %c0_i32_0 : i32, i32
  }
  func.func @transform_2(%arg0: i32) -> (i32, i32) {
    %c0_i32 = arith.constant 0 : i32
    %c0_i32_0 = arith.constant 0 : i32
    %c0_i32_1 = arith.constant 0 : i32
    return %c0_i32, %c0_i32_0 : i32, i32
  }
  func.func @transform_3(%arg0: i32) -> (i32, i32) {
    %c0_i32 = arith.constant 0 : i32
    %c0_i32_0 = arith.constant 0 : i32
    return %arg0, %c0_i32 : i32, i32
  }
  func.func @transform_4(%arg0: i32) -> (i32, i32) {
    %c0_i32 = arith.constant 0 : i32
    %c0_i32_0 = arith.constant 0 : i32
    return %arg0, %c0_i32 : i32, i32
  }
}

</mosaic_0001>

<llo_original>
// kernel: tpu_custom_call.1
$region0: #{tpu_custom_call.1}
  #allocation0 [shape = 'u32[]', space=smem, size = 0x4, offset = 0x4, fixed_abs, tag = 'smem constant byte address 0x4 - core index']
  #allocation1 [shape = 'u32[144,128]{1,0:T(1,128)}', space=vmem, size = 0x12000, scoped, tag = 'internal scratch']
  %s0 = inlined_call_operand.hbm [shape: f32[64,1024], index: 0, kind: input, shape index: {}]
  %s1 = inlined_call_operand.hbm [shape: f32[1,1024], index: 1, kind: input, shape index: {}]
  %s2 = inlined_call_operand.hbm [shape: f32[1,1024], index: 2, kind: input, shape index: {}]
  %s3 = inlined_call_operand.hbm [shape: f32[16,64], index: 3, kind: input, shape index: {}]
  %s4 = inlined_call_operand.hbm [shape: f32[16,1024], index: 4, kind: output, shape index: {}]
  %s5 = sld [smem:[#allocation0]]
  $region42: #{tpu_custom_call.1} parent=0
    _
  %s7 = ssub.s32 1, %s5
  %s8 = scalar_select 0, %s7, %s5
  $region1: #{tpu_custom_call.1} parent=0
    #allocation2 [shape = 'u8[262144]{0}', space=vmem, size = 0x40000, scoped, tag = 'input window, operand 0, single buffered']
    #allocation3 [shape = 's32[1]{0}', space=sflag, size = 0x4, scoped, tag = 'scoped memory for tpu_custom_call.1']
    #allocation4 [shape = 's32[1]{0}', space=sflag, size = 0x4, scoped, tag = 'scoped memory for tpu_custom_call.1']
    #allocation5 [shape = 'u8[4096]{0}', space=vmem, size = 0x1000, scoped, tag = 'input window, operand 1, single buffered']
    #allocation6 [shape = 's32[1]{0}', space=sflag, size = 0x4, scoped, tag = 'scoped memory for tpu_custom_call.1']
    #allocation7 [shape = 'u8[4096]{0}', space=vmem, size = 0x1000, scoped, tag = 'input window, operand 2, single buffered']
    #allocation8 [shape = 'u8[8192]{0}', space=vmem, size = 0x2000, scoped, tag = 'input window, operand 3, single buffered']
    #allocation9 [shape = 's32[1]{0}', space=sflag, size = 0x4, scoped, tag = 'scoped memory for tpu_custom_call.1']
    #allocation10 [shape = 'u8[65536]{0}', space=vmem, size = 0x10000, scoped, tag = 'output window, operand 0, single buffered']
    %9 = vsyncpa [#allocation3], 0
    %10 = vsyncpa [#allocation6], 0
    %11 = vsyncpa [#allocation9], 0
    %12 = vsyncpa [#allocation4], 0
    // Predicated region
    $region2: #{tpu_custom_call.1} parent=1 // pred_check
      _
    $region3: #{tpu_custom_call.1} parent=1 // pred_check_branch
      %14 = sbr.rel (0) target = $region5
    $region4: #{tpu_custom_call.1} parent=1 // pred_region
      %s16 = ssub.s32 8192, 8192
      %17 = vsyncadd [#allocation3], %s16
      %s18 = sshll.u32 [#allocation2], 4
      %s19 = int_to_ptr.vmem [resolvable:$true] %s18
      %24 = dma.hbm_to_vmem [thread:$0]  %s0, 8192, %s19, [#allocation3], 1024, 1024, 64
    $region5: #{tpu_custom_call.1} parent=1 // pred_fallthru
      _
    // Predicated region
    $region6: #{tpu_custom_call.1} parent=1 // pred_check
      _
    $region7: #{tpu_custom_call.1} parent=1 // pred_check_branch
      %26 = sbr.rel (0) target = $region9
    $region8: #{tpu_custom_call.1} parent=1 // pred_region
      %s28 = ssub.s32 128, 128
      %29 = vsyncadd [#allocation6], %s28
      %s31 = sshll.u32 [#allocation5], 4
      %s32 = int_to_ptr.vmem [resolvable:$true] %s31
      %34 = dma.hbm_to_vmem [thread:$0]  %s1, 128, %s32, [#allocation6]
    $region9: #{tpu_custom_call.1} parent=1 // pred_fallthru
      _
    // Predicated region
    $region10: #{tpu_custom_call.1} parent=1 // pred_check
      _
    $region11: #{tpu_custom_call.1} parent=1 // pred_check_branch
      %36 = sbr.rel (0) target = $region13
    $region12: #{tpu_custom_call.1} parent=1 // pred_region
      %s38 = ssub.s32 128, 128
      %39 = vsyncadd [#allocation6], %s38
      %s41 = sshll.u32 [#allocation7], 4
      %s42 = int_to_ptr.vmem [resolvable:$true] %s41
      %44 = dma.hbm_to_vmem [thread:$0]  %s2, 128, %s42, [#allocation6]
    $region13: #{tpu_custom_call.1} parent=1 // pred_fallthru
      _
    // Predicated region
    $region14: #{tpu_custom_call.1} parent=1 // pred_check
      _
    $region15: #{tpu_custom_call.1} parent=1 // pred_check_branch
      %46 = sbr.rel (0) target = $region17
    $region16: #{tpu_custom_call.1} parent=1 // pred_region
      %s48 = ssub.s32 256, 256
      %49 = vsyncadd [#allocation9], %s48
      %s50 = sshll.u32 [#allocation8], 4
      %s51 = int_to_ptr.vmem [resolvable:$true] %s50
      %56 = dma.hbm_to_vmem [thread:$0]  %s3, 256, %s51, [#allocation9], 128, 128, 8
    $region17: #{tpu_custom_call.1} parent=1 // pred_fallthru
      _
    // Predicated region
    $region18: #{tpu_custom_call.1} parent=1 // pred_check
      _
    $region19: #{tpu_custom_call.1} parent=1 // pred_check_branch
      %58 = sbr.rel (0) target = $region21
    $region20: #{tpu_custom_call.1} parent=1 // pred_region
      %59 = dma.done [#allocation3], 8192
    $region21: #{tpu_custom_call.1} parent=1 // pred_fallthru
      _
    // Predicated region
    $region22: #{tpu_custom_call.1} parent=1 // pred_check
      _
    $region23: #{tpu_custom_call.1} parent=1 // pred_check_branch
      %61 = sbr.rel (0) target = $region25
    $region24: #{tpu_custom_call.1} parent=1 // pred_region
      %62 = dma.done [#allocation6], 128
    $region25: #{tpu_custom_call.1} parent=1 // pred_fallthru
      _
    // Predicated region
    $region26: #{tpu_custom_call.1} parent=1 // pred_check
      _
    $region27: #{tpu_custom_call.1} parent=1 // pred_check_branch
      %64 = sbr.rel (0) target = $region29
    $region28: #{tpu_custom_call.1} parent=1 // pred_region
      %65 = dma.done [#allocation6], 128
    $region29: #{tpu_custom_call.1} parent=1 // pred_fallthru
      _
    // Predicated region
    $region30: #{tpu_custom_call.1} parent=1 // pred_check
      _
    $region31: #{tpu_custom_call.1} parent=1 // pred_check_branch
      %67 = sbr.rel (0) target = $region33
    $region32: #{tpu_custom_call.1} parent=1 // pred_region
      %68 = dma.done [#allocation9], 256
    $region33: #{tpu_custom_call.1} parent=1 // pred_fallthru
      _
    %v69 = vld [vmem:[#allocation2] sm:$0xff]
    %v70 = vld [vmem:[#allocation2 + $0x8] sm:$0xff]
    %v71 = vld [vmem:[#allocation2 + $0x10] sm:$0xff]
    %v72 = vld [vmem:[#allocation2 + $0x18] sm:$0xff]
    %v73 = vld [vmem:[#allocation2 + $0x20] sm:$0xff]
    %v74 = vld [vmem:[#allocation2 + $0x28] sm:$0xff]
    %v75 = vld [vmem:[#allocation2 + $0x30] sm:$0xff]
    %v76 = vld [vmem:[#allocation2 + $0x38] sm:$0xff]
    %v77 = vld [vmem:[#allocation2 + $0x40] sm:$0xff]
    %v78 = vld [vmem:[#allocation2 + $0x48] sm:$0xff]
    %v79 = vld [vmem:[#allocation2 + $0x50] sm:$0xff]
    %v80 = vld [vmem:[#allocation2 + $0x58] sm:$0xff]
    %v81 = vld [vmem:[#allocation2 + $0x60] sm:$0xff]
    %v82 = vld [vmem:[#allocation2 + $0x68] sm:$0xff]
    %v83 = vld [vmem:[#allocation2 + $0x70] sm:$0xff]
    %v84 = vld [vmem:[#allocation2 + $0x78] sm:$0xff]
    %v85 = vld [vmem:[#allocation2 + $0x80] sm:$0xff]
    %v86 = vld [vmem:[#allocation2 + $0x88] sm:$0xff]
    %v87 = vld [vmem:[#allocation2 + $0x90] sm:$0xff]
    %v88 = vld [vmem:[#allocation2 + $0x98] sm:$0xff]
    %v89 = vld [vmem:[#allocation2 + $0xa0] sm:$0xff]
    %v90 = vld [vmem:[#allocation2 + $0xa8] sm:$0xff]
    %v91 = vld [vmem:[#allocation2 + $0xb0] sm:$0xff]
    %v92 = vld [vmem:[#allocation2 + $0xb8] sm:$0xff]
    %v93 = vld [vmem:[#allocation2 + $0xc0] sm:$0xff]
    %v94 = vld [vmem:[#allocation2 + $0xc8] sm:$0xff]
    %v95 = vld [vmem:[#allocation2 + $0xd0] sm:$0xff]
    %v96 = vld [vmem:[#allocation2 + $0xd8] sm:$0xff]
    %v97 = vld [vmem:[#allocation2 + $0xe0] sm:$0xff]
    %v98 = vld [vmem:[#allocation2 + $0xe8] sm:$0xff]
    %v99 = vld [vmem:[#allocation2 + $0xf0] sm:$0xff]
    %v100 = vld [vmem:[#allocation2 + $0xf8] sm:$0xff]
    %v101 = vld [vmem:[#allocation2 + $0x100] sm:$0xff]
    %v102 = vld [vmem:[#allocation2 + $0x108] sm:$0xff]
    %v103 = vld [vmem:[#allocation2 + $0x110] sm:$0xff]
    %v104 = vld [vmem:[#allocation2 + $0x118] sm:$0xff]
    %v105 = vld [vmem:[#allocation2 + $0x120] sm:$0xff]
    %v106 = vld [vmem:[#allocation2 + $0x128] sm:$0xff]
    %v107 = vld [vmem:[#allocation2 + $0x130] sm:$0xff]
    %v108 = vld [vmem:[#allocation2 + $0x138] sm:$0xff]
    %v109 = vld [vmem:[#allocation2 + $0x140] sm:$0xff]
    %v110 = vld [vmem:[#allocation2 + $0x148] sm:$0xff]
    %v111 = vld [vmem:[#allocation2 + $0x150] sm:$0xff]
    %v112 = vld [vmem:[#allocation2 + $0x158] sm:$0xff]
    %v113 = vld [vmem:[#allocation2 + $0x160] sm:$0xff]
    %v114 = vld [vmem:[#allocation2 + $0x168] sm:$0xff]
    %v115 = vld [vmem:[#allocation2 + $0x170] sm:$0xff]
    %v116 = vld [vmem:[#allocation2 + $0x178] sm:$0xff]
    %v117 = vld [vmem:[#allocation2 + $0x180] sm:$0xff]
    %v118 = vld [vmem:[#allocation2 + $0x188] sm:$0xff]
    %v119 = vld [vmem:[#allocation2 + $0x190] sm:$0xff]
    %v120 = vld [vmem:[#allocation2 + $0x198] sm:$0xff]
    %v121 = vld [vmem:[#allocation2 + $0x1a0] sm:$0xff]
    %v122 = vld [vmem:[#allocation2 + $0x1a8] sm:$0xff]
    %v123 = vld [vmem:[#allocation2 + $0x1b0] sm:$0xff]
    %v124 = vld [vmem:[#allocation2 + $0x1b8] sm:$0xff]
    %v125 = vld [vmem:[#allocation2 + $0x1c0] sm:$0xff]
    %v126 = vld [vmem:[#allocation2 + $0x1c8] sm:$0xff]
    %v127 = vld [vmem:[#allocation2 + $0x1d0] sm:$0xff]
    %v128 = vld [vmem:[#allocation2 + $0x1d8] sm:$0xff]
    %v129 = vld [vmem:[#allocation2 + $0x1e0] sm:$0xff]
    %v130 = vld [vmem:[#allocation2 + $0x1e8] sm:$0xff]
    %v131 = vld [vmem:[#allocation2 + $0x1f0] sm:$0xff]
    %v132 = vld [vmem:[#allocation2 + $0x1f8] sm:$0xff]
    %v133 = vld [vmem:[#allocation5] sm:$0xff]
    %v134 = vld [vmem:[#allocation7] sm:$0xff]
    %v135 = vld [vmem:[#allocation8] sm:$0xff]
    %v136 = vld [vmem:[#allocation8 + $0x8] sm:$0xff]
    %vm137 = vcmask 523264
    %v139 = vsel %vm137, %v135, 0
    %v142 = vsel %vm137, %v136, 0
    %v144 = vand.u32 %v70, 4294901760
    %145 = vmatprep.subr.mxu0 %v144
    %v146 = vand.u32 %v69, 4294901760
    %147 = vmatpush1.msra.mxu0 %v146
    %v148 = vand.u32 %v78, 4294901760
    %149 = vmatprep.subr.mxu0 %v148
    %v150 = vand.u32 %v77, 4294901760
    %151 = vmatpush1.msra.mxu0 %v150
    %v152 = vand.u32 %v86, 4294901760
    %153 = vmatprep.subr.mxu0 %v152
    %v154 = vand.u32 %v85, 4294901760
    %155 = vmatpush1.msra.mxu0 %v154
    %v156 = vand.u32 %v94, 4294901760
    %157 = vmatprep.subr.mxu0 %v156
    %v158 = vand.u32 %v93, 4294901760
    %159 = vmatpush1.msra.mxu0 %v158
    %v160 = vand.u32 %v102, 4294901760
    %161 = vmatprep.subr.mxu0 %v160
    %v162 = vand.u32 %v101, 4294901760
    %163 = vmatpush1.msra.mxu0 %v162
    %v164 = vand.u32 %v110, 4294901760
    %165 = vmatprep.subr.mxu0 %v164
    %v166 = vand.u32 %v109, 4294901760
    %167 = vmatpush1.msra.mxu0 %v166
    %v168 = vand.u32 %v118, 4294901760
    %169 = vmatprep.subr.mxu0 %v168
    %v170 = vand.u32 %v117, 4294901760
    %171 = vmatpush1.msra.mxu0 %v170
    %v172 = vand.u32 %v126, 4294901760
    %173 = vmatprep.subr.mxu0 %v172
    %v174 = vand.u32 %v125, 4294901760
    %175 = vmatpush1.msra.mxu0 %v174
    %176 = vmatprep.subr.mxu0 0.0
    %177 = vmatpush1.msra.mxu0 0.0
    %178 = vmatprep.subr.mxu0 0.0
    %179 = vmatpush1.msra.mxu0 0.0
    %180 = vmatprep.subr.mxu0 0.0
    %181 = vmatpush1.msra.mxu0 0.0
    %182 = vmatprep.subr.mxu0 0.0
    %183 = vmatpush1.msra.mxu0 0.0
    %184 = vmatprep.subr.mxu0 0.0
    %185 = vmatpush1.msra.mxu0 0.0
    %186 = vmatprep.subr.mxu0 0.0
    %187 = vmatpush1.msra.mxu0 0.0
    %188 = vmatprep.subr.mxu0 0.0
    %189 = vmatpush1.msra.mxu0 0.0
    %190 = vmatprep.subr.mxu0 0.0
    %191 = vmatpush1.msra.mxu0 0.0
    %192 = vmatprep.subr.mxu0 0.0
    %193 = vmatpush1.msra.mxu0 0.0
    %194 = vmatprep.subr.mxu0 0.0
    %195 = vmatpush1.msra.mxu0 0.0
    %196 = vmatprep.subr.mxu0 0.0
    %197 = vmatpush1.msra.mxu0 0.0
    %198 = vmatprep.subr.mxu0 0.0
    %199 = vmatpush1.msra.mxu0 0.0
    %200 = vmatprep.subr.mxu0 0.0
    %201 = vmatpush1.msra.mxu0 0.0
    %202 = vmatprep.subr.mxu0 0.0
    %203 = vmatpush1.msra.mxu0 0.0
    %204 = vmatprep.subr.mxu0 0.0
    %205 = vmatpush1.msra.mxu0 0.0
    %206 = vmatprep.subr.mxu0 0.0
    %207 = vmatpush1.msra.mxu0 0.0
    %208 = vmatprep.subr.mxu0 0.0
    %209 = vmatpush1.msra.mxu0 0.0
    %210 = vmatprep.subr.mxu0 0.0
    %211 = vmatpush1.msra.mxu0 0.0
    %212 = vmatprep.subr.mxu0 0.0
    %213 = vmatpush1.msra.mxu0 0.0
    %214 = vmatprep.subr.mxu0 0.0
    %215 = vmatpush1.msra.mxu0 0.0
    %216 = vmatprep.subr.mxu0 0.0
    %217 = vmatpush1.msra.mxu0 0.0
    %218 = vmatprep.subr.mxu0 0.0
    %219 = vmatpush1.msra.mxu0 0.0
    %220 = vmatprep.subr.mxu0 0.0
    %221 = vmatpush1.msra.mxu0 0.0
    %222 = vmatprep.subr.mxu0 0.0
    %223 = vmatpush1.msra.mxu0 0.0
    %224 = vmatprep.mubr.f32.mxu0 0.0
    %v225 = vand.u32 %v139, 4294901760
    %v226 = vsub.f32 %v139, %v225
    %v227 = vand.u32 %v226, 4294901760
    %v228 = vsub.f32 %v226, %v227
    %v229 = vand.u32 %v228, 4294901760
    %230 = vmatmul.mubr.f32.gmra.mrb[0].mxu0 %v229
    %v231 = vpop.f32.mrb[0].mxu0
    %v232 = vadd.f32 0.0, %v231
    %v233 = vpop.f32.mrb[0].mxu0
    %v234 = vadd.f32 0.0, %v233
    %235 = vmatprep.mubr.f32.mxu0 0.0
    %v236 = vand.u32 %v142, 4294901760
    %v237 = vsub.f32 %v142, %v236
    %v238 = vand.u32 %v237, 4294901760
    %v239 = vsub.f32 %v237, %v238
    %v240 = vand.u32 %v239, 4294901760
    %241 = vmatmul.mubr.f32.gmra.mrb[0].mxu0 %v240
    %v242 = vpop.f32.mrb[0].mxu0
    %v243 = vadd.f32 0.0, %v242
    %v244 = vpop.f32.mrb[0].mxu0
    %v245 = vadd.f32 0.0, %v244
    %246 = vdwg.mxu0
    %v247 = vand.u32 %v70, 4294901760
    %v248 = vsub.f32 %v70, %v247
    %v249 = vand.u32 %v248, 4294901760
    %v250 = vsub.f32 %v248, %v249
    %v251 = vand.u32 %v250, 4294901760
    %252 = vmatprep.subr.mxu0 %v251
    %v253 = vand.u32 %v69, 4294901760
    %v254 = vsub.f32 %v69, %v253
    %v255 = vand.u32 %v254, 4294901760
    %v256 = vsub.f32 %v254, %v255
    %v257 = vand.u32 %v256, 4294901760
    %258 = vmatpush1.msra.mxu0 %v257
    %v259 = vand.u32 %v78, 4294901760
    %v260 = vsub.f32 %v78, %v259
    %v261 = vand.u32 %v260, 4294901760
    %v262 = vsub.f32 %v260, %v261
    %v263 = vand.u32 %v262, 4294901760
    %264 = vmatprep.subr.mxu0 %v263
    %v265 = vand.u32 %v77, 4294901760
    %v266 = vsub.f32 %v77, %v265
    %v267 = vand.u32 %v266, 4294901760
    %v268 = vsub.f32 %v266, %v267
    %v269 = vand.u32 %v268, 4294901760
    %270 = vmatpush1.msra.mxu0 %v269
    %v271 = vand.u32 %v86, 4294901760
    %v272 = vsub.f32 %v86, %v271
    %v273 = vand.u32 %v272, 4294901760
    %v274 = vsub.f32 %v272, %v273
    %v275 = vand.u32 %v274, 4294901760
    %276 = vmatprep.subr.mxu0 %v275
    %v277 = vand.u32 %v85, 4294901760
    %v278 = vsub.f32 %v85, %v277
    %v279 = vand.u32 %v278, 4294901760
    %v280 = vsub.f32 %v278, %v279
    %v281 = vand.u32 %v280, 4294901760
    %282 = vmatpush1.msra.mxu0 %v281
    %v283 = vand.u32 %v94, 4294901760
    %v284 = vsub.f32 %v94, %v283
    %v285 = vand.u32 %v284, 4294901760
    %v286 = vsub.f32 %v284, %v285
    %v287 = vand.u32 %v286, 4294901760
    %288 = vmatprep.subr.mxu0 %v287
    %v289 = vand.u32 %v93, 4294901760
    %v290 = vsub.f32 %v93, %v289
    %v291 = vand.u32 %v290, 4294901760
    %v292 = vsub.f32 %v290, %v291
    %v293 = vand.u32 %v292, 4294901760
    %294 = vmatpush1.msra.mxu0 %v293
    %v295 = vand.u32 %v102, 4294901760
    %v296 = vsub.f32 %v102, %v295
    %v297 = vand.u32 %v296, 4294901760
    %v298 = vsub.f32 %v296, %v297
    %v299 = vand.u32 %v298, 4294901760
    %300 = vmatprep.subr.mxu0 %v299
    %v301 = vand.u32 %v101, 4294901760
    %v302 = vsub.f32 %v101, %v301
    %v303 = vand.u32 %v302, 4294901760
    %v304 = vsub.f32 %v302, %v303
    %v305 = vand.u32 %v304, 4294901760
    %306 = vmatpush1.msra.mxu0 %v305
    %v307 = vand.u32 %v110, 4294901760
    %v308 = vsub.f32 %v110, %v307
    %v309 = vand.u32 %v308, 4294901760
    %v310 = vsub.f32 %v308, %v309
    %v311 = vand.u32 %v310, 4294901760
    %312 = vmatprep.subr.mxu0 %v311
    %v313 = vand.u32 %v109, 4294901760
    %v314 = vsub.f32 %v109, %v313
    %v315 = vand.u32 %v314, 4294901760
    %v316 = vsub.f32 %v314, %v315
    %v317 = vand.u32 %v316, 4294901760
    %318 = vmatpush1.msra.mxu0 %v317
    %v319 = vand.u32 %v118, 4294901760
    %v320 = vsub.f32 %v118, %v319
    %v321 = vand.u32 %v320, 4294901760
    %v322 = vsub.f32 %v320, %v321
    %v323 = vand.u32 %v322, 4294901760
    %324 = vmatprep.subr.mxu0 %v323
    %v325 = vand.u32 %v117, 4294901760
    %v326 = vsub.f32 %v117, %v325
    %v327 = vand.u32 %v326, 4294901760
    %v328 = vsub.f32 %v326, %v327
    %v329 = vand.u32 %v328, 4294901760
    %330 = vmatpush1.msra.mxu0 %v329
    %v331 = vand.u32 %v126, 4294901760
    %v332 = vsub.f32 %v126, %v331
    %v333 = vand.u32 %v332, 4294901760
    %v334 = vsub.f32 %v332, %v333
    %v335 = vand.u32 %v334, 4294901760
    %336 = vmatprep.subr.mxu0 %v335
    %v337 = vand.u32 %v125, 4294901760
    %v338 = vsub.f32 %v125, %v337
    %v339 = vand.u32 %v338, 4294901760
    %v340 = vsub.f32 %v338, %v339
    %v341 = vand.u32 %v340, 4294901760
    %342 = vmatpush1.msra.mxu0 %v341
    %343 = vmatprep.subr.mxu0 0.0
    %344 = vmatpush1.msra.mxu0 0.0
    %345 = vmatprep.subr.mxu0 0.0
    %346 = vmatpush1.msra.mxu0 0.0
    %347 = vmatprep.subr.mxu0 0.0
    %348 = vmatpush1.msra.mxu0 0.0
    %349 = vmatprep.subr.mxu0 0.0
    %350 = vmatpush1.msra.mxu0 0.0
    %351 = vmatprep.subr.mxu0 0.0
    %352 = vmatpush1.msra.mxu0 0.0
    %353 = vmatprep.subr.mxu0 0.0
    %354 = vmatpush1.msra.mxu0 0.0
    %355 = vmatprep.subr.mxu0 0.0
    %356 = vmatpush1.msra.mxu0 0.0
    %357 = vmatprep.subr.mxu0 0.0
    %358 = vmatpush1.msra.mxu0 0.0
    %359 = vmatprep.subr.mxu0 0.0
    %360 = vmatpush1.msra.mxu0 0.0
    %361 = vmatprep.subr.mxu0 0.0
    %362 = vmatpush1.msra.mxu0 0.0
    %363 = vmatprep.subr.mxu0 0.0
    %364 = vmatpush1.msra.mxu0 0.0
    %365 = vmatprep.subr.mxu0 0.0
    %366 = vmatpush1.msra.mxu0 0.0
    %367 = vmatprep.subr.mxu0 0.0
    %368 = vmatpush1.msra.mxu0 0.0
    %369 = vmatprep.subr.mxu0 0.0
    %370 = vmatpush1.msra.mxu0 0.0
    %371 = vmatprep.subr.mxu0 0.0
    %372 = vmatpush1.msra.mxu0 0.0
    %373 = vmatprep.subr.mxu0 0.0
    %374 = vmatpush1.msra.mxu0 0.0
    %375 = vmatprep.subr.mxu0 0.0
    %376 = vmatpush1.msra.mxu0 0.0
    %377 = vmatprep.subr.mxu0 0.0
    %378 = vmatpush1.msra.mxu0 0.0
    %379 = vmatprep.subr.mxu0 0.0
    %380 = vmatpush1.msra.mxu0 0.0
    %381 = vmatprep.subr.mxu0 0.0
    %382 = vmatpush1.msra.mxu0 0.0
    %383 = vmatprep.subr.mxu0 0.0
    %384 = vmatpush1.msra.mxu0 0.0
    %385 = vmatprep.subr.mxu0 0.0
    %386 = vmatpush1.msra.mxu0 0.0
    %387 = vmatprep.subr.mxu0 0.0
    %388 = vmatpush1.msra.mxu0 0.0
    %389 = vmatprep.subr.mxu0 0.0
    %390 = vmatpush1.msra.mxu0 0.0
    %391 = vmatprep.mubr.f32.mxu0 0.0
    %v392 = vand.u32 %v139, 4294901760
    %393 = vmatmul.mubr.f32.gmra.mrb[0].mxu0 %v392
    %v394 = vpop.f32.mrb[0].mxu0
    %v395 = vadd.f32 %v232, %v394
    %v396 = vpop.f32.mrb[0].mxu0
    %v397 = vadd.f32 %v234, %v396
    %398 = vmatprep.mubr.f32.mxu0 0.0
    %v399 = vand.u32 %v142, 4294901760
    %400 = vmatmul.mubr.f32.gmra.mrb[0].mxu0 %v399
    %v401 = vpop.f32.mrb[0].mxu0
    %v402 = vadd.f32 %v243, %v401
    %v403 = vpop.f32.mrb[0].mxu0
    %v404 = vadd.f32 %v245, %v403
    %405 = vdwg.mxu0
    %v406 = vand.u32 %v70, 4294901760
    %v407 = vsub.f32 %v70, %v406
    %408 = vmatprep.subr.mxu0 %v407
    %v409 = vand.u32 %v69, 4294901760
    %v410 = vsub.f32 %v69, %v409
    %411 = vmatpush1.msra.mxu0 %v410
    %v412 = vand.u32 %v78, 4294901760
    %v413 = vsub.f32 %v78, %v412
    %414 = vmatprep.subr.mxu0 %v413
    %v415 = vand.u32 %v77, 4294901760
    %v416 = vsub.f32 %v77, %v415
    %417 = vmatpush1.msra.mxu0 %v416
    %v418 = vand.u32 %v86, 4294901760
    %v419 = vsub.f32 %v86, %v418
    %420 = vmatprep.subr.mxu0 %v419
    %v421 = vand.u32 %v85, 4294901760
    %v422 = vsub.f32 %v85, %v421
    %423 = vmatpush1.msra.mxu0 %v422
    %v424 = vand.u32 %v94, 4294901760
    %v425 = vsub.f32 %v94, %v424
    %426 = vmatprep.subr.mxu0 %v425
    %v427 = vand.u32 %v93, 4294901760
    %v428 = vsub.f32 %v93, %v427
    %429 = vmatpush1.msra.mxu0 %v428
    %v430 = vand.u32 %v102, 4294901760
    %v431 = vsub.f32 %v102, %v430
    %432 = vmatprep.subr.mxu0 %v431
    %v433 = vand.u32 %v101, 4294901760
    %v434 = vsub.f32 %v101, %v433
    %435 = vmatpush1.msra.mxu0 %v434
    %v436 = vand.u32 %v110, 4294901760
    %v437 = vsub.f32 %v110, %v436
    %438 = vmatprep.subr.mxu0 %v437
    %v439 = vand.u32 %v109, 4294901760
    %v440 = vsub.f32 %v109, %v439
    %441 = vmatpush1.msra.mxu0 %v440
    %v442 = vand.u32 %v118, 4294901760
    %v443 = vsub.f32 %v118, %v442
    %444 = vmatprep.subr.mxu0 %v443
    %v445 = vand.u32 %v117, 4294901760
    %v446 = vsub.f32 %v117, %v445
    %447 = vmatpush1.msra.mxu0 %v446
    %v448 = vand.u32 %v126, 4294901760
    %v449 = vsub.f32 %v126, %v448
    %450 = vmatprep.subr.mxu0 %v449
    %v451 = vand.u32 %v125, 4294901760
    %v452 = vsub.f32 %v125, %v451
    %453 = vmatpush1.msra.mxu0 %v452
    %454 = vmatprep.subr.mxu0 0.0
    %455 = vmatpush1.msra.mxu0 0.0
    %456 = vmatprep.subr.mxu0 0.0
    %457 = vmatpush1.msra.mxu0 0.0
    %458 = vmatprep.subr.mxu0 0.0
    %459 = vmatpush1.msra.mxu0 0.0
    %460 = vmatprep.subr.mxu0 0.0
    %461 = vmatpush1.msra.mxu0 0.0
    %462 = vmatprep.subr.mxu0 0.0
    %463 = vmatpush1.msra.mxu0 0.0
    %464 = vmatprep.subr.mxu0 0.0
    %465 = vmatpush1.msra.mxu0 0.0
    %466 = vmatprep.subr.mxu0 0.0
    %467 = vmatpush1.msra.mxu0 0.0
    %468 = vmatprep.subr.mxu0 0.0
    %469 = vmatpush1.msra.mxu0 0.0
    %470 = vmatprep.subr.mxu0 0.0
    %471 = vmatpush1.msra.mxu0 0.0
    %472 = vmatprep.subr.mxu0 0.0
    %473 = vmatpush1.msra.mxu0 0.0
    %474 = vmatprep.subr.mxu0 0.0
    %475 = vmatpush1.msra.mxu0 0.0
    %476 = vmatprep.subr.mxu0 0.0
    %477 = vmatpush1.msra.mxu0 0.0
    %478 = vmatprep.subr.mxu0 0.0
    %479 = vmatpush1.msra.mxu0 0.0
    %480 = vmatprep.subr.mxu0 0.0
    %481 = vmatpush1.msra.mxu0 0.0
    %482 = vmatprep.subr.mxu0 0.0
    %483 = vmatpush1.msra.mxu0 0.0
    %484 = vmatprep.subr.mxu0 0.0
    %485 = vmatpush1.msra.mxu0 0.0
    %486 = vmatprep.subr.mxu0 0.0
    %487 = vmatpush1.msra.mxu0 0.0
    %488 = vmatprep.subr.mxu0 0.0
    %489 = vmatpush1.msra.mxu0 0.0
    %490 = vmatprep.subr.mxu0 0.0
    %491 = vmatpush1.msra.mxu0 0.0
    %492 = vmatprep.subr.mxu0 0.0
    %493 = vmatpush1.msra.mxu0 0.0
    %494 = vmatprep.subr.mxu0 0.0
    %495 = vmatpush1.msra.mxu0 0.0
    %496 = vmatprep.subr.mxu0 0.0
    %497 = vmatpush1.msra.mxu0 0.0
    %498 = vmatprep.subr.mxu0 0.0
    %499 = vmatpush1.msra.mxu0 0.0
    %500 = vmatprep.subr.mxu0 0.0
    %501 = vmatpush1.msra.mxu0 0.0
    %502 = vmatprep.mubr.f32.mxu0 0.0
    %v503 = vand.u32 %v139, 4294901760
    %v504 = vsub.f32 %v139, %v503
    %505 = vmatmul.mubr.f32.gmra.mrb[0].mxu0 %v504
    %v506 = vpop.f32.mrb[0].mxu0
    %v507 = vadd.f32 %v395, %v506
    %v508 = vpop.f32.mrb[0].mxu0
    %v509 = vadd.f32 %v397, %v508
    %510 = vmatprep.mubr.f32.mxu0 0.0
    %v511 = vand.u32 %v142, 4294901760
    %v512 = vsub.f32 %v142, %v511
    %513 = vmatmul.mubr.f32.gmra.mrb[0].mxu0 %v512
    %v514 = vpop.f32.mrb[0].mxu0
    %v515 = vadd.f32 %v402, %v514
    %v516 = vpop.f32.mrb[0].mxu0
    %v517 = vadd.f32 %v404, %v516
    %518 = vdwg.mxu0
    %v519 = vand.u32 %v70, 4294901760
    %520 = vmatprep.subr.mxu0 %v519
    %v521 = vand.u32 %v69, 4294901760
    %522 = vmatpush1.msra.mxu0 %v521
    %v523 = vand.u32 %v78, 4294901760
    %524 = vmatprep.subr.mxu0 %v523
    %v525 = vand.u32 %v77, 4294901760
    %526 = vmatpush1.msra.mxu0 %v525
    %v527 = vand.u32 %v86, 4294901760
    %528 = vmatprep.subr.mxu0 %v527
    %v529 = vand.u32 %v85, 4294901760
    %530 = vmatpush1.msra.mxu0 %v529
    %v531 = vand.u32 %v94, 4294901760
    %532 = vmatprep.subr.mxu0 %v531
    %v533 = vand.u32 %v93, 4294901760
    %534 = vmatpush1.msra.mxu0 %v533
    %v535 = vand.u32 %v102, 4294901760
    %536 = vmatprep.subr.mxu0 %v535
    %v537 = vand.u32 %v101, 4294901760
    %538 = vmatpush1.msra.mxu0 %v537
    %v539 = vand.u32 %v110, 4294901760
    %540 = vmatprep.subr.mxu0 %v539
    %v541 = vand.u32 %v109, 4294901760
    %542 = vmatpush1.msra.mxu0 %v541
    %v543 = vand.u32 %v118, 4294901760
    %544 = vmatprep.subr.mxu0 %v543
    %v545 = vand.u32 %v117, 4294901760
    %546 = vmatpush1.msra.mxu0 %v545
    %v547 = vand.u32 %v126, 4294901760
    %548 = vmatprep.subr.mxu0 %v547
    %v549 = vand.u32 %v125, 4294901760
    %550 = vmatpush1.msra.mxu0 %v549
    %551 = vmatprep.subr.mxu0 0.0
    %552 = vmatpush1.msra.mxu0 0.0
    %553 = vmatprep.subr.mxu0 0.0
    %554 = vmatpush1.msra.mxu0 0.0
    %555 = vmatprep.subr.mxu0 0.0
    %556 = vmatpush1.msra.mxu0 0.0
    %557 = vmatprep.subr.mxu0 0.0
    %558 = vmatpush1.msra.mxu0 0.0
    %559 = vmatprep.subr.mxu0 0.0
    %560 = vmatpush1.msra.mxu0 0.0
    %561 = vmatprep.subr.mxu0 0.0
    %562 = vmatpush1.msra.mxu0 0.0
    %563 = vmatprep.subr.mxu0 0.0
    %564 = vmatpush1.msra.mxu0 0.0
    %565 = vmatprep.subr.mxu0 0.0
    %566 = vmatpush1.msra.mxu0 0.0
    %567 = vmatprep.subr.mxu0 0.0
    %568 = vmatpush1.msra.mxu0 0.0
    %569 = vmatprep.subr.mxu0 0.0
    %570 = vmatpush1.msra.mxu0 0.0
    %571 = vmatprep.subr.mxu0 0.0
    %572 = vmatpush1.msra.mxu0 0.0
    %573 = vmatprep.subr.mxu0 0.0
    %574 = vmatpush1.msra.mxu0 0.0
    %575 = vmatprep.subr.mxu0 0.0
    %576 = vmatpush1.msra.mxu0 0.0
    %577 = vmatprep.subr.mxu0 0.0
    %578 = vmatpush1.msra.mxu0 0.0
    %579 = vmatprep.subr.mxu0 0.0
    %580 = vmatpush1.msra.mxu0 0.0
    %581 = vmatprep.subr.mxu0 0.0
    %582 = vmatpush1.msra.mxu0 0.0
    %583 = vmatprep.subr.mxu0 0.0
    %584 = vmatpush1.msra.mxu0 0.0
    %585 = vmatprep.subr.mxu0 0.0
    %586 = vmatpush1.msra.mxu0 0.0
    %587 = vmatprep.subr.mxu0 0.0
    %588 = vmatpush1.msra.mxu0 0.0
    %589 = vmatprep.subr.mxu0 0.0
    %590 = vmatpush1.msra.mxu0 0.0
    %591 = vmatprep.subr.mxu0 0.0
    %592 = vmatpush1.msra.mxu0 0.0
    %593 = vmatprep.subr.mxu0 0.0
    %594 = vmatpush1.msra.mxu0 0.0
    %595 = vmatprep.subr.mxu0 0.0
    %596 = vmatpush1.msra.mxu0 0.0
    %597 = vmatprep.subr.mxu0 0.0
    %598 = vmatpush1.msra.mxu0 0.0
    %599 = vmatprep.mubr.f32.mxu0 0.0
    %v600 = vand.u32 %v139, 4294901760
    %v601 = vsub.f32 %v139, %v600
    %v602 = vand.u32 %v601, 4294901760
    %603 = vmatmul.mubr.f32.gmra.mrb[0].mxu0 %v602
    %v604 = vpop.f32.mrb[0].mxu0
    %v605 = vadd.f32 %v507, %v604
    %v606 = vpop.f32.mrb[0].mxu0
    %v607 = vadd.f32 %v509, %v606
    %608 = vmatprep.mubr.f32.mxu0 0.0
    %v609 = vand.u32 %v142, 4294901760
    %v610 = vsub.f32 %v142, %v609
    %v611 = vand.u32 %v610, 4294901760
    %612 = vmatmul.mubr.f32.gmra.mrb[0].mxu0 %v611
    %v613 = vpop.f32.mrb[0].mxu0
    %v614 = vadd.f32 %v515, %v613
    %v615 = vpop.f32.mrb[0].mxu0
    %v616 = vadd.f32 %v517, %v615
    %617 = vdwg.mxu0
    %v618 = vand.u32 %v70, 4294901760
    %v619 = vsub.f32 %v70, %v618
    %v620 = vand.u32 %v619, 4294901760
    %621 = vmatprep.subr.mxu0 %v620
    %v622 = vand.u32 %v69, 4294901760
    %v623 = vsub.f32 %v69, %v622
    %v624 = vand.u32 %v623, 4294901760
    %625 = vmatpush1.msra.mxu0 %v624
    %v626 = vand.u32 %v78, 4294901760
    %v627 = vsub.f32 %v78, %v626
    %v628 = vand.u32 %v627, 4294901760
    %629 = vmatprep.subr.mxu0 %v628
    %v630 = vand.u32 %v77, 4294901760
    %v631 = vsub.f32 %v77, %v630
    %v632 = vand.u32 %v631, 4294901760
    %633 = vmatpush1.msra.mxu0 %v632
    %v634 = vand.u32 %v86, 4294901760
    %v635 = vsub.f32 %v86, %v634
    %v636 = vand.u32 %v635, 4294901760
    %637 = vmatprep.subr.mxu0 %v636
    %v638 = vand.u32 %v85, 4294901760
    %v639 = vsub.f32 %v85, %v638
    %v640 = vand.u32 %v639, 4294901760
    %641 = vmatpush1.msra.mxu0 %v640
    %v642 = vand.u32 %v94, 4294901760
    %v643 = vsub.f32 %v94, %v642
    %v644 = vand.u32 %v643, 4294901760
    %645 = vmatprep.subr.mxu0 %v644
    %v646 = vand.u32 %v93, 4294901760
    %v647 = vsub.f32 %v93, %v646
    %v648 = vand.u32 %v647, 4294901760
    %649 = vmatpush1.msra.mxu0 %v648
    %v650 = vand.u32 %v102, 4294901760
    %v651 = vsub.f32 %v102, %v650
    %v652 = vand.u32 %v651, 4294901760
    %653 = vmatprep.subr.mxu0 %v652
    %v654 = vand.u32 %v101, 4294901760
    %v655 = vsub.f32 %v101, %v654
    %v656 = vand.u32 %v655, 4294901760
    %657 = vmatpush1.msra.mxu0 %v656
    %v658 = vand.u32 %v110, 4294901760
    %v659 = vsub.f32 %v110, %v658
    %v660 = vand.u32 %v659, 4294901760
    %661 = vmatprep.subr.mxu0 %v660
    %v662 = vand.u32 %v109, 4294901760
    %v663 = vsub.f32 %v109, %v662
    %v664 = vand.u32 %v663, 4294901760
    %665 = vmatpush1.msra.mxu0 %v664
    %v666 = vand.u32 %v118, 4294901760
    %v667 = vsub.f32 %v118, %v666
    %v668 = vand.u32 %v667, 4294901760
    %669 = vmatprep.subr.mxu0 %v668
    %v670 = vand.u32 %v117, 4294901760
    %v671 = vsub.f32 %v117, %v670
    %v672 = vand.u32 %v671, 4294901760
    %673 = vmatpush1.msra.mxu0 %v672
    %v674 = vand.u32 %v126, 4294901760
    %v675 = vsub.f32 %v126, %v674
    %v676 = vand.u32 %v675, 4294901760
    %677 = vmatprep.subr.mxu0 %v676
    %v678 = vand.u32 %v125, 4294901760
    %v679 = vsub.f32 %v125, %v678
    %v680 = vand.u32 %v679, 4294901760
    %681 = vmatpush1.msra.mxu0 %v680
    %682 = vmatprep.subr.mxu0 0.0
    %683 = vmatpush1.msra.mxu0 0.0
    %684 = vmatprep.subr.mxu0 0.0
    %685 = vmatpush1.msra.mxu0 0.0
    %686 = vmatprep.subr.mxu0 0.0
    %687 = vmatpush1.msra.mxu0 0.0
    %688 = vmatprep.subr.mxu0 0.0
    %689 = vmatpush1.msra.mxu0 0.0
    %690 = vmatprep.subr.mxu0 0.0
    %691 = vmatpush1.msra.mxu0 0.0
    %692 = vmatprep.subr.mxu0 0.0
    %693 = vmatpush1.msra.mxu0 0.0
    %694 = vmatprep.subr.mxu0 0.0
    %695 = vmatpush1.msra.mxu0 0.0
    %696 = vmatprep.subr.mxu0 0.0
    %697 = vmatpush1.msra.mxu0 0.0
    %698 = vmatprep.subr.mxu0 0.0
    %699 = vmatpush1.msra.mxu0 0.0
    %700 = vmatprep.subr.mxu0 0.0
    %701 = vmatpush1.msra.mxu0 0.0
    %702 = vmatprep.subr.mxu0 0.0
    %703 = vmatpush1.msra.mxu0 0.0
    %704 = vmatprep.subr.mxu0 0.0
    %705 = vmatpush1.msra.mxu0 0.0
    %706 = vmatprep.subr.mxu0 0.0
    %707 = vmatpush1.msra.mxu0 0.0
    %708 = vmatprep.subr.mxu0 0.0
    %709 = vmatpush1.msra.mxu0 0.0
    %710 = vmatprep.subr.mxu0 0.0
    %711 = vmatpush1.msra.mxu0 0.0
    %712 = vmatprep.subr.mxu0 0.0
    %713 = vmatpush1.msra.mxu0 0.0
    %714 = vmatprep.subr.mxu0 0.0
    %715 = vmatpush1.msra.mxu0 0.0
    %716 = vmatprep.subr.mxu0 0.0
    %717 = vmatpush1.msra.mxu0 0.0
    %718 = vmatprep.subr.mxu0 0.0
    %719 = vmatpush1.msra.mxu0 0.0
    %720 = vmatprep.subr.mxu0 0.0
    %721 = vmatpush1.msra.mxu0 0.0
    %722 = vmatprep.subr.mxu0 0.0
    %723 = vmatpush1.msra.mxu0 0.0
    %724 = vmatprep.subr.mxu0 0.0
    %725 = vmatpush1.msra.mxu0 0.0
    %726 = vmatprep.subr.mxu0 0.0
    %727 = vmatpush1.msra.mxu0 0.0
    %728 = vmatprep.subr.mxu0 0.0
    %729 = vmatpush1.msra.mxu0 0.0
    %730 = vmatprep.mubr.f32.mxu0 0.0
    %v731 = vand.u32 %v139, 4294901760
    %732 = vmatmul.mubr.f32.gmra.mrb[0].mxu0 %v731
    %v733 = vpop.f32.mrb[0].mxu0
    %v734 = vadd.f32 %v605, %v733
    %v735 = vpop.f32.mrb[0].mxu0
    %v736 = vadd.f32 %v607, %v735
    %737 = vmatprep.mubr.f32.mxu0 0.0
    %v738 = vand.u32 %v142, 4294901760
    %739 = vmatmul.mubr.f32.gmra.mrb[0].mxu0 %v738
    %v740 = vpop.f32.mrb[0].mxu0
    %v741 = vadd.f32 %v614, %v740
    %v742 = vpop.f32.mrb[0].mxu0
    %v743 = vadd.f32 %v616, %v742
    %744 = vdwg.mxu0
    %v745 = vand.u32 %v70, 4294901760
    %746 = vmatprep.subr.mxu0 %v745
    %v747 = vand.u32 %v69, 4294901760
    %748 = vmatpush1.msra.mxu0 %v747
    %v749 = vand.u32 %v78, 4294901760
    %750 = vmatprep.subr.mxu0 %v749
    %v751 = vand.u32 %v77, 4294901760
    %752 = vmatpush1.msra.mxu0 %v751
    %v753 = vand.u32 %v86, 4294901760
    %754 = vmatprep.subr.mxu0 %v753
    %v755 = vand.u32 %v85, 4294901760
    %756 = vmatpush1.msra.mxu0 %v755
    %v757 = vand.u32 %v94, 4294901760
    %758 = vmatprep.subr.mxu0 %v757
    %v759 = vand.u32 %v93, 4294901760
    %760 = vmatpush1.msra.mxu0 %v759
    %v761 = vand.u32 %v102, 4294901760
    %762 = vmatprep.subr.mxu0 %v761
    %v763 = vand.u32 %v101, 4294901760
    %764 = vmatpush1.msra.mxu0 %v763
    %v765 = vand.u32 %v110, 4294901760
    %766 = vmatprep.subr.mxu0 %v765
    %v767 = vand.u32 %v109, 4294901760
    %768 = vmatpush1.msra.mxu0 %v767
    %v769 = vand.u32 %v118, 4294901760
    %770 = vmatprep.subr.mxu0 %v769
    %v771 = vand.u32 %v117, 4294901760
    %772 = vmatpush1.msra.mxu0 %v771
    %v773 = vand.u32 %v126, 4294901760
    %774 = vmatprep.subr.mxu0 %v773
    %v775 = vand.u32 %v125, 4294901760
    %776 = vmatpush1.msra.mxu0 %v775
    %777 = vmatprep.subr.mxu0 0.0
    %778 = vmatpush1.msra.mxu0 0.0
    %779 = vmatprep.subr.mxu0 0.0
    %780 = vmatpush1.msra.mxu0 0.0
    %781 = vmatprep.subr.mxu0 0.0
    %782 = vmatpush1.msra.mxu0 0.0
    %783 = vmatprep.subr.mxu0 0.0
    %784 = vmatpush1.msra.mxu0 0.0
    %785 = vmatprep.subr.mxu0 0.0
    %786 = vmatpush1.msra.mxu0 0.0
    %787 = vmatprep.subr.mxu0 0.0
    %788 = vmatpush1.msra.mxu0 0.0
    %789 = vmatprep.subr.mxu0 0.0
    %790 = vmatpush1.msra.mxu0 0.0
    %791 = vmatprep.subr.mxu0 0.0
    %792 = vmatpush1.msra.mxu0 0.0
    %793 = vmatprep.subr.mxu0 0.0
    %794 = vmatpush1.msra.mxu0 0.0
    %795 = vmatprep.subr.mxu0 0.0
    %796 = vmatpush1.msra.mxu0 0.0
    %797 = vmatprep.subr.mxu0 0.0
    %798 = vmatpush1.msra.mxu0 0.0
    %799 = vmatprep.subr.mxu0 0.0
    %800 = vmatpush1.msra.mxu0 0.0
    %801 = vmatprep.subr.mxu0 0.0
    %802 = vmatpush1.msra.mxu0 0.0
    %803 = vmatprep.subr.mxu0 0.0
    %804 = vmatpush1.msra.mxu0 0.0
    %805 = vmatprep.subr.mxu0 0.0
    %806 = vmatpush1.msra.mxu0 0.0
    %807 = vmatprep.subr.mxu0 0.0
    %808 = vmatpush1.msra.mxu0 0.0
    %809 = vmatprep.subr.mxu0 0.0
    %810 = vmatpush1.msra.mxu0 0.0
    %811 = vmatprep.subr.mxu0 0.0
    %812 = vmatpush1.msra.mxu0 0.0
    %813 = vmatprep.subr.mxu0 0.0
    %814 = vmatpush1.msra.mxu0 0.0
    %815 = vmatprep.subr.mxu0 0.0
    %816 = vmatpush1.msra.mxu0 0.0
    %817 = vmatprep.subr.mxu0 0.0
    %818 = vmatpush1.msra.mxu0 0.0
    %819 = vmatprep.subr.mxu0 0.0
    %820 = vmatpush1.msra.mxu0 0.0
    %821 = vmatprep.subr.mxu0 0.0
    %822 = vmatpush1.msra.mxu0 0.0
    %823 = vmatprep.subr.mxu0 0.0
    %824 = vmatpush1.msra.mxu0 0.0
    %825 = vmatprep.mubr.f32.mxu0 0.0
    %v826 = vand.u32 %v139, 4294901760
    %827 = vmatmul.mubr.f32.gmra.mrb[0].mxu0 %v826
    %v828 = vpop.f32.mrb[0].mxu0
    %v829 = vadd.f32 %v734, %v828
    %v830 = vpop.f32.mrb[0].mxu0
    %v831 = vadd.f32 %v736, %v830
    %832 = vmatprep.mubr.f32.mxu0 0.0
    %v833 = vand.u32 %v142, 4294901760
    %834 = vmatmul.mubr.f32.gmra.mrb[0].mxu0 %v833
    %v835 = vpop.f32.mrb[0].mxu0
    %v836 = vadd.f32 %v741, %v835
    %v837 = vpop.f32.mrb[0].mxu0
    %v838 = vadd.f32 %v743, %v837
    %839 = vdwg.mxu0
    %v840 = vand.u32 %v72, 4294901760
    %841 = vmatprep.subr.mxu0 %v840
    %v842 = vand.u32 %v71, 4294901760
    %843 = vmatpush1.msra.mxu0 %v842
    %v844 = vand.u32 %v80, 4294901760
    %845 = vmatprep.subr.mxu0 %v844
    %v846 = vand.u32 %v79, 4294901760
    %847 = vmatpush1.msra.mxu0 %v846
    %v848 = vand.u32 %v88, 4294901760
    %849 = vmatprep.subr.mxu0 %v848
    %v850 = vand.u32 %v87, 4294901760
    %851 = vmatpush1.msra.mxu0 %v850
    %v852 = vand.u32 %v96, 4294901760
    %853 = vmatprep.subr.mxu0 %v852
    %v854 = vand.u32 %v95, 4294901760
    %855 = vmatpush1.msra.mxu0 %v854
    %v856 = vand.u32 %v104, 4294901760
    %857 = vmatprep.subr.mxu0 %v856
    %v858 = vand.u32 %v103, 4294901760
    %859 = vmatpush1.msra.mxu0 %v858
    %v860 = vand.u32 %v112, 4294901760
    %861 = vmatprep.subr.mxu0 %v860
    %v862 = vand.u32 %v111, 4294901760
    %863 = vmatpush1.msra.mxu0 %v862
    %v864 = vand.u32 %v120, 4294901760
    %865 = vmatprep.subr.mxu0 %v864
    %v866 = vand.u32 %v119, 4294901760
    %867 = vmatpush1.msra.mxu0 %v866
    %v868 = vand.u32 %v128, 4294901760
    %869 = vmatprep.subr.mxu0 %v868
    %v870 = vand.u32 %v127, 4294901760
    %871 = vmatpush1.msra.mxu0 %v870
    %872 = vmatprep.subr.mxu0 0.0
    %873 = vmatpush1.msra.mxu0 0.0
    %874 = vmatprep.subr.mxu0 0.0
    %875 = vmatpush1.msra.mxu0 0.0
    %876 = vmatprep.subr.mxu0 0.0
    %877 = vmatpush1.msra.mxu0 0.0
    %878 = vmatprep.subr.mxu0 0.0
    %879 = vmatpush1.msra.mxu0 0.0
    %880 = vmatprep.subr.mxu0 0.0
    %881 = vmatpush1.msra.mxu0 0.0
    %882 = vmatprep.subr.mxu0 0.0
    %883 = vmatpush1.msra.mxu0 0.0
    %884 = vmatprep.subr.mxu0 0.0
    %885 = vmatpush1.msra.mxu0 0.0
    %886 = vmatprep.subr.mxu0 0.0
    %887 = vmatpush1.msra.mxu0 0.0
    %888 = vmatprep.subr.mxu0 0.0
    %889 = vmatpush1.msra.mxu0 0.0
    %890 = vmatprep.subr.mxu0 0.0
    %891 = vmatpush1.msra.mxu0 0.0
    %892 = vmatprep.subr.mxu0 0.0
    %893 = vmatpush1.msra.mxu0 0.0
    %894 = vmatprep.subr.mxu0 0.0
    %895 = vmatpush1.msra.mxu0 0.0
    %896 = vmatprep.subr.mxu0 0.0
    %897 = vmatpush1.msra.mxu0 0.0
    %898 = vmatprep.subr.mxu0 0.0
    %899 = vmatpush1.msra.mxu0 0.0
    %900 = vmatprep.subr.mxu0 0.0
    %901 = vmatpush1.msra.mxu0 0.0
    %902 = vmatprep.subr.mxu0 0.0
    %903 = vmatpush1.msra.mxu0 0.0
    %904 = vmatprep.subr.mxu0 0.0
    %905 = vmatpush1.msra.mxu0 0.0
    %906 = vmatprep.subr.mxu0 0.0
    %907 = vmatpush1.msra.mxu0 0.0
    %908 = vmatprep.subr.mxu0 0.0
    %909 = vmatpush1.msra.mxu0 0.0
    %910 = vmatprep.subr.mxu0 0.0
    %911 = vmatpush1.msra.mxu0 0.0
    %912 = vmatprep.subr.mxu0 0.0
    %913 = vmatpush1.msra.mxu0 0.0
    %914 = vmatprep.subr.mxu0 0.0
    %915 = vmatpush1.msra.mxu0 0.0
    %916 = vmatprep.subr.mxu0 0.0
    %917 = vmatpush1.msra.mxu0 0.0
    %918 = vmatprep.subr.mxu0 0.0
    %919 = vmatpush1.msra.mxu0 0.0
    %920 = vmatprep.mubr.f32.mxu0 0.0
    %v921 = vand.u32 %v139, 4294901760
    %v922 = vsub.f32 %v139, %v921
    %v923 = vand.u32 %v922, 4294901760
    %v924 = vsub.f32 %v922, %v923
    %v925 = vand.u32 %v924, 4294901760
    %926 = vmatmul.mubr.f32.gmra.mrb[0].mxu0 %v925
    %v927 = vpop.f32.mrb[0].mxu0
    %v928 = vadd.f32 0.0, %v927
    %v929 = vpop.f32.mrb[0].mxu0
    %v930 = vadd.f32 0.0, %v929
    %931 = vmatprep.mubr.f32.mxu0 0.0
    %v932 = vand.u32 %v142, 4294901760
    %v933 = vsub.f32 %v142, %v932
    %v934 = vand.u32 %v933, 4294901760
    %v935 = vsub.f32 %v933, %v934
    %v936 = vand.u32 %v935, 4294901760
    %937 = vmatmul.mubr.f32.gmra.mrb[0].mxu0 %v936
    %v938 = vpop.f32.mrb[0].mxu0
    %v939 = vadd.f32 0.0, %v938
    %v940 = vpop.f32.mrb[0].mxu0
    %v941 = vadd.f32 0.0, %v940
    %942 = vdwg.mxu0
    %v943 = vand.u32 %v72, 4294901760
    %v944 = vsub.f32 %v72, %v943
    %v945 = vand.u32 %v944, 4294901760
    %v946 = vsub.f32 %v944, %v945
    %v947 = vand.u32 %v946, 4294901760
    %948 = vmatprep.subr.mxu0 %v947
    %v949 = vand.u32 %v71, 4294901760
    %v950 = vsub.f32 %v71, %v949
    %v951 = vand.u32 %v950, 4294901760
    %v952 = vsub.f32 %v950, %v951
    %v953 = vand.u32 %v952, 4294901760
    %954 = vmatpush1.msra.mxu0 %v953
    %v955 = vand.u32 %v80, 4294901760
    %v956 = vsub.f32 %v80, %v955
    %v957 = vand.u32 %v956, 4294901760
    %v958 = vsub.f32 %v956, %v957
    %v959 = vand.u32 %v958, 4294901760
    %960 = vmatprep.subr.mxu0 %v959
    %v961 = vand.u32 %v79, 4294901760
    %v962 = vsub.f32 %v79, %v961
    %v963 = vand.u32 %v962, 4294901760
    %v964 = vsub.f32 %v962, %v963
    %v965 = vand.u32 %v964, 4294901760
    %966 = vmatpush1.msra.mxu0 %v965
    %v967 = vand.u32 %v88, 4294901760
    %v968 = vsub.f32 %v88, %v967
    %v969 = vand.u32 %v968, 4294901760
    %v970 = vsub.f32 %v968, %v969
    %v971 = vand.u32 %v970, 4294901760
    %972 = vmatprep.subr.mxu0 %v971
    %v973 = vand.u32 %v87, 4294901760
    %v974 = vsub.f32 %v87, %v973
    %v975 = vand.u32 %v974, 4294901760
    %v976 = vsub.f32 %v974, %v975
    %v977 = vand.u32 %v976, 4294901760
    %978 = vmatpush1.msra.mxu0 %v977
    %v979 = vand.u32 %v96, 4294901760
    %v980 = vsub.f32 %v96, %v979
    %v981 = vand.u32 %v980, 4294901760
    %v982 = vsub.f32 %v980, %v981
    %v983 = vand.u32 %v982, 4294901760
    %984 = vmatprep.subr.mxu0 %v983
    %v985 = vand.u32 %v95, 4294901760
    %v986 = vsub.f32 %v95, %v985
    %v987 = vand.u32 %v986, 4294901760
    %v988 = vsub.f32 %v986, %v987
    %v989 = vand.u32 %v988, 4294901760
    %990 = vmatpush1.msra.mxu0 %v989
    %v991 = vand.u32 %v104, 4294901760
    %v992 = vsub.f32 %v104, %v991
    %v993 = vand.u32 %v992, 4294901760
    %v994 = vsub.f32 %v992, %v993
    %v995 = vand.u32 %v994, 4294901760
    %996 = vmatprep.subr.mxu0 %v995
    %v997 = vand.u32 %v103, 4294901760
    %v998 = vsub.f32 %v103, %v997
    %v999 = vand.u32 %v998, 4294901760
    %v1000 = vsub.f32 %v998, %v999
    %v1001 = vand.u32 %v1000, 4294901760
    %1002 = vmatpush1.msra.mxu0 %v1001
    %v1003 = vand.u32 %v112, 4294901760
    %v1004 = vsub.f32 %v112, %v1003
    %v1005 = vand.u32 %v1004, 4294901760
    %v1006 = vsub.f32 %v1004, %v1005
    %v1007 = vand.u32 %v1006, 4294901760
    %1008 = vmatprep.subr.mxu0 %v1007
    %v1009 = vand.u32 %v111, 4294901760
    %v1010 = vsub.f32 %v111, %v1009
    %v1011 = vand.u32 %v1010, 4294901760
    %v1012 = vsub.f32 %v1010, %v1011
    %v1013 = vand.u32 %v1012, 4294901760
    %1014 = vmatpush1.msra.mxu0 %v1013
    %v1015 = vand.u32 %v120, 4294901760
    %v1016 = vsub.f32 %v120, %v1015
    %v1017 = vand.u32 %v1016, 4294901760
    %v1018 = vsub.f32 %v1016, %v1017
    %v1019 = vand.u32 %v1018, 4294901760
    %1020 = vmatprep.subr.mxu0 %v1019
    %v1021 = vand.u32 %v119, 4294901760
    %v1022 = vsub.f32 %v119, %v1021
    %v1023 = vand.u32 %v1022, 4294901760
    %v1024 = vsub.f32 %v1022, %v1023
    %v1025 = vand.u32 %v1024, 4294901760
    %1026 = vmatpush1.msra.mxu0 %v1025
    %v1027 = vand.u32 %v128, 4294901760
    %v1028 = vsub.f32 %v128, %v1027
    %v1029 = vand.u32 %v1028, 4294901760
    %v1030 = vsub.f32 %v1028, %v1029
    %v1031 = vand.u32 %v1030, 4294901760
    %1032 = vmatprep.subr.mxu0 %v1031
    %v1033 = vand.u32 %v127, 4294901760
    %v1034 = vsub.f32 %v127, %v1033
    %v1035 = vand.u32 %v1034, 4294901760
    %v1036 = vsub.f32 %v1034, %v1035
    %v1037 = vand.u32 %v1036, 4294901760
    %1038 = vmatpush1.msra.mxu0 %v1037
    %1039 = vmatprep.subr.mxu0 0.0
    %1040 = vmatpush1.msra.mxu0 0.0
    %1041 = vmatprep.subr.mxu0 0.0
    %1042 = vmatpush1.msra.mxu0 0.0
    %1043 = vmatprep.subr.mxu0 0.0
    %1044 = vmatpush1.msra.mxu0 0.0
    %1045 = vmatprep.subr.mxu0 0.0
    %1046 = vmatpush1.msra.mxu0 0.0
    %1047 = vmatprep.subr.mxu0 0.0
    %1048 = vmatpush1.msra.mxu0 0.0
    %1049 = vmatprep.subr.mxu0 0.0
    %1050 = vmatpush1.msra.mxu0 0.0
    %1051 = vmatprep.subr.mxu0 0.0
    %1052 = vmatpush1.msra.mxu0 0.0
    %1053 = vmatprep.subr.mxu0 0.0
    %1054 = vmatpush1.msra.mxu0 0.0
    %1055 = vmatprep.subr.mxu0 0.0
    %1056 = vmatpush1.msra.mxu0 0.0
    %1057 = vmatprep.subr.mxu0 0.0
    %1058 = vmatpush1.msra.mxu0 0.0
    %1059 = vmatprep.subr.mxu0 0.0
    %1060 = vmatpush1.msra.mxu0 0.0
    %1061 = vmatprep.subr.mxu0 0.0
    %1062 = vmatpush1.msra.mxu0 0.0
    %1063 = vmatprep.subr.mxu0 0.0
    %1064 = vmatpush1.msra.mxu0 0.0
    %1065 = vmatprep.subr.mxu0 0.0
    %1066 = vmatpush1.msra.mxu0 0.0
    %1067 = vmatprep.subr.mxu0 0.0
    %1068 = vmatpush1.msra.mxu0 0.0
    %1069 = vmatprep.subr.mxu0 0.0
    %1070 = vmatpush1.msra.mxu0 0.0
    %1071 = vmatprep.subr.mxu0 0.0
    %1072 = vmatpush1.msra.mxu0 0.0
    %1073 = vmatprep.subr.mxu0 0.0
    %1074 = vmatpush1.msra.mxu0 0.0
    %1075 = vmatprep.subr.mxu0 0.0
    %1076 = vmatpush1.msra.mxu0 0.0
    %1077 = vmatprep.subr.mxu0 0.0
    %1078 = vmatpush1.msra.mxu0 0.0
    %1079 = vmatprep.subr.mxu0 0.0
    %1080 = vmatpush1.msra.mxu0 0.0
    %1081 = vmatprep.subr.mxu0 0.0
    %1082 = vmatpush1.msra.mxu0 0.0
    %1083 = vmatprep.subr.mxu0 0.0
    %1084 = vmatpush1.msra.mxu0 0.0
    %1085 = vmatprep.subr.mxu0 0.0
    %1086 = vmatpush1.msra.mxu0 0.0
    %1087 = vmatprep.mubr.f32.mxu0 0.0
    %v1088 = vand.u32 %v139, 4294901760
    %1089 = vmatmul.mubr.f32.gmra.mrb[0].mxu0 %v1088
    %v1090 = vpop.f32.mrb[0].mxu0
    %v1091 = vadd.f32 %v928, %v1090
    %v1092 = vpop.f32.mrb[0].mxu0
    %v1093 = vadd.f32 %v930, %v1092
    %1094 = vmatprep.mubr.f32.mxu0 0.0
    %v1095 = vand.u32 %v142, 4294901760
    %1096 = vmatmul.mubr.f32.gmra.mrb[0].mxu0 %v1095
    %v1097 = vpop.f32.mrb[0].mxu0
    %v1098 = vadd.f32 %v939, %v1097
    %v1099 = vpop.f32.mrb[0].mxu0
    %v1100 = vadd.f32 %v941, %v1099
    %1101 = vdwg.mxu0
    %v1102 = vand.u32 %v72, 4294901760
    %v1103 = vsub.f32 %v72, %v1102
    %1104 = vmatprep.subr.mxu0 %v1103
    %v1105 = vand.u32 %v71, 4294901760
    %v1106 = vsub.f32 %v71, %v1105
    %1107 = vmatpush1.msra.mxu0 %v1106
    %v1108 = vand.u32 %v80, 4294901760
    %v1109 = vsub.f32 %v80, %v1108
    %1110 = vmatprep.subr.mxu0 %v1109
    %v1111 = vand.u32 %v79, 4294901760
    %v1112 = vsub.f32 %v79, %v1111
    %1113 = vmatpush1.msra.mxu0 %v1112
    %v1114 = vand.u32 %v88, 4294901760
    %v1115 = vsub.f32 %v88, %v1114
    %1116 = vmatprep.subr.mxu0 %v1115
    %v1117 = vand.u32 %v87, 4294901760
    %v1118 = vsub.f32 %v87, %v1117
    %1119 = vmatpush1.msra.mxu0 %v1118
    %v1120 = vand.u32 %v96, 4294901760
    %v1121 = vsub.f32 %v96, %v1120
    %1122 = vmatprep.subr.mxu0 %v1121
    %v1123 = vand.u32 %v95, 4294901760
    %v1124 = vsub.f32 %v95, %v1123
    %1125 = vmatpush1.msra.mxu0 %v1124
    %v1126 = vand.u32 %v104, 4294901760
    %v1127 = vsub.f32 %v104, %v1126
    %1128 = vmatprep.subr.mxu0 %v1127
    %v1129 = vand.u32 %v103, 4294901760
    %v1130 = vsub.f32 %v103, %v1129
    %1131 = vmatpush1.msra.mxu0 %v1130
    %v1132 = vand.u32 %v112, 4294901760
    %v1133 = vsub.f32 %v112, %v1132
    %1134 = vmatprep.subr.mxu0 %v1133
    %v1135 = vand.u32 %v111, 4294901760
    %v1136 = vsub.f32 %v111, %v1135
    %1137 = vmatpush1.msra.mxu0 %v1136
    %v1138 = vand.u32 %v120, 4294901760
    %v1139 = vsub.f32 %v120, %v1138
    %1140 = vmatprep.subr.mxu0 %v1139
    %v1141 = vand.u32 %v119, 4294901760
    %v1142 = vsub.f32 %v119, %v1141
    %1143 = vmatpush1.msra.mxu0 %v1142
    %v1144 = vand.u32 %v128, 4294901760
    %v1145 = vsub.f32 %v128, %v1144
    %1146 = vmatprep.subr.mxu0 %v1145
    %v1147 = vand.u32 %v127, 4294901760
    %v1148 = vsub.f32 %v127, %v1147
    %1149 = vmatpush1.msra.mxu0 %v1148
    %1150 = vmatprep.subr.mxu0 0.0
    %1151 = vmatpush1.msra.mxu0 0.0
    %1152 = vmatprep.subr.mxu0 0.0
    %1153 = vmatpush1.msra.mxu0 0.0
    %1154 = vmatprep.subr.mxu0 0.0
    %1155 = vmatpush1.msra.mxu0 0.0
    %1156 = vmatprep.subr.mxu0 0.0
    %1157 = vmatpush1.msra.mxu0 0.0
    %1158 = vmatprep.subr.mxu0 0.0
    %1159 = vmatpush1.msra.mxu0 0.0
    %1160 = vmatprep.subr.mxu0 0.0
    %1161 = vmatpush1.msra.mxu0 0.0
    %1162 = vmatprep.subr.mxu0 0.0
    %1163 = vmatpush1.msra.mxu0 0.0
    %1164 = vmatprep.subr.mxu0 0.0
    %1165 = vmatpush1.msra.mxu0 0.0
    %1166 = vmatprep.subr.mxu0 0.0
    %1167 = vmatpush1.msra.mxu0 0.0
    %1168 = vmatprep.subr.mxu0 0.0
    %1169 = vmatpush1.msra.mxu0 0.0
    %1170 = vmatprep.subr.mxu0 0.0
    %1171 = vmatpush1.msra.mxu0 0.0
    %1172 = vmatprep.subr.mxu0 0.0
    %1173 = vmatpush1.msra.mxu0 0.0
    %1174 = vmatprep.subr.mxu0 0.0
    %1175 = vmatpush1.msra.mxu0 0.0
    %1176 = vmatprep.subr.mxu0 0.0
    %1177 = vmatpush1.msra.mxu0 0.0
    %1178 = vmatprep.subr.mxu0 0.0
    %1179 = vmatpush1.msra.mxu0 0.0
    %1180 = vmatprep.subr.mxu0 0.0
    %1181 = vmatpush1.msra.mxu0 0.0
    %1182 = vmatprep.subr.mxu0 0.0
    %1183 = vmatpush1.msra.mxu0 0.0
    %1184 = vmatprep.subr.mxu0 0.0
    %1185 = vmatpush1.msra.mxu0 0.0
    %1186 = vmatprep.subr.mxu0 0.0
    %1187 = vmatpush1.msra.mxu0 0.0
    %1188 = vmatprep.subr.mxu0 0.0
    %1189 = vmatpush1.msra.mxu0 0.0
    %1190 = vmatprep.subr.mxu0 0.0
    %1191 = vmatpush1.msra.mxu0 0.0
    %1192 = vmatprep.subr.mxu0 0.0
    %1193 = vmatpush1.msra.mxu0 0.0
    %1194 = vmatprep.subr.mxu0 0.0
    %1195 = vmatpush1.msra.mxu0 0.0
    %1196 = vmatprep.subr.mxu0 0.0
    %1197 = vmatpush1.msra.mxu0 0.0
    %1198 = vmatprep.mubr.f32.mxu0 0.0
    %v1199 = vand.u32 %v139, 4294901760
    %v1200 = vsub.f32 %v139, %v1199
    %1201 = vmatmul.mubr.f32.gmra.mrb[0].mxu0 %v1200
    %v1202 = vpop.f32.mrb[0].mxu0
    %v1203 = vadd.f32 %v1091, %v1202
    %v1204 = vpop.f32.mrb[0].mxu0
    %v1205 = vadd.f32 %v1093, %v1204
    %1206 = vmatprep.mubr.f32.mxu0 0.0
    %v1207 = vand.u32 %v142, 4294901760
    %v1208 = vsub.f32 %v142, %v1207
    %1209 = vmatmul.mubr.f32.gmra.mrb[0].mxu0 %v1208
    %v1210 = vpop.f32.mrb[0].mxu0
    %v1211 = vadd.f32 %v1098, %v1210
    %v1212 = vpop.f32.mrb[0].mxu0
    %v1213 = vadd.f32 %v1100, %v1212
    %1214 = vdwg.mxu0
    %v1215 = vand.u32 %v72, 4294901760
    %1216 = vmatprep.subr.mxu0 %v1215
    %v1217 = vand.u32 %v71, 4294901760
    %1218 = vmatpush1.msra.mxu0 %v1217
    %v1219 = vand.u32 %v80, 4294901760
    %1220 = vmatprep.subr.mxu0 %v1219
    %v1221 = vand.u32 %v79, 4294901760
    %1222 = vmatpush1.msra.mxu0 %v1221
    %v1223 = vand.u32 %v88, 4294901760
    %1224 = vmatprep.subr.mxu0 %v1223
    %v1225 = vand.u32 %v87, 4294901760
    %1226 = vmatpush1.msra.mxu0 %v1225
    %v1227 = vand.u32 %v96, 4294901760
    %1228 = vmatprep.subr.mxu0 %v1227
    %v1229 = vand.u32 %v95, 4294901760
    %1230 = vmatpush1.msra.mxu0 %v1229
    %v1231 = vand.u32 %v104, 4294901760
    %1232 = vmatprep.subr.mxu0 %v1231
    %v1233 = vand.u32 %v103, 4294901760
    %1234 = vmatpush1.msra.mxu0 %v1233
    %v1235 = vand.u32 %v112, 4294901760
    %1236 = vmatprep.subr.mxu0 %v1235
    %v1237 = vand.u32 %v111, 4294901760
    %1238 = vmatpush1.msra.mxu0 %v1237
    %v1239 = vand.u32 %v120, 4294901760
    %1240 = vmatprep.subr.mxu0 %v1239
    %v1241 = vand.u32 %v119, 4294901760
    %1242 = vmatpush1.msra.mxu0 %v1241
    %v1243 = vand.u32 %v128, 4294901760
    %1244 = vmatprep.subr.mxu0 %v1243
    %v1245 = vand.u32 %v127, 4294901760
    %1246 = vmatpush1.msra.mxu0 %v1245
    %1247 = vmatprep.subr.mxu0 0.0
    %1248 = vmatpush1.msra.mxu0 0.0
    %1249 = vmatprep.subr.mxu0 0.0
    %1250 = vmatpush1.msra.mxu0 0.0
    %1251 = vmatprep.subr.mxu0 0.0
    %1252 = vmatpush1.msra.mxu0 0.0
    %1253 = vmatprep.subr.mxu0 0.0
    %1254 = vmatpush1.msra.mxu0 0.0
    %1255 = vmatprep.subr.mxu0 0.0
    %1256 = vmatpush1.msra.mxu0 0.0
    %1257 = vmatprep.subr.mxu0 0.0
    %1258 = vmatpush1.msra.mxu0 0.0
    %1259 = vmatprep.subr.mxu0 0.0
    %1260 = vmatpush1.msra.mxu0 0.0
    %1261 = vmatprep.subr.mxu0 0.0
    %1262 = vmatpush1.msra.mxu0 0.0
    %1263 = vmatprep.subr.mxu0 0.0
    %1264 = vmatpush1.msra.mxu0 0.0
    %1265 = vmatprep.subr.mxu0 0.0
    %1266 = vmatpush1.msra.mxu0 0.0
    %1267 = vmatprep.subr.mxu0 0.0
    %1268 = vmatpush1.msra.mxu0 0.0
    %1269 = vmatprep.subr.mxu0 0.0
    %1270 = vmatpush1.msra.mxu0 0.0
    %1271 = vmatprep.subr.mxu0 0.0
    %1272 = vmatpush1.msra.mxu0 0.0
    %1273 = vmatprep.subr.mxu0 0.0
    %1274 = vmatpush1.msra.mxu0 0.0
    %1275 = vmatprep.subr.mxu0 0.0
    %1276 = vmatpush1.msra.mxu0 0.0
    %1277 = vmatprep.subr.mxu0 0.0
    %1278 = vmatpush1.msra.mxu0 0.0
    %1279 = vmatprep.subr.mxu0 0.0
    %1280 = vmatpush1.msra.mxu0 0.0
    %1281 = vmatprep.subr.mxu0 0.0
    %1282 = vmatpush1.msra.mxu0 0.0
    %1283 = vmatprep.subr.mxu0 0.0
    %1284 = vmatpush1.msra.mxu0 0.0
    %1285 = vmatprep.subr.mxu0 0.0
    %1286 = vmatpush1.msra.mxu0 0.0
    %1287 = vmatprep.subr.mxu0 0.0
    %1288 = vmatpush1.msra.mxu0 0.0
    %1289 = vmatprep.subr.mxu0 0.0
    %1290 = vmatpush1.msra.mxu0 0.0
    %1291 = vmatprep.subr.mxu0 0.0
    %1292 = vmatpush1.msra.mxu0 0.0
    %1293 = vmatprep.subr.mxu0 0.0
    %1294 = vmatpush1.msra.mxu0 0.0
    %1295 = vmatprep.mubr.f32.mxu0 0.0
    %v1296 = vand.u32 %v139, 4294901760
    %v1297 = vsub.f32 %v139, %v1296
    %v1298 = vand.u32 %v1297, 4294901760
    %1299 = vmatmul.mubr.f32.gmra.mrb[0].mxu0 %v1298
    %v1300 = vpop.f32.mrb[0].mxu0
    %v1301 = vadd.f32 %v1203, %v1300
    %v1302 = vpop.f32.mrb[0].mxu0
    %v1303 = vadd.f32 %v1205, %v1302
    %1304 = vmatprep.mubr.f32.mxu0 0.0
    %v1305 = vand.u32 %v142, 4294901760
    %v1306 = vsub.f32 %v142, %v1305
    %v1307 = vand.u32 %v1306, 4294901760
    %1308 = vmatmul.mubr.f32.gmra.mrb[0].mxu0 %v1307
    %v1309 = vpop.f32.mrb[0].mxu0
    %v1310 = vadd.f32 %v1211, %v1309
    %v1311 = vpop.f32.mrb[0].mxu0
    %v1312 = vadd.f32 %v1213, %v1311
    %1313 = vdwg.mxu0
    %v1314 = vand.u32 %v72, 4294901760
    %v1315 = vsub.f32 %v72, %v1314
    %v1316 = vand.u32 %v1315, 4294901760
    %1317 = vmatprep.subr.mxu0 %v1316
    %v1318 = vand.u32 %v71, 4294901760
    %v1319 = vsub.f32 %v71, %v1318
    %v1320 = vand.u32 %v1319, 4294901760
    %1321 = vmatpush1.msra.mxu0 %v1320
    %v1322 = vand.u32 %v80, 4294901760
    %v1323 = vsub.f32 %v80, %v1322
    %v1324 = vand.u32 %v1323, 4294901760
    %1325 = vmatprep.subr.mxu0 %v1324
    %v1326 = vand.u32 %v79, 4294901760
    %v1327 = vsub.f32 %v79, %v1326
    %v1328 = vand.u32 %v1327, 4294901760
    %1329 = vmatpush1.msra.mxu0 %v1328
    %v1330 = vand.u32 %v88, 4294901760
    %v1331 = vsub.f32 %v88, %v1330
    %v1332 = vand.u32 %v1331, 4294901760
    %1333 = vmatprep.subr.mxu0 %v1332
    %v1334 = vand.u32 %v87, 4294901760
    %v1335 = vsub.f32 %v87, %v1334
    %v1336 = vand.u32 %v1335, 4294901760
    %1337 = vmatpush1.msra.mxu0 %v1336
    %v1338 = vand.u32 %v96, 4294901760
    %v1339 = vsub.f32 %v96, %v1338
    %v1340 = vand.u32 %v1339, 4294901760
    %1341 = vmatprep.subr.mxu0 %v1340
    %v1342 = vand.u32 %v95, 4294901760
    %v1343 = vsub.f32 %v95, %v1342
    %v1344 = vand.u32 %v1343, 4294901760
    %1345 = vmatpush1.msra.mxu0 %v1344
    %v1346 = vand.u32 %v104, 4294901760
    %v1347 = vsub.f32 %v104, %v1346
    %v1348 = vand.u32 %v1347, 4294901760
    %1349 = vmatprep.subr.mxu0 %v1348
    %v1350 = vand.u32 %v103, 4294901760
    %v1351 = vsub.f32 %v103, %v1350
    %v1352 = vand.u32 %v1351, 4294901760
    %1353 = vmatpush1.msra.mxu0 %v1352
    %v1354 = vand.u32 %v112, 4294901760
    %v1355 = vsub.f32 %v112, %v1354
    %v1356 = vand.u32 %v1355, 4294901760
    %1357 = vmatprep.subr.mxu0 %v1356
    %v1358 = vand.u32 %v111, 4294901760
    %v1359 = vsub.f32 %v111, %v1358
    %v1360 = vand.u32 %v1359, 4294901760
    %1361 = vmatpush1.msra.mxu0 %v1360
    %v1362 = vand.u32 %v120, 4294901760
    %v1363 = vsub.f32 %v120, %v1362
    %v1364 = vand.u32 %v1363, 4294901760
    %1365 = vmatprep.subr.mxu0 %v1364
    %v1366 = vand.u32 %v119, 4294901760
    %v1367 = vsub.f32 %v119, %v1366
    %v1368 = vand.u32 %v1367, 4294901760
    %1369 = vmatpush1.msra.mxu0 %v1368
    %v1370 = vand.u32 %v128, 4294901760
    %v1371 = vsub.f32 %v128, %v1370
    %v1372 = vand.u32 %v1371, 4294901760
    %1373 = vmatprep.subr.mxu0 %v1372
    %v1374 = vand.u32 %v127, 4294901760
    %v1375 = vsub.f32 %v127, %v1374
    %v1376 = vand.u32 %v1375, 4294901760
    %1377 = vmatpush1.msra.mxu0 %v1376
    %1378 = vmatprep.subr.mxu0 0.0
    %1379 = vmatpush1.msra.mxu0 0.0
    %1380 = vmatprep.subr.mxu0 0.0
    %1381 = vmatpush1.msra.mxu0 0.0
    %1382 = vmatprep.subr.mxu0 0.0
    %1383 = vmatpush1.msra.mxu0 0.0
    %1384 = vmatprep.subr.mxu0 0.0
    %1385 = vmatpush1.msra.mxu0 0.0
    %1386 = vmatprep.subr.mxu0 0.0
    %1387 = vmatpush1.msra.mxu0 0.0
    %1388 = vmatprep.subr.mxu0 0.0
    %1389 = vmatpush1.msra.mxu0 0.0
    %1390 = vmatprep.subr.mxu0 0.0
    %1391 = vmatpush1.msra.mxu0 0.0
    %1392 = vmatprep.subr.mxu0 0.0
    %1393 = vmatpush1.msra.mxu0 0.0
    %1394 = vmatprep.subr.mxu0 0.0
    %1395 = vmatpush1.msra.mxu0 0.0
    %1396 = vmatprep.subr.mxu0 0.0
    %1397 = vmatpush1.msra.mxu0 0.0
    %1398 = vmatprep.subr.mxu0 0.0
    %1399 = vmatpush1.msra.mxu0 0.0
    %1400 = vmatprep.subr.mxu0 0.0
    %1401 = vmatpush1.msra.mxu0 0.0
    %1402 = vmatprep.subr.mxu0 0.0
    %1403 = vmatpush1.msra.mxu0 0.0
    %1404 = vmatprep.subr.mxu0 0.0
    %1405 = vmatpush1.msra.mxu0 0.0
    %1406 = vmatprep.subr.mxu0 0.0
    %1407 = vmatpush1.msra.mxu0 0.0
    %1408 = vmatprep.subr.mxu0 0.0
    %1409 = vmatpush1.msra.mxu0 0.0
    %1410 = vmatprep.subr.mxu0 0.0
    %1411 = vmatpush1.msra.mxu0 0.0
    %1412 = vmatprep.subr.mxu0 0.0
    %1413 = vmatpush1.msra.mxu0 0.0
    %1414 = vmatprep.subr.mxu0 0.0
    %1415 = vmatpush1.msra.mxu0 0.0
    %1416 = vmatprep.subr.mxu0 0.0
    %1417 = vmatpush1.msra.mxu0 0.0
    %1418 = vmatprep.subr.mxu0 0.0
    %1419 = vmatpush1.msra.mxu0 0.0
    %1420 = vmatprep.subr.mxu0 0.0
    %1421 = vmatpush1.msra.mxu0 0.0
    %1422 = vmatprep.subr.mxu0 0.0
    %1423 = vmatpush1.msra.mxu0 0.0
    %1424 = vmatprep.subr.mxu0 0.0
    %1425 = vmatpush1.msra.mxu0 0.0
    %1426 = vmatprep.mubr.f32.mxu0 0.0
    %v1427 = vand.u32 %v139, 4294901760
    %1428 = vmatmul.mubr.f32.gmra.mrb[0].mxu0 %v1427
    %v1429 = vpop.f32.mrb[0].mxu0
    %v1430 = vadd.f32 %v1301, %v1429
    %v1431 = vpop.f32.mrb[0].mxu0
    %v1432 = vadd.f32 %v1303, %v1431
    %1433 = vmatprep.mubr.f32.mxu0 0.0
    %v1434 = vand.u32 %v142, 4294901760
    %1435 = vmatmul.mubr.f32.gmra.mrb[0].mxu0 %v1434
    %v1436 = vpop.f32.mrb[0].mxu0
    %v1437 = vadd.f32 %v1310, %v1436
    %v1438 = vpop.f32.mrb[0].mxu0
    %v1439 = vadd.f32 %v1312, %v1438
    %1440 = vdwg.mxu0
    %v1441 = vand.u32 %v72, 4294901760
    %1442 = vmatprep.subr.mxu0 %v1441
    %v1443 = vand.u32 %v71, 4294901760
    %1444 = vmatpush1.msra.mxu0 %v1443
    %v1445 = vand.u32 %v80, 4294901760
    %1446 = vmatprep.subr.mxu0 %v1445
    %v1447 = vand.u32 %v79, 4294901760
    %1448 = vmatpush1.msra.mxu0 %v1447
    %v1449 = vand.u32 %v88, 4294901760
    %1450 = vmatprep.subr.mxu0 %v1449
    %v1451 = vand.u32 %v87, 4294901760
    %1452 = vmatpush1.msra.mxu0 %v1451
    %v1453 = vand.u32 %v96, 4294901760
    %1454 = vmatprep.subr.mxu0 %v1453
    %v1455 = vand.u32 %v95, 4294901760
    %1456 = vmatpush1.msra.mxu0 %v1455
    %v1457 = vand.u32 %v104, 4294901760
    %1458 = vmatprep.subr.mxu0 %v1457
    %v1459 = vand.u32 %v103, 4294901760
    %1460 = vmatpush1.msra.mxu0 %v1459
    %v1461 = vand.u32 %v112, 4294901760
    %1462 = vmatprep.subr.mxu0 %v1461
    %v1463 = vand.u32 %v111, 4294901760
    %1464 = vmatpush1.msra.mxu0 %v1463
    %v1465 = vand.u32 %v120, 4294901760
    %1466 = vmatprep.subr.mxu0 %v1465
    %v1467 = vand.u32 %v119, 4294901760
    %1468 = vmatpush1.msra.mxu0 %v1467
    %v1469 = vand.u32 %v128, 4294901760
    %1470 = vmatprep.subr.mxu0 %v1469
    %v1471 = vand.u32 %v127, 4294901760
    %1472 = vmatpush1.msra.mxu0 %v1471
    %1473 = vmatprep.subr.mxu0 0.0
    %1474 = vmatpush1.msra.mxu0 0.0
    %1475 = vmatprep.subr.mxu0 0.0
    %1476 = vmatpush1.msra.mxu0 0.0
    %1477 = vmatprep.subr.mxu0 0.0
    %1478 = vmatpush1.msra.mxu0 0.0
    %1479 = vmatprep.subr.mxu0 0.0
    %1480 = vmatpush1.msra.mxu0 0.0
    %1481 = vmatprep.subr.mxu0 0.0
    %1482 = vmatpush1.msra.mxu0 0.0
    %1483 = vmatprep.subr.mxu0 0.0
    %1484 = vmatpush1.msra.mxu0 0.0
    %1485 = vmatprep.subr.mxu0 0.0
    %1486 = vmatpush1.msra.mxu0 0.0
    %1487 = vmatprep.subr.mxu0 0.0
    %1488 = vmatpush1.msra.mxu0 0.0
    %1489 = vmatprep.subr.mxu0 0.0
    %1490 = vmatpush1.msra.mxu0 0.0
    %1491 = vmatprep.subr.mxu0 0.0
    %1492 = vmatpush1.msra.mxu0 0.0
    %1493 = vmatprep.subr.mxu0 0.0
    %1494 = vmatpush1.msra.mxu0 0.0
    %1495 = vmatprep.subr.mxu0 0.0
    %1496 = vmatpush1.msra.mxu0 0.0
    %1497 = vmatprep.subr.mxu0 0.0
    %1498 = vmatpush1.msra.mxu0 0.0
    %1499 = vmatprep.subr.mxu0 0.0
    %1500 = vmatpush1.msra.mxu0 0.0
    %1501 = vmatprep.subr.mxu0 0.0
    %1502 = vmatpush1.msra.mxu0 0.0
    %1503 = vmatprep.subr.mxu0 0.0
    %1504 = vmatpush1.msra.mxu0 0.0
    %1505 = vmatprep.subr.mxu0 0.0
    %1506 = vmatpush1.msra.mxu0 0.0
    %1507 = vmatprep.subr.mxu0 0.0
    %1508 = vmatpush1.msra.mxu0 0.0
    %1509 = vmatprep.subr.mxu0 0.0
    %1510 = vmatpush1.msra.mxu0 0.0
    %1511 = vmatprep.subr.mxu0 0.0
    %1512 = vmatpush1.msra.mxu0 0.0
    %1513 = vmatprep.subr.mxu0 0.0
    %1514 = vmatpush1.msra.mxu0 0.0
    %1515 = vmatprep.subr.mxu0 0.0
    %1516 = vmatpush1.msra.mxu0 0.0
    %1517 = vmatprep.subr.mxu0 0.0
    %1518 = vmatpush1.msra.mxu0 0.0
    %1519 = vmatprep.subr.mxu0 0.0
    %1520 = vmatpush1.msra.mxu0 0.0
    %1521 = vmatprep.mubr.f32.mxu0 0.0
    %v1522 = vand.u32 %v139, 4294901760
    %1523 = vmatmul.mubr.f32.gmra.mrb[0].mxu0 %v1522
    %v1524 = vpop.f32.mrb[0].mxu0
    %v1525 = vadd.f32 %v1430, %v1524
    %v1526 = vpop.f32.mrb[0].mxu0
    %v1527 = vadd.f32 %v1432, %v1526
    %1528 = vmatprep.mubr.f32.mxu0 0.0
    %v1529 = vand.u32 %v142, 4294901760
    %1530 = vmatmul.mubr.f32.gmra.mrb[0].mxu0 %v1529
    %v1531 = vpop.f32.mrb[0].mxu0
    %v1532 = vadd.f32 %v1437, %v1531
    %v1533 = vpop.f32.mrb[0].mxu0
    %v1534 = vadd.f32 %v1439, %v1533
    %1535 = vdwg.mxu0
    %v1536 = vand.u32 %v74, 4294901760
    %1537 = vmatprep.subr.mxu0 %v1536
    %v1538 = vand.u32 %v73, 4294901760
    %1539 = vmatpush1.msra.mxu0 %v1538
    %v1540 = vand.u32 %v82, 4294901760
    %1541 = vmatprep.subr.mxu0 %v1540
    %v1542 = vand.u32 %v81, 4294901760
    %1543 = vmatpush1.msra.mxu0 %v1542
    %v1544 = vand.u32 %v90, 4294901760
    %1545 = vmatprep.subr.mxu0 %v1544
    %v1546 = vand.u32 %v89, 4294901760
    %1547 = vmatpush1.msra.mxu0 %v1546
    %v1548 = vand.u32 %v98, 4294901760
    %1549 = vmatprep.subr.mxu0 %v1548
    %v1550 = vand.u32 %v97, 4294901760
    %1551 = vmatpush1.msra.mxu0 %v1550
    %v1552 = vand.u32 %v106, 4294901760
    %1553 = vmatprep.subr.mxu0 %v1552
    %v1554 = vand.u32 %v105, 4294901760
    %1555 = vmatpush1.msra.mxu0 %v1554
    %v1556 = vand.u32 %v114, 4294901760
    %1557 = vmatprep.subr.mxu0 %v1556
    %v1558 = vand.u32 %v113, 4294901760
    %1559 = vmatpush1.msra.mxu0 %v1558
    %v1560 = vand.u32 %v122, 4294901760
    %1561 = vmatprep.subr.mxu0 %v1560
    %v1562 = vand.u32 %v121, 4294901760
    %1563 = vmatpush1.msra.mxu0 %v1562
    %v1564 = vand.u32 %v130, 4294901760
    %1565 = vmatprep.subr.mxu0 %v1564
    %v1566 = vand.u32 %v129, 4294901760
    %1567 = vmatpush1.msra.mxu0 %v1566
    %1568 = vmatprep.subr.mxu0 0.0
    %1569 = vmatpush1.msra.mxu0 0.0
    %1570 = vmatprep.subr.mxu0 0.0
    %1571 = vmatpush1.msra.mxu0 0.0
    %1572 = vmatprep.subr.mxu0 0.0
    %1573 = vmatpush1.msra.mxu0 0.0
    %1574 = vmatprep.subr.mxu0 0.0
    %1575 = vmatpush1.msra.mxu0 0.0
    %1576 = vmatprep.subr.mxu0 0.0
    %1577 = vmatpush1.msra.mxu0 0.0
    %1578 = vmatprep.subr.mxu0 0.0
    %1579 = vmatpush1.msra.mxu0 0.0
    %1580 = vmatprep.subr.mxu0 0.0
    %1581 = vmatpush1.msra.mxu0 0.0
    %1582 = vmatprep.subr.mxu0 0.0
    %1583 = vmatpush1.msra.mxu0 0.0
    %1584 = vmatprep.subr.mxu0 0.0
    %1585 = vmatpush1.msra.mxu0 0.0
    %1586 = vmatprep.subr.mxu0 0.0
    %1587 = vmatpush1.msra.mxu0 0.0
    %1588 = vmatprep.subr.mxu0 0.0
    %1589 = vmatpush1.msra.mxu0 0.0
    %1590 = vmatprep.subr.mxu0 0.0
    %1591 = vmatpush1.msra.mxu0 0.0
    %1592 = vmatprep.subr.mxu0 0.0
    %1593 = vmatpush1.msra.mxu0 0.0
    %1594 = vmatprep.subr.mxu0 0.0
    %1595 = vmatpush1.msra.mxu0 0.0
    %1596 = vmatprep.subr.mxu0 0.0
    %1597 = vmatpush1.msra.mxu0 0.0
    %1598 = vmatprep.subr.mxu0 0.0
    %1599 = vmatpush1.msra.mxu0 0.0
    %1600 = vmatprep.subr.mxu0 0.0
    %1601 = vmatpush1.msra.mxu0 0.0
    %1602 = vmatprep.subr.mxu0 0.0
    %1603 = vmatpush1.msra.mxu0 0.0
    %1604 = vmatprep.subr.mxu0 0.0
    %1605 = vmatpush1.msra.mxu0 0.0
    %1606 = vmatprep.subr.mxu0 0.0
    %1607 = vmatpush1.msra.mxu0 0.0
    %1608 = vmatprep.subr.mxu0 0.0
    %1609 = vmatpush1.msra.mxu0 0.0
    %1610 = vmatprep.subr.mxu0 0.0
    %1611 = vmatpush1.msra.mxu0 0.0
    %1612 = vmatprep.subr.mxu0 0.0
    %1613 = vmatpush1.msra.mxu0 0.0
    %1614 = vmatprep.subr.mxu0 0.0
    %1615 = vmatpush1.msra.mxu0 0.0
    %1616 = vmatprep.mubr.f32.mxu0 0.0
    %v1617 = vand.u32 %v139, 4294901760
    %v1618 = vsub.f32 %v139, %v1617
    %v1619 = vand.u32 %v1618, 4294901760
    %v1620 = vsub.f32 %v1618, %v1619
    %v1621 = vand.u32 %v1620, 4294901760
    %1622 = vmatmul.mubr.f32.gmra.mrb[0].mxu0 %v1621
    %v1623 = vpop.f32.mrb[0].mxu0
    %v1624 = vadd.f32 0.0, %v1623
    %v1625 = vpop.f32.mrb[0].mxu0
    %v1626 = vadd.f32 0.0, %v1625
    %1627 = vmatprep.mubr.f32.mxu0 0.0
    %v1628 = vand.u32 %v142, 4294901760
    %v1629 = vsub.f32 %v142, %v1628
    %v1630 = vand.u32 %v1629, 4294901760
    %v1631 = vsub.f32 %v1629, %v1630
    %v1632 = vand.u32 %v1631, 4294901760
    %1633 = vmatmul.mubr.f32.gmra.mrb[0].mxu0 %v1632
    %v1634 = vpop.f32.mrb[0].mxu0
    %v1635 = vadd.f32 0.0, %v1634
    %v1636 = vpop.f32.mrb[0].mxu0
    %v1637 = vadd.f32 0.0, %v1636
    %1638 = vdwg.mxu0
    %v1639 = vand.u32 %v74, 4294901760
    %v1640 = vsub.f32 %v74, %v1639
    %v1641 = vand.u32 %v1640, 4294901760
    %v1642 = vsub.f32 %v1640, %v1641
    %v1643 = vand.u32 %v1642, 4294901760
    %1644 = vmatprep.subr.mxu0 %v1643
    %v1645 = vand.u32 %v73, 4294901760
    %v1646 = vsub.f32 %v73, %v1645
    %v1647 = vand.u32 %v1646, 4294901760
    %v1648 = vsub.f32 %v1646, %v1647
    %v1649 = vand.u32 %v1648, 4294901760
    %1650 = vmatpush1.msra.mxu0 %v1649
    %v1651 = vand.u32 %v82, 4294901760
    %v1652 = vsub.f32 %v82, %v1651
    %v1653 = vand.u32 %v1652, 4294901760
    %v1654 = vsub.f32 %v1652, %v1653
    %v1655 = vand.u32 %v1654, 4294901760
    %1656 = vmatprep.subr.mxu0 %v1655
    %v1657 = vand.u32 %v81, 4294901760
    %v1658 = vsub.f32 %v81, %v1657
    %v1659 = vand.u32 %v1658, 4294901760
    %v1660 = vsub.f32 %v1658, %v1659
    %v1661 = vand.u32 %v1660, 4294901760
    %1662 = vmatpush1.msra.mxu0 %v1661
    %v1663 = vand.u32 %v90, 4294901760
    %v1664 = vsub.f32 %v90, %v1663
    %v1665 = vand.u32 %v1664, 4294901760
    %v1666 = vsub.f32 %v1664, %v1665
    %v1667 = vand.u32 %v1666, 4294901760
    %1668 = vmatprep.subr.mxu0 %v1667
    %v1669 = vand.u32 %v89, 4294901760
    %v1670 = vsub.f32 %v89, %v1669
    %v1671 = vand.u32 %v1670, 4294901760
    %v1672 = vsub.f32 %v1670, %v1671
    %v1673 = vand.u32 %v1672, 4294901760
    %1674 = vmatpush1.msra.mxu0 %v1673
    %v1675 = vand.u32 %v98, 4294901760
    %v1676 = vsub.f32 %v98, %v1675
    %v1677 = vand.u32 %v1676, 4294901760
    %v1678 = vsub.f32 %v1676, %v1677
    %v1679 = vand.u32 %v1678, 4294901760
    %1680 = vmatprep.subr.mxu0 %v1679
    %v1681 = vand.u32 %v97, 4294901760
    %v1682 = vsub.f32 %v97, %v1681
    %v1683 = vand.u32 %v1682, 4294901760
    %v1684 = vsub.f32 %v1682, %v1683
    %v1685 = vand.u32 %v1684, 4294901760
    %1686 = vmatpush1.msra.mxu0 %v1685
    %v1687 = vand.u32 %v106, 4294901760
    %v1688 = vsub.f32 %v106, %v1687
    %v1689 = vand.u32 %v1688, 4294901760
    %v1690 = vsub.f32 %v1688, %v1689
    %v1691 = vand.u32 %v1690, 4294901760
    %1692 = vmatprep.subr.mxu0 %v1691
    %v1693 = vand.u32 %v105, 4294901760
    %v1694 = vsub.f32 %v105, %v1693
    %v1695 = vand.u32 %v1694, 4294901760
    %v1696 = vsub.f32 %v1694, %v1695
    %v1697 = vand.u32 %v1696, 4294901760
    %1698 = vmatpush1.msra.mxu0 %v1697
    %v1699 = vand.u32 %v114, 4294901760
    %v1700 = vsub.f32 %v114, %v1699
    %v1701 = vand.u32 %v1700, 4294901760
    %v1702 = vsub.f32 %v1700, %v1701
    %v1703 = vand.u32 %v1702, 4294901760
    %1704 = vmatprep.subr.mxu0 %v1703
    %v1705 = vand.u32 %v113, 4294901760
    %v1706 = vsub.f32 %v113, %v1705
    %v1707 = vand.u32 %v1706, 4294901760
    %v1708 = vsub.f32 %v1706, %v1707
    %v1709 = vand.u32 %v1708, 4294901760
    %1710 = vmatpush1.msra.mxu0 %v1709
    %v1711 = vand.u32 %v122, 4294901760
    %v1712 = vsub.f32 %v122, %v1711
    %v1713 = vand.u32 %v1712, 4294901760
    %v1714 = vsub.f32 %v1712, %v1713
    %v1715 = vand.u32 %v1714, 4294901760
    %1716 = vmatprep.subr.mxu0 %v1715
    %v1717 = vand.u32 %v121, 4294901760
    %v1718 = vsub.f32 %v121, %v1717
    %v1719 = vand.u32 %v1718, 4294901760
    %v1720 = vsub.f32 %v1718, %v1719
    %v1721 = vand.u32 %v1720, 4294901760
    %1722 = vmatpush1.msra.mxu0 %v1721
    %v1723 = vand.u32 %v130, 4294901760
    %v1724 = vsub.f32 %v130, %v1723
    %v1725 = vand.u32 %v1724, 4294901760
    %v1726 = vsub.f32 %v1724, %v1725
    %v1727 = vand.u32 %v1726, 4294901760
    %1728 = vmatprep.subr.mxu0 %v1727
    %v1729 = vand.u32 %v129, 4294901760
    %v1730 = vsub.f32 %v129, %v1729
    %v1731 = vand.u32 %v1730, 4294901760
    %v1732 = vsub.f32 %v1730, %v1731
    %v1733 = vand.u32 %v1732, 4294901760
    %1734 = vmatpush1.msra.mxu0 %v1733
    %1735 = vmatprep.subr.mxu0 0.0
    %1736 = vmatpush1.msra.mxu0 0.0
    %1737 = vmatprep.subr.mxu0 0.0
    %1738 = vmatpush1.msra.mxu0 0.0
    %1739 = vmatprep.subr.mxu0 0.0
    %1740 = vmatpush1.msra.mxu0 0.0
    %1741 = vmatprep.subr.mxu0 0.0
    %1742 = vmatpush1.msra.mxu0 0.0
    %1743 = vmatprep.subr.mxu0 0.0
    %1744 = vmatpush1.msra.mxu0 0.0
    %1745 = vmatprep.subr.mxu0 0.0
    %1746 = vmatpush1.msra.mxu0 0.0
    %1747 = vmatprep.subr.mxu0 0.0
    %1748 = vmatpush1.msra.mxu0 0.0
    %1749 = vmatprep.subr.mxu0 0.0
    %1750 = vmatpush1.msra.mxu0 0.0
    %1751 = vmatprep.subr.mxu0 0.0
    %1752 = vmatpush1.msra.mxu0 0.0
    %1753 = vmatprep.subr.mxu0 0.0
    %1754 = vmatpush1.msra.mxu0 0.0
    %1755 = vmatprep.subr.mxu0 0.0
    %1756 = vmatpush1.msra.mxu0 0.0
    %1757 = vmatprep.subr.mxu0 0.0
    %1758 = vmatpush1.msra.mxu0 0.0
    %1759 = vmatprep.subr.mxu0 0.0
    %1760 = vmatpush1.msra.mxu0 0.0
    %1761 = vmatprep.subr.mxu0 0.0
    %1762 = vmatpush1.msra.mxu0 0.0
    %1763 = vmatprep.subr.mxu0 0.0
    %1764 = vmatpush1.msra.mxu0 0.0
    %1765 = vmatprep.subr.mxu0 0.0
    %1766 = vmatpush1.msra.mxu0 0.0
    %1767 = vmatprep.subr.mxu0 0.0
    %1768 = vmatpush1.msra.mxu0 0.0
    %1769 = vmatprep.subr.mxu0 0.0
    %1770 = vmatpush1.msra.mxu0 0.0
    %1771 = vmatprep.subr.mxu0 0.0
    %1772 = vmatpush1.msra.mxu0 0.0
    %1773 = vmatprep.subr.mxu0 0.0
    %1774 = vmatpush1.msra.mxu0 0.0
    %1775 = vmatprep.subr.mxu0 0.0
    %1776 = vmatpush1.msra.mxu0 0.0
    %1777 = vmatprep.subr.mxu0 0.0
    %1778 = vmatpush1.msra.mxu0 0.0
    %1779 = vmatprep.subr.mxu0 0.0
    %1780 = vmatpush1.msra.mxu0 0.0
    %1781 = vmatprep.subr.mxu0 0.0
    %1782 = vmatpush1.msra.mxu0 0.0
    %1783 = vmatprep.mubr.f32.mxu0 0.0
    %v1784 = vand.u32 %v139, 4294901760
    %1785 = vmatmul.mubr.f32.gmra.mrb[0].mxu0 %v1784
    %v1786 = vpop.f32.mrb[0].mxu0
    %v1787 = vadd.f32 %v1624, %v1786
    %v1788 = vpop.f32.mrb[0].mxu0
    %v1789 = vadd.f32 %v1626, %v1788
    %1790 = vmatprep.mubr.f32.mxu0 0.0
    %v1791 = vand.u32 %v142, 4294901760
    %1792 = vmatmul.mubr.f32.gmra.mrb[0].mxu0 %v1791
    %v1793 = vpop.f32.mrb[0].mxu0
    %v1794 = vadd.f32 %v1635, %v1793
    %v1795 = vpop.f32.mrb[0].mxu0
    %v1796 = vadd.f32 %v1637, %v1795
    %1797 = vdwg.mxu0
    %v1798 = vand.u32 %v74, 4294901760
    %v1799 = vsub.f32 %v74, %v1798
    %1800 = vmatprep.subr.mxu0 %v1799
    %v1801 = vand.u32 %v73, 4294901760
    %v1802 = vsub.f32 %v73, %v1801
    %1803 = vmatpush1.msra.mxu0 %v1802
    %v1804 = vand.u32 %v82, 4294901760
    %v1805 = vsub.f32 %v82, %v1804
    %1806 = vmatprep.subr.mxu0 %v1805
    %v1807 = vand.u32 %v81, 4294901760
    %v1808 = vsub.f32 %v81, %v1807
    %1809 = vmatpush1.msra.mxu0 %v1808
    %v1810 = vand.u32 %v90, 4294901760
    %v1811 = vsub.f32 %v90, %v1810
    %1812 = vmatprep.subr.mxu0 %v1811
    %v1813 = vand.u32 %v89, 4294901760
    %v1814 = vsub.f32 %v89, %v1813
    %1815 = vmatpush1.msra.mxu0 %v1814
    %v1816 = vand.u32 %v98, 4294901760
    %v1817 = vsub.f32 %v98, %v1816
    %1818 = vmatprep.subr.mxu0 %v1817
    %v1819 = vand.u32 %v97, 4294901760
    %v1820 = vsub.f32 %v97, %v1819
    %1821 = vmatpush1.msra.mxu0 %v1820
    %v1822 = vand.u32 %v106, 4294901760
    %v1823 = vsub.f32 %v106, %v1822
    %1824 = vmatprep.subr.mxu0 %v1823
    %v1825 = vand.u32 %v105, 4294901760
    %v1826 = vsub.f32 %v105, %v1825
    %1827 = vmatpush1.msra.mxu0 %v1826
    %v1828 = vand.u32 %v114, 4294901760
    %v1829 = vsub.f32 %v114, %v1828
    %1830 = vmatprep.subr.mxu0 %v1829
    %v1831 = vand.u32 %v113, 4294901760
    %v1832 = vsub.f32 %v113, %v1831
    %1833 = vmatpush1.msra.mxu0 %v1832
    %v1834 = vand.u32 %v122, 4294901760
    %v1835 = vsub.f32 %v122, %v1834
    %1836 = vmatprep.subr.mxu0 %v1835
    %v1837 = vand.u32 %v121, 4294901760
    %v1838 = vsub.f32 %v121, %v1837
    %1839 = vmatpush1.msra.mxu0 %v1838
    %v1840 = vand.u32 %v130, 4294901760
    %v1841 = vsub.f32 %v130, %v1840
    %1842 = vmatprep.subr.mxu0 %v1841
    %v1843 = vand.u32 %v129, 4294901760
    %v1844 = vsub.f32 %v129, %v1843
    %1845 = vmatpush1.msra.mxu0 %v1844
    %1846 = vmatprep.subr.mxu0 0.0
    %1847 = vmatpush1.msra.mxu0 0.0
    %1848 = vmatprep.subr.mxu0 0.0
    %1849 = vmatpush1.msra.mxu0 0.0
    %1850 = vmatprep.subr.mxu0 0.0
    %1851 = vmatpush1.msra.mxu0 0.0
    %1852 = vmatprep.subr.mxu0 0.0
    %1853 = vmatpush1.msra.mxu0 0.0
    %1854 = vmatprep.subr.mxu0 0.0
    %1855 = vmatpush1.msra.mxu0 0.0
    %1856 = vmatprep.subr.mxu0 0.0
    %1857 = vmatpush1.msra.mxu0 0.0
    %1858 = vmatprep.subr.mxu0 0.0
    %1859 = vmatpush1.msra.mxu0 0.0
    %1860 = vmatprep.subr.mxu0 0.0
    %1861 = vmatpush1.msra.mxu0 0.0
    %1862 = vmatprep.subr.mxu0 0.0
    %1863 = vmatpush1.msra.mxu0 0.0
    %1864 = vmatprep.subr.mxu0 0.0
    %1865 = vmatpush1.msra.mxu0 0.0
    %1866 = vmatprep.subr.mxu0 0.0
    %1867 = vmatpush1.msra.mxu0 0.0
    %1868 = vmatprep.subr.mxu0 0.0
    %1869 = vmatpush1.msra.mxu0 0.0
    %1870 = vmatprep.subr.mxu0 0.0
    %1871 = vmatpush1.msra.mxu0 0.0
    %1872 = vmatprep.subr.mxu0 0.0
    %1873 = vmatpush1.msra.mxu0 0.0
    %1874 = vmatprep.subr.mxu0 0.0
    %1875 = vmatpush1.msra.mxu0 0.0
    %1876 = vmatprep.subr.mxu0 0.0
    %1877 = vmatpush1.msra.mxu0 0.0
    %1878 = vmatprep.subr.mxu0 0.0
    %1879 = vmatpush1.msra.mxu0 0.0
    %1880 = vmatprep.subr.mxu0 0.0
    %1881 = vmatpush1.msra.mxu0 0.0
    %1882 = vmatprep.subr.mxu0 0.0
    %1883 = vmatpush1.msra.mxu0 0.0
    %1884 = vmatprep.subr.mxu0 0.0
    %1885 = vmatpush1.msra.mxu0 0.0
    %1886 = vmatprep.subr.mxu0 0.0
    %1887 = vmatpush1.msra.mxu0 0.0
    %1888 = vmatprep.subr.mxu0 0.0
    %1889 = vmatpush1.msra.mxu0 0.0
    %1890 = vmatprep.subr.mxu0 0.0
    %1891 = vmatpush1.msra.mxu0 0.0
    %1892 = vmatprep.subr.mxu0 0.0
    %1893 = vmatpush1.msra.mxu0 0.0
    %1894 = vmatprep.mubr.f32.mxu0 0.0
    %v1895 = vand.u32 %v139, 4294901760
    %v1896 = vsub.f32 %v139, %v1895
    %1897 = vmatmul.mubr.f32.gmra.mrb[0].mxu0 %v1896
    %v1898 = vpop.f32.mrb[0].mxu0
    %v1899 = vadd.f32 %v1787, %v1898
    %v1900 = vpop.f32.mrb[0].mxu0
    %v1901 = vadd.f32 %v1789, %v1900
    %1902 = vmatprep.mubr.f32.mxu0 0.0
    %v1903 = vand.u32 %v142, 4294901760
    %v1904 = vsub.f32 %v142, %v1903
    %1905 = vmatmul.mubr.f32.gmra.mrb[0].mxu0 %v1904
    %v1906 = vpop.f32.mrb[0].mxu0
    %v1907 = vadd.f32 %v1794, %v1906
    %v1908 = vpop.f32.mrb[0].mxu0
    %v1909 = vadd.f32 %v1796, %v1908
    %1910 = vdwg.mxu0
    %v1911 = vand.u32 %v74, 4294901760
    %1912 = vmatprep.subr.mxu0 %v1911
    %v1913 = vand.u32 %v73, 4294901760
    %1914 = vmatpush1.msra.mxu0 %v1913
    %v1915 = vand.u32 %v82, 4294901760
    %1916 = vmatprep.subr.mxu0 %v1915
    %v1917 = vand.u32 %v81, 4294901760
    %1918 = vmatpush1.msra.mxu0 %v1917
    %v1919 = vand.u32 %v90, 4294901760
    %1920 = vmatprep.subr.mxu0 %v1919
    %v1921 = vand.u32 %v89, 4294901760
    %1922 = vmatpush1.msra.mxu0 %v1921
    %v1923 = vand.u32 %v98, 4294901760
    %1924 = vmatprep.subr.mxu0 %v1923
    %v1925 = vand.u32 %v97, 4294901760
    %1926 = vmatpush1.msra.mxu0 %v1925
    %v1927 = vand.u32 %v106, 4294901760
    %1928 = vmatprep.subr.mxu0 %v1927
    %v1929 = vand.u32 %v105, 4294901760
    %1930 = vmatpush1.msra.mxu0 %v1929
    %v1931 = vand.u32 %v114, 4294901760
    %1932 = vmatprep.subr.mxu0 %v1931
    %v1933 = vand.u32 %v113, 4294901760
    %1934 = vmatpush1.msra.mxu0 %v1933
    %v1935 = vand.u32 %v122, 4294901760
    %1936 = vmatprep.subr.mxu0 %v1935
    %v1937 = vand.u32 %v121, 4294901760
    %1938 = vmatpush1.msra.mxu0 %v1937
    %v1939 = vand.u32 %v130, 4294901760
    %1940 = vmatprep.subr.mxu0 %v1939
    %v1941 = vand.u32 %v129, 4294901760
    %1942 = vmatpush1.msra.mxu0 %v1941
    %1943 = vmatprep.subr.mxu0 0.0
    %1944 = vmatpush1.msra.mxu0 0.0
    %1945 = vmatprep.subr.mxu0 0.0
    %1946 = vmatpush1.msra.mxu0 0.0
    %1947 = vmatprep.subr.mxu0 0.0
    %1948 = vmatpush1.msra.mxu0 0.0
    %1949 = vmatprep.subr.mxu0 0.0
    %1950 = vmatpush1.msra.mxu0 0.0
    %1951 = vmatprep.subr.mxu0 0.0
    %1952 = vmatpush1.msra.mxu0 0.0
    %1953 = vmatprep.subr.mxu0 0.0
    %1954 = vmatpush1.msra.mxu0 0.0
    %1955 = vmatprep.subr.mxu0 0.0
    %1956 = vmatpush1.msra.mxu0 0.0
    %1957 = vmatprep.subr.mxu0 0.0
    %1958 = vmatpush1.msra.mxu0 0.0
    %1959 = vmatprep.subr.mxu0 0.0
    %1960 = vmatpush1.msra.mxu0 0.0
    %1961 = vmatprep.subr.mxu0 0.0
    %1962 = vmatpush1.msra.mxu0 0.0
    %1963 = vmatprep.subr.mxu0 0.0
    %1964 = vmatpush1.msra.mxu0 0.0
    %1965 = vmatprep.subr.mxu0 0.0
    %1966 = vmatpush1.msra.mxu0 0.0
    %1967 = vmatprep.subr.mxu0 0.0
    %1968 = vmatpush1.msra.mxu0 0.0
    %1969 = vmatprep.subr.mxu0 0.0
    %1970 = vmatpush1.msra.mxu0 0.0
    %1971 = vmatprep.subr.mxu0 0.0
    %1972 = vmatpush1.msra.mxu0 0.0
    %1973 = vmatprep.subr.mxu0 0.0
    %1974 = vmatpush1.msra.mxu0 0.0
    %1975 = vmatprep.subr.mxu0 0.0
    %1976 = vmatpush1.msra.mxu0 0.0
    %1977 = vmatprep.subr.mxu0 0.0
    %1978 = vmatpush1.msra.mxu0 0.0
    %1979 = vmatprep.subr.mxu0 0.0
    %1980 = vmatpush1.msra.mxu0 0.0
    %1981 = vmatprep.subr.mxu0 0.0
    %1982 = vmatpush1.msra.mxu0 0.0
    %1983 = vmatprep.subr.mxu0 0.0
    %1984 = vmatpush1.msra.mxu0 0.0
    %1985 = vmatprep.subr.mxu0 0.0
    %1986 = vmatpush1.msra.mxu0 0.0
    %1987 = vmatprep.subr.mxu0 0.0
    %1988 = vmatpush1.msra.mxu0 0.0
    %1989 = vmatprep.subr.mxu0 0.0
    %1990 = vmatpush1.msra.mxu0 0.0
    %1991 = vmatprep.mubr.f32.mxu0 0.0
    %v1992 = vand.u32 %v139, 4294901760
    %v1993 = vsub.f32 %v139, %v1992
    %v1994 = vand.u32 %v1993, 4294901760
    %1995 = vmatmul.mubr.f32.gmra.mrb[0].mxu0 %v1994
    %v1996 = vpop.f32.mrb[0].mxu0
    %v1997 = vadd.f32 %v1899, %v1996
    %v1998 = vpop.f32.mrb[0].mxu0
    %v1999 = vadd.f32 %v1901, %v1998
    %2000 = vmatprep.mubr.f32.mxu0 0.0
    %v2001 = vand.u32 %v142, 4294901760
    %v2002 = vsub.f32 %v142, %v2001
    %v2003 = vand.u32 %v2002, 4294901760
    %2004 = vmatmul.mubr.f32.gmra.mrb[0].mxu0 %v2003
    %v2005 = vpop.f32.mrb[0].mxu0
    %v2006 = vadd.f32 %v1907, %v2005
    %v2007 = vpop.f32.mrb[0].mxu0
    %v2008 = vadd.f32 %v1909, %v2007
    %2009 = vdwg.mxu0
    %v2010 = vand.u32 %v74, 4294901760
    %v2011 = vsub.f32 %v74, %v2010
    %v2012 = vand.u32 %v2011, 4294901760
    %2013 = vmatprep.subr.mxu0 %v2012
    %v2014 = vand.u32 %v73, 4294901760
    %v2015 = vsub.f32 %v73, %v2014
    %v2016 = vand.u32 %v2015, 4294901760
    %2017 = vmatpush1.msra.mxu0 %v2016
    %v2018 = vand.u32 %v82, 4294901760
    %v2019 = vsub.f32 %v82, %v2018
    %v2020 = vand.u32 %v2019, 4294901760
    %2021 = vmatprep.subr.mxu0 %v2020
    %v2022 = vand.u32 %v81, 4294901760
    %v2023 = vsub.f32 %v81, %v2022
    %v2024 = vand.u32 %v2023, 4294901760
    %2025 = vmatpush1.msra.mxu0 %v2024
    %v2026 = vand.u32 %v90, 4294901760
    %v2027 = vsub.f32 %v90, %v2026
    %v2028 = vand.u32 %v2027, 4294901760
    %2029 = vmatprep.subr.mxu0 %v2028
    %v2030 = vand.u32 %v89, 4294901760
    %v2031 = vsub.f32 %v89, %v2030
    %v2032 = vand.u32 %v2031, 4294901760
    %2033 = vmatpush1.msra.mxu0 %v2032
    %v2034 = vand.u32 %v98, 4294901760
    %v2035 = vsub.f32 %v98, %v2034
    %v2036 = vand.u32 %v2035, 4294901760
    %2037 = vmatprep.subr.mxu0 %v2036
    %v2038 = vand.u32 %v97, 4294901760
    %v2039 = vsub.f32 %v97, %v2038
    %v2040 = vand.u32 %v2039, 4294901760
    %2041 = vmatpush1.msra.mxu0 %v2040
    %v2042 = vand.u32 %v106, 4294901760
    %v2043 = vsub.f32 %v106, %v2042
    %v2044 = vand.u32 %v2043, 4294901760
    %2045 = vmatprep.subr.mxu0 %v2044
    %v2046 = vand.u32 %v105, 4294901760
    %v2047 = vsub.f32 %v105, %v2046
    %v2048 = vand.u32 %v2047, 4294901760
    %2049 = vmatpush1.msra.mxu0 %v2048
    %v2050 = vand.u32 %v114, 4294901760
    %v2051 = vsub.f32 %v114, %v2050
    %v2052 = vand.u32 %v2051, 4294901760
    %2053 = vmatprep.subr.mxu0 %v2052
    %v2054 = vand.u32 %v113, 4294901760
    %v2055 = vsub.f32 %v113, %v2054
    %v2056 = vand.u32 %v2055, 4294901760
    %2057 = vmatpush1.msra.mxu0 %v2056
    %v2058 = vand.u32 %v122, 4294901760
    %v2059 = vsub.f32 %v122, %v2058
    %v2060 = vand.u32 %v2059, 4294901760
    %2061 = vmatprep.subr.mxu0 %v2060
    %v2062 = vand.u32 %v121, 4294901760
    %v2063 = vsub.f32 %v121, %v2062
    %v2064 = vand.u32 %v2063, 4294901760
    %2065 = vmatpush1.msra.mxu0 %v2064
    %v2066 = vand.u32 %v130, 4294901760
    %v2067 = vsub.f32 %v130, %v2066
    %v2068 = vand.u32 %v2067, 4294901760
    %2069 = vmatprep.subr.mxu0 %v2068
    %v2070 = vand.u32 %v129, 4294901760
    %v2071 = vsub.f32 %v129, %v2070
    %v2072 = vand.u32 %v2071, 4294901760
    %2073 = vmatpush1.msra.mxu0 %v2072
    %2074 = vmatprep.subr.mxu0 0.0
    %2075 = vmatpush1.msra.mxu0 0.0
    %2076 = vmatprep.subr.mxu0 0.0
    %2077 = vmatpush1.msra.mxu0 0.0
    %2078 = vmatprep.subr.mxu0 0.0
    %2079 = vmatpush1.msra.mxu0 0.0
    %2080 = vmatprep.subr.mxu0 0.0
    %2081 = vmatpush1.msra.mxu0 0.0
    %2082 = vmatprep.subr.mxu0 0.0
    %2083 = vmatpush1.msra.mxu0 0.0
    %2084 = vmatprep.subr.mxu0 0.0
    %2085 = vmatpush1.msra.mxu0 0.0
    %2086 = vmatprep.subr.mxu0 0.0
    %2087 = vmatpush1.msra.mxu0 0.0
    %2088 = vmatprep.subr.mxu0 0.0
    %2089 = vmatpush1.msra.mxu0 0.0
    %2090 = vmatprep.subr.mxu0 0.0
    %2091 = vmatpush1.msra.mxu0 0.0
    %2092 = vmatprep.subr.mxu0 0.0
    %2093 = vmatpush1.msra.mxu0 0.0
    %2094 = vmatprep.subr.mxu0 0.0
    %2095 = vmatpush1.msra.mxu0 0.0
    %2096 = vmatprep.subr.mxu0 0.0
    %2097 = vmatpush1.msra.mxu0 0.0
    %2098 = vmatprep.subr.mxu0 0.0
    %2099 = vmatpush1.msra.mxu0 0.0
    %2100 = vmatprep.subr.mxu0 0.0
    %2101 = vmatpush1.msra.mxu0 0.0
    %2102 = vmatprep.subr.mxu0 0.0
    %2103 = vmatpush1.msra.mxu0 0.0
    %2104 = vmatprep.subr.mxu0 0.0
    %2105 = vmatpush1.msra.mxu0 0.0
    %2106 = vmatprep.subr.mxu0 0.0
    %2107 = vmatpush1.msra.mxu0 0.0
    %2108 = vmatprep.subr.mxu0 0.0
    %2109 = vmatpush1.msra.mxu0 0.0
    %2110 = vmatprep.subr.mxu0 0.0
    %2111 = vmatpush1.msra.mxu0 0.0
    %2112 = vmatprep.subr.mxu0 0.0
    %2113 = vmatpush1.msra.mxu0 0.0
    %2114 = vmatprep.subr.mxu0 0.0
    %2115 = vmatpush1.msra.mxu0 0.0
    %2116 = vmatprep.subr.mxu0 0.0
    %2117 = vmatpush1.msra.mxu0 0.0
    %2118 = vmatprep.subr.mxu0 0.0
    %2119 = vmatpush1.msra.mxu0 0.0
    %2120 = vmatprep.subr.mxu0 0.0
    %2121 = vmatpush1.msra.mxu0 0.0
    %2122 = vmatprep.mubr.f32.mxu0 0.0
    %v2123 = vand.u32 %v139, 4294901760
    %2124 = vmatmul.mubr.f32.gmra.mrb[0].mxu0 %v2123
    %v2125 = vpop.f32.mrb[0].mxu0
    %v2126 = vadd.f32 %v1997, %v2125
    %v2127 = vpop.f32.mrb[0].mxu0
    %v2128 = vadd.f32 %v1999, %v2127
    %2129 = vmatprep.mubr.f32.mxu0 0.0
    %v2130 = vand.u32 %v142, 4294901760
    %2131 = vmatmul.mubr.f32.gmra.mrb[0].mxu0 %v2130
    %v2132 = vpop.f32.mrb[0].mxu0
    %v2133 = vadd.f32 %v2006, %v2132
    %v2134 = vpop.f32.mrb[0].mxu0
    %v2135 = vadd.f32 %v2008, %v2134
    %2136 = vdwg.mxu0
    %v2137 = vand.u32 %v74, 4294901760
    %2138 = vmatprep.subr.mxu0 %v2137
    %v2139 = vand.u32 %v73, 4294901760
    %2140 = vmatpush1.msra.mxu0 %v2139
    %v2141 = vand.u32 %v82, 4294901760
    %2142 = vmatprep.subr.mxu0 %v2141
    %v2143 = vand.u32 %v81, 4294901760
    %2144 = vmatpush1.msra.mxu0 %v2143
    %v2145 = vand.u32 %v90, 4294901760
    %2146 = vmatprep.subr.mxu0 %v2145
    %v2147 = vand.u32 %v89, 4294901760
    %2148 = vmatpush1.msra.mxu0 %v2147
    %v2149 = vand.u32 %v98, 4294901760
    %2150 = vmatprep.subr.mxu0 %v2149
    %v2151 = vand.u32 %v97, 4294901760
    %2152 = vmatpush1.msra.mxu0 %v2151
    %v2153 = vand.u32 %v106, 4294901760
    %2154 = vmatprep.subr.mxu0 %v2153
    %v2155 = vand.u32 %v105, 4294901760
    %2156 = vmatpush1.msra.mxu0 %v2155
    %v2157 = vand.u32 %v114, 4294901760
    %2158 = vmatprep.subr.mxu0 %v2157
    %v2159 = vand.u32 %v113, 4294901760
    %2160 = vmatpush1.msra.mxu0 %v2159
    %v2161 = vand.u32 %v122, 4294901760
    %2162 = vmatprep.subr.mxu0 %v2161
    %v2163 = vand.u32 %v121, 4294901760
    %2164 = vmatpush1.msra.mxu0 %v2163
    %v2165 = vand.u32 %v130, 4294901760
    %2166 = vmatprep.subr.mxu0 %v2165
    %v2167 = vand.u32 %v129, 4294901760
    %2168 = vmatpush1.msra.mxu0 %v2167
    %2169 = vmatprep.subr.mxu0 0.0
    %2170 = vmatpush1.msra.mxu0 0.0
    %2171 = vmatprep.subr.mxu0 0.0
    %2172 = vmatpush1.msra.mxu0 0.0
    %2173 = vmatprep.subr.mxu0 0.0
    %2174 = vmatpush1.msra.mxu0 0.0
    %2175 = vmatprep.subr.mxu0 0.0
    %2176 = vmatpush1.msra.mxu0 0.0
    %2177 = vmatprep.subr.mxu0 0.0
    %2178 = vmatpush1.msra.mxu0 0.0
    %2179 = vmatprep.subr.mxu0 0.0
    %2180 = vmatpush1.msra.mxu0 0.0
    %2181 = vmatprep.subr.mxu0 0.0
    %2182 = vmatpush1.msra.mxu0 0.0
    %2183 = vmatprep.subr.mxu0 0.0
    %2184 = vmatpush1.msra.mxu0 0.0
    %2185 = vmatprep.subr.mxu0 0.0
    %2186 = vmatpush1.msra.mxu0 0.0
    %2187 = vmatprep.subr.mxu0 0.0
    %2188 = vmatpush1.msra.mxu0 0.0
    %2189 = vmatprep.subr.mxu0 0.0
    %2190 = vmatpush1.msra.mxu0 0.0
    %2191 = vmatprep.subr.mxu0 0.0
    %2192 = vmatpush1.msra.mxu0 0.0
    %2193 = vmatprep.subr.mxu0 0.0
    %2194 = vmatpush1.msra.mxu0 0.0
    %2195 = vmatprep.subr.mxu0 0.0
    %2196 = vmatpush1.msra.mxu0 0.0
    %2197 = vmatprep.subr.mxu0 0.0
    %2198 = vmatpush1.msra.mxu0 0.0
    %2199 = vmatprep.subr.mxu0 0.0
    %2200 = vmatpush1.msra.mxu0 0.0
    %2201 = vmatprep.subr.mxu0 0.0
    %2202 = vmatpush1.msra.mxu0 0.0
    %2203 = vmatprep.subr.mxu0 0.0
    %2204 = vmatpush1.msra.mxu0 0.0
    %2205 = vmatprep.subr.mxu0 0.0
    %2206 = vmatpush1.msra.mxu0 0.0
    %2207 = vmatprep.subr.mxu0 0.0
    %2208 = vmatpush1.msra.mxu0 0.0
    %2209 = vmatprep.subr.mxu0 0.0
    %2210 = vmatpush1.msra.mxu0 0.0
    %2211 = vmatprep.subr.mxu0 0.0
    %2212 = vmatpush1.msra.mxu0 0.0
    %2213 = vmatprep.subr.mxu0 0.0
    %2214 = vmatpush1.msra.mxu0 0.0
    %2215 = vmatprep.subr.mxu0 0.0
    %2216 = vmatpush1.msra.mxu0 0.0
    %2217 = vmatprep.mubr.f32.mxu0 0.0
    %v2218 = vand.u32 %v139, 4294901760
    %2219 = vmatmul.mubr.f32.gmra.mrb[0].mxu0 %v2218
    %v2220 = vpop.f32.mrb[0].mxu0
    %v2221 = vadd.f32 %v2126, %v2220
    %v2222 = vpop.f32.mrb[0].mxu0
    %v2223 = vadd.f32 %v2128, %v2222
    %2224 = vmatprep.mubr.f32.mxu0 0.0
    %v2225 = vand.u32 %v142, 4294901760
    %2226 = vmatmul.mubr.f32.gmra.mrb[0].mxu0 %v2225
    %v2227 = vpop.f32.mrb[0].mxu0
    %v2228 = vadd.f32 %v2133, %v2227
    %v2229 = vpop.f32.mrb[0].mxu0
    %v2230 = vadd.f32 %v2135, %v2229
    %2231 = vdwg.mxu0
    %v2232 = vand.u32 %v76, 4294901760
    %2233 = vmatprep.subr.mxu0 %v2232
    %v2234 = vand.u32 %v75, 4294901760
    %2235 = vmatpush1.msra.mxu0 %v2234
    %v2236 = vand.u32 %v84, 4294901760
    %2237 = vmatprep.subr.mxu0 %v2236
    %v2238 = vand.u32 %v83, 4294901760
    %2239 = vmatpush1.msra.mxu0 %v2238
    %v2240 = vand.u32 %v92, 4294901760
    %2241 = vmatprep.subr.mxu0 %v2240
    %v2242 = vand.u32 %v91, 4294901760
    %2243 = vmatpush1.msra.mxu0 %v2242
    %v2244 = vand.u32 %v100, 4294901760
    %2245 = vmatprep.subr.mxu0 %v2244
    %v2246 = vand.u32 %v99, 4294901760
    %2247 = vmatpush1.msra.mxu0 %v2246
    %v2248 = vand.u32 %v108, 4294901760
    %2249 = vmatprep.subr.mxu0 %v2248
    %v2250 = vand.u32 %v107, 4294901760
    %2251 = vmatpush1.msra.mxu0 %v2250
    %v2252 = vand.u32 %v116, 4294901760
    %2253 = vmatprep.subr.mxu0 %v2252
    %v2254 = vand.u32 %v115, 4294901760
    %2255 = vmatpush1.msra.mxu0 %v2254
    %v2256 = vand.u32 %v124, 4294901760
    %2257 = vmatprep.subr.mxu0 %v2256
    %v2258 = vand.u32 %v123, 4294901760
    %2259 = vmatpush1.msra.mxu0 %v2258
    %v2260 = vand.u32 %v132, 4294901760
    %2261 = vmatprep.subr.mxu0 %v2260
    %v2262 = vand.u32 %v131, 4294901760
    %2263 = vmatpush1.msra.mxu0 %v2262
    %2264 = vmatprep.subr.mxu0 0.0
    %2265 = vmatpush1.msra.mxu0 0.0
    %2266 = vmatprep.subr.mxu0 0.0
    %2267 = vmatpush1.msra.mxu0 0.0
    %2268 = vmatprep.subr.mxu0 0.0
    %2269 = vmatpush1.msra.mxu0 0.0
    %2270 = vmatprep.subr.mxu0 0.0
    %2271 = vmatpush1.msra.mxu0 0.0
    %2272 = vmatprep.subr.mxu0 0.0
    %2273 = vmatpush1.msra.mxu0 0.0
    %2274 = vmatprep.subr.mxu0 0.0
    %2275 = vmatpush1.msra.mxu0 0.0
    %2276 = vmatprep.subr.mxu0 0.0
    %2277 = vmatpush1.msra.mxu0 0.0
    %2278 = vmatprep.subr.mxu0 0.0
    %2279 = vmatpush1.msra.mxu0 0.0
    %2280 = vmatprep.subr.mxu0 0.0
    %2281 = vmatpush1.msra.mxu0 0.0
    %2282 = vmatprep.subr.mxu0 0.0
    %2283 = vmatpush1.msra.mxu0 0.0
    %2284 = vmatprep.subr.mxu0 0.0
    %2285 = vmatpush1.msra.mxu0 0.0
    %2286 = vmatprep.subr.mxu0 0.0
    %2287 = vmatpush1.msra.mxu0 0.0
    %2288 = vmatprep.subr.mxu0 0.0
    %2289 = vmatpush1.msra.mxu0 0.0
    %2290 = vmatprep.subr.mxu0 0.0
    %2291 = vmatpush1.msra.mxu0 0.0
    %2292 = vmatprep.subr.mxu0 0.0
    %2293 = vmatpush1.msra.mxu0 0.0
    %2294 = vmatprep.subr.mxu0 0.0
    %2295 = vmatpush1.msra.mxu0 0.0
    %2296 = vmatprep.subr.mxu0 0.0
    %2297 = vmatpush1.msra.mxu0 0.0
    %2298 = vmatprep.subr.mxu0 0.0
    %2299 = vmatpush1.msra.mxu0 0.0
    %2300 = vmatprep.subr.mxu0 0.0
    %2301 = vmatpush1.msra.mxu0 0.0
    %2302 = vmatprep.subr.mxu0 0.0
    %2303 = vmatpush1.msra.mxu0 0.0
    %2304 = vmatprep.subr.mxu0 0.0
    %2305 = vmatpush1.msra.mxu0 0.0
    %2306 = vmatprep.subr.mxu0 0.0
    %2307 = vmatpush1.msra.mxu0 0.0
    %2308 = vmatprep.subr.mxu0 0.0
    %2309 = vmatpush1.msra.mxu0 0.0
    %2310 = vmatprep.subr.mxu0 0.0
    %2311 = vmatpush1.msra.mxu0 0.0
    %2312 = vmatprep.mubr.f32.mxu0 0.0
    %v2313 = vand.u32 %v139, 4294901760
    %v2314 = vsub.f32 %v139, %v2313
    %v2315 = vand.u32 %v2314, 4294901760
    %v2316 = vsub.f32 %v2314, %v2315
    %v2317 = vand.u32 %v2316, 4294901760
    %2318 = vmatmul.mubr.f32.gmra.mrb[0].mxu0 %v2317
    %v2319 = vpop.f32.mrb[0].mxu0
    %v2320 = vadd.f32 0.0, %v2319
    %v2321 = vpop.f32.mrb[0].mxu0
    %v2322 = vadd.f32 0.0, %v2321
    %2323 = vmatprep.mubr.f32.mxu0 0.0
    %v2324 = vand.u32 %v142, 4294901760
    %v2325 = vsub.f32 %v142, %v2324
    %v2326 = vand.u32 %v2325, 4294901760
    %v2327 = vsub.f32 %v2325, %v2326
    %v2328 = vand.u32 %v2327, 4294901760
    %2329 = vmatmul.mubr.f32.gmra.mrb[0].mxu0 %v2328
    %v2330 = vpop.f32.mrb[0].mxu0
    %v2331 = vadd.f32 0.0, %v2330
    %v2332 = vpop.f32.mrb[0].mxu0
    %v2333 = vadd.f32 0.0, %v2332
    %2334 = vdwg.mxu0
    %v2335 = vand.u32 %v76, 4294901760
    %v2336 = vsub.f32 %v76, %v2335
    %v2337 = vand.u32 %v2336, 4294901760
    %v2338 = vsub.f32 %v2336, %v2337
    %v2339 = vand.u32 %v2338, 4294901760
    %2340 = vmatprep.subr.mxu0 %v2339
    %v2341 = vand.u32 %v75, 4294901760
    %v2342 = vsub.f32 %v75, %v2341
    %v2343 = vand.u32 %v2342, 4294901760
    %v2344 = vsub.f32 %v2342, %v2343
    %v2345 = vand.u32 %v2344, 4294901760
    %2346 = vmatpush1.msra.mxu0 %v2345
    %v2347 = vand.u32 %v84, 4294901760
    %v2348 = vsub.f32 %v84, %v2347
    %v2349 = vand.u32 %v2348, 4294901760
    %v2350 = vsub.f32 %v2348, %v2349
    %v2351 = vand.u32 %v2350, 4294901760
    %2352 = vmatprep.subr.mxu0 %v2351
    %v2353 = vand.u32 %v83, 4294901760
    %v2354 = vsub.f32 %v83, %v2353
    %v2355 = vand.u32 %v2354, 4294901760
    %v2356 = vsub.f32 %v2354, %v2355
    %v2357 = vand.u32 %v2356, 4294901760
    %2358 = vmatpush1.msra.mxu0 %v2357
    %v2359 = vand.u32 %v92, 4294901760
    %v2360 = vsub.f32 %v92, %v2359
    %v2361 = vand.u32 %v2360, 4294901760
    %v2362 = vsub.f32 %v2360, %v2361
    %v2363 = vand.u32 %v2362, 4294901760
    %2364 = vmatprep.subr.mxu0 %v2363
    %v2365 = vand.u32 %v91, 4294901760
    %v2366 = vsub.f32 %v91, %v2365
    %v2367 = vand.u32 %v2366, 4294901760
    %v2368 = vsub.f32 %v2366, %v2367
    %v2369 = vand.u32 %v2368, 4294901760
    %2370 = vmatpush1.msra.mxu0 %v2369
    %v2371 = vand.u32 %v100, 4294901760
    %v2372 = vsub.f32 %v100, %v2371
    %v2373 = vand.u32 %v2372, 4294901760
    %v2374 = vsub.f32 %v2372, %v2373
    %v2375 = vand.u32 %v2374, 4294901760
    %2376 = vmatprep.subr.mxu0 %v2375
    %v2377 = vand.u32 %v99, 4294901760
    %v2378 = vsub.f32 %v99, %v2377
    %v2379 = vand.u32 %v2378, 4294901760
    %v2380 = vsub.f32 %v2378, %v2379
    %v2381 = vand.u32 %v2380, 4294901760
    %2382 = vmatpush1.msra.mxu0 %v2381
    %v2383 = vand.u32 %v108, 4294901760
    %v2384 = vsub.f32 %v108, %v2383
    %v2385 = vand.u32 %v2384, 4294901760
    %v2386 = vsub.f32 %v2384, %v2385
    %v2387 = vand.u32 %v2386, 4294901760
    %2388 = vmatprep.subr.mxu0 %v2387
    %v2389 = vand.u32 %v107, 4294901760
    %v2390 = vsub.f32 %v107, %v2389
    %v2391 = vand.u32 %v2390, 4294901760
    %v2392 = vsub.f32 %v2390, %v2391
    %v2393 = vand.u32 %v2392, 4294901760
    %2394 = vmatpush1.msra.mxu0 %v2393
    %v2395 = vand.u32 %v116, 4294901760
    %v2396 = vsub.f32 %v116, %v2395
    %v2397 = vand.u32 %v2396, 4294901760
    %v2398 = vsub.f32 %v2396, %v2397
    %v2399 = vand.u32 %v2398, 4294901760
    %2400 = vmatprep.subr.mxu0 %v2399
    %v2401 = vand.u32 %v115, 4294901760
    %v2402 = vsub.f32 %v115, %v2401
    %v2403 = vand.u32 %v2402, 4294901760
    %v2404 = vsub.f32 %v2402, %v2403
    %v2405 = vand.u32 %v2404, 4294901760
    %2406 = vmatpush1.msra.mxu0 %v2405
    %v2407 = vand.u32 %v124, 4294901760
    %v2408 = vsub.f32 %v124, %v2407
    %v2409 = vand.u32 %v2408, 4294901760
    %v2410 = vsub.f32 %v2408, %v2409
    %v2411 = vand.u32 %v2410, 4294901760
    %2412 = vmatprep.subr.mxu0 %v2411
    %v2413 = vand.u32 %v123, 4294901760
    %v2414 = vsub.f32 %v123, %v2413
    %v2415 = vand.u32 %v2414, 4294901760
    %v2416 = vsub.f32 %v2414, %v2415
    %v2417 = vand.u32 %v2416, 4294901760
    %2418 = vmatpush1.msra.mxu0 %v2417
    %v2419 = vand.u32 %v132, 4294901760
    %v2420 = vsub.f32 %v132, %v2419
    %v2421 = vand.u32 %v2420, 4294901760
    %v2422 = vsub.f32 %v2420, %v2421
    %v2423 = vand.u32 %v2422, 4294901760
    %2424 = vmatprep.subr.mxu0 %v2423
    %v2425 = vand.u32 %v131, 4294901760
    %v2426 = vsub.f32 %v131, %v2425
    %v2427 = vand.u32 %v2426, 4294901760
    %v2428 = vsub.f32 %v2426, %v2427
    %v2429 = vand.u32 %v2428, 4294901760
    %2430 = vmatpush1.msra.mxu0 %v2429
    %2431 = vmatprep.subr.mxu0 0.0
    %2432 = vmatpush1.msra.mxu0 0.0
    %2433 = vmatprep.subr.mxu0 0.0
    %2434 = vmatpush1.msra.mxu0 0.0
    %2435 = vmatprep.subr.mxu0 0.0
    %2436 = vmatpush1.msra.mxu0 0.0
    %2437 = vmatprep.subr.mxu0 0.0
    %2438 = vmatpush1.msra.mxu0 0.0
    %2439 = vmatprep.subr.mxu0 0.0
    %2440 = vmatpush1.msra.mxu0 0.0
    %2441 = vmatprep.subr.mxu0 0.0
    %2442 = vmatpush1.msra.mxu0 0.0
    %2443 = vmatprep.subr.mxu0 0.0
    %2444 = vmatpush1.msra.mxu0 0.0
    %2445 = vmatprep.subr.mxu0 0.0
    %2446 = vmatpush1.msra.mxu0 0.0
    %2447 = vmatprep.subr.mxu0 0.0
    %2448 = vmatpush1.msra.mxu0 0.0
    %2449 = vmatprep.subr.mxu0 0.0
    %2450 = vmatpush1.msra.mxu0 0.0
    %2451 = vmatprep.subr.mxu0 0.0
    %2452 = vmatpush1.msra.mxu0 0.0
    %2453 = vmatprep.subr.mxu0 0.0
    %2454 = vmatpush1.msra.mxu0 0.0
    %2455 = vmatprep.subr.mxu0 0.0
    %2456 = vmatpush1.msra.mxu0 0.0
    %2457 = vmatprep.subr.mxu0 0.0
    %2458 = vmatpush1.msra.mxu0 0.0
    %2459 = vmatprep.subr.mxu0 0.0
    %2460 = vmatpush1.msra.mxu0 0.0
    %2461 = vmatprep.subr.mxu0 0.0
    %2462 = vmatpush1.msra.mxu0 0.0
    %2463 = vmatprep.subr.mxu0 0.0
    %2464 = vmatpush1.msra.mxu0 0.0
    %2465 = vmatprep.subr.mxu0 0.0
    %2466 = vmatpush1.msra.mxu0 0.0
    %2467 = vmatprep.subr.mxu0 0.0
    %2468 = vmatpush1.msra.mxu0 0.0
    %2469 = vmatprep.subr.mxu0 0.0
    %2470 = vmatpush1.msra.mxu0 0.0
    %2471 = vmatprep.subr.mxu0 0.0
    %2472 = vmatpush1.msra.mxu0 0.0
    %2473 = vmatprep.subr.mxu0 0.0
    %2474 = vmatpush1.msra.mxu0 0.0
    %2475 = vmatprep.subr.mxu0 0.0
    %2476 = vmatpush1.msra.mxu0 0.0
    %2477 = vmatprep.subr.mxu0 0.0
    %2478 = vmatpush1.msra.mxu0 0.0
    %2479 = vmatprep.mubr.f32.mxu0 0.0
    %v2480 = vand.u32 %v139, 4294901760
    %2481 = vmatmul.mubr.f32.gmra.mrb[0].mxu0 %v2480
    %v2482 = vpop.f32.mrb[0].mxu0
    %v2483 = vadd.f32 %v2320, %v2482
    %v2484 = vpop.f32.mrb[0].mxu0
    %v2485 = vadd.f32 %v2322, %v2484
    %2486 = vmatprep.mubr.f32.mxu0 0.0
    %v2487 = vand.u32 %v142, 4294901760
    %2488 = vmatmul.mubr.f32.gmra.mrb[0].mxu0 %v2487
    %v2489 = vpop.f32.mrb[0].mxu0
    %v2490 = vadd.f32 %v2331, %v2489
    %v2491 = vpop.f32.mrb[0].mxu0
    %v2492 = vadd.f32 %v2333, %v2491
    %2493 = vdwg.mxu0
    %v2494 = vand.u32 %v76, 4294901760
    %v2495 = vsub.f32 %v76, %v2494
    %2496 = vmatprep.subr.mxu0 %v2495
    %v2497 = vand.u32 %v75, 4294901760
    %v2498 = vsub.f32 %v75, %v2497
    %2499 = vmatpush1.msra.mxu0 %v2498
    %v2500 = vand.u32 %v84, 4294901760
    %v2501 = vsub.f32 %v84, %v2500
    %2502 = vmatprep.subr.mxu0 %v2501
    %v2503 = vand.u32 %v83, 4294901760
    %v2504 = vsub.f32 %v83, %v2503
    %2505 = vmatpush1.msra.mxu0 %v2504
    %v2506 = vand.u32 %v92, 4294901760
    %v2507 = vsub.f32 %v92, %v2506
    %2508 = vmatprep.subr.mxu0 %v2507
    %v2509 = vand.u32 %v91, 4294901760
    %v2510 = vsub.f32 %v91, %v2509
    %2511 = vmatpush1.msra.mxu0 %v2510
    %v2512 = vand.u32 %v100, 4294901760
    %v2513 = vsub.f32 %v100, %v2512
    %2514 = vmatprep.subr.mxu0 %v2513
    %v2515 = vand.u32 %v99, 4294901760
    %v2516 = vsub.f32 %v99, %v2515
    %2517 = vmatpush1.msra.mxu0 %v2516
    %v2518 = vand.u32 %v108, 4294901760
    %v2519 = vsub.f32 %v108, %v2518
    %2520 = vmatprep.subr.mxu0 %v2519
    %v2521 = vand.u32 %v107, 4294901760
    %v2522 = vsub.f32 %v107, %v2521
    %2523 = vmatpush1.msra.mxu0 %v2522
    %v2524 = vand.u32 %v116, 4294901760
    %v2525 = vsub.f32 %v116, %v2524
    %2526 = vmatprep.subr.mxu0 %v2525
    %v2527 = vand.u32 %v115, 4294901760
    %v2528 = vsub.f32 %v115, %v2527
    %2529 = vmatpush1.msra.mxu0 %v2528
    %v2530 = vand.u32 %v124, 4294901760
    %v2531 = vsub.f32 %v124, %v2530
    %2532 = vmatprep.subr.mxu0 %v2531
    %v2533 = vand.u32 %v123, 4294901760
    %v2534 = vsub.f32 %v123, %v2533
    %2535 = vmatpush1.msra.mxu0 %v2534
    %v2536 = vand.u32 %v132, 4294901760
    %v2537 = vsub.f32 %v132, %v2536
    %2538 = vmatprep.subr.mxu0 %v2537
    %v2539 = vand.u32 %v131, 4294901760
    %v2540 = vsub.f32 %v131, %v2539
    %2541 = vmatpush1.msra.mxu0 %v2540
    %2542 = vmatprep.subr.mxu0 0.0
    %2543 = vmatpush1.msra.mxu0 0.0
    %2544 = vmatprep.subr.mxu0 0.0
    %2545 = vmatpush1.msra.mxu0 0.0
    %2546 = vmatprep.subr.mxu0 0.0
    %2547 = vmatpush1.msra.mxu0 0.0
    %2548 = vmatprep.subr.mxu0 0.0
    %2549 = vmatpush1.msra.mxu0 0.0
    %2550 = vmatprep.subr.mxu0 0.0
    %2551 = vmatpush1.msra.mxu0 0.0
    %2552 = vmatprep.subr.mxu0 0.0
    %2553 = vmatpush1.msra.mxu0 0.0
    %2554 = vmatprep.subr.mxu0 0.0
    %2555 = vmatpush1.msra.mxu0 0.0
    %2556 = vmatprep.subr.mxu0 0.0
    %2557 = vmatpush1.msra.mxu0 0.0
    %2558 = vmatprep.subr.mxu0 0.0
    %2559 = vmatpush1.msra.mxu0 0.0
    %2560 = vmatprep.subr.mxu0 0.0
    %2561 = vmatpush1.msra.mxu0 0.0
    %2562 = vmatprep.subr.mxu0 0.0
    %2563 = vmatpush1.msra.mxu0 0.0
    %2564 = vmatprep.subr.mxu0 0.0
    %2565 = vmatpush1.msra.mxu0 0.0
    %2566 = vmatprep.subr.mxu0 0.0
    %2567 = vmatpush1.msra.mxu0 0.0
    %2568 = vmatprep.subr.mxu0 0.0
    %2569 = vmatpush1.msra.mxu0 0.0
    %2570 = vmatprep.subr.mxu0 0.0
    %2571 = vmatpush1.msra.mxu0 0.0
    %2572 = vmatprep.subr.mxu0 0.0
    %2573 = vmatpush1.msra.mxu0 0.0
    %2574 = vmatprep.subr.mxu0 0.0
    %2575 = vmatpush1.msra.mxu0 0.0
    %2576 = vmatprep.subr.mxu0 0.0
    %2577 = vmatpush1.msra.mxu0 0.0
    %2578 = vmatprep.subr.mxu0 0.0
    %2579 = vmatpush1.msra.mxu0 0.0
    %2580 = vmatprep.subr.mxu0 0.0
    %2581 = vmatpush1.msra.mxu0 0.0
    %2582 = vmatprep.subr.mxu0 0.0
    %2583 = vmatpush1.msra.mxu0 0.0
    %2584 = vmatprep.subr.mxu0 0.0
    %2585 = vmatpush1.msra.mxu0 0.0
    %2586 = vmatprep.subr.mxu0 0.0
    %2587 = vmatpush1.msra.mxu0 0.0
    %2588 = vmatprep.subr.mxu0 0.0
    %2589 = vmatpush1.msra.mxu0 0.0
    %2590 = vmatprep.mubr.f32.mxu0 0.0
    %v2591 = vand.u32 %v139, 4294901760
    %v2592 = vsub.f32 %v139, %v2591
    %2593 = vmatmul.mubr.f32.gmra.mrb[0].mxu0 %v2592
    %v2594 = vpop.f32.mrb[0].mxu0
    %v2595 = vadd.f32 %v2483, %v2594
    %v2596 = vpop.f32.mrb[0].mxu0
    %v2597 = vadd.f32 %v2485, %v2596
    %2598 = vmatprep.mubr.f32.mxu0 0.0
    %v2599 = vand.u32 %v142, 4294901760
    %v2600 = vsub.f32 %v142, %v2599
    %2601 = vmatmul.mubr.f32.gmra.mrb[0].mxu0 %v2600
    %v2602 = vpop.f32.mrb[0].mxu0
    %v2603 = vadd.f32 %v2490, %v2602
    %v2604 = vpop.f32.mrb[0].mxu0
    %v2605 = vadd.f32 %v2492, %v2604
    %2606 = vdwg.mxu0
    %v2607 = vand.u32 %v76, 4294901760
    %2608 = vmatprep.subr.mxu0 %v2607
    %v2609 = vand.u32 %v75, 4294901760
    %2610 = vmatpush1.msra.mxu0 %v2609
    %v2611 = vand.u32 %v84, 4294901760
    %2612 = vmatprep.subr.mxu0 %v2611
    %v2613 = vand.u32 %v83, 4294901760
    %2614 = vmatpush1.msra.mxu0 %v2613
    %v2615 = vand.u32 %v92, 4294901760
    %2616 = vmatprep.subr.mxu0 %v2615
    %v2617 = vand.u32 %v91, 4294901760
    %2618 = vmatpush1.msra.mxu0 %v2617
    %v2619 = vand.u32 %v100, 4294901760
    %2620 = vmatprep.subr.mxu0 %v2619
    %v2621 = vand.u32 %v99, 4294901760
    %2622 = vmatpush1.msra.mxu0 %v2621
    %v2623 = vand.u32 %v108, 4294901760
    %2624 = vmatprep.subr.mxu0 %v2623
    %v2625 = vand.u32 %v107, 4294901760
    %2626 = vmatpush1.msra.mxu0 %v2625
    %v2627 = vand.u32 %v116, 4294901760
    %2628 = vmatprep.subr.mxu0 %v2627
    %v2629 = vand.u32 %v115, 4294901760
    %2630 = vmatpush1.msra.mxu0 %v2629
    %v2631 = vand.u32 %v124, 4294901760
    %2632 = vmatprep.subr.mxu0 %v2631
    %v2633 = vand.u32 %v123, 4294901760
    %2634 = vmatpush1.msra.mxu0 %v2633
    %v2635 = vand.u32 %v132, 4294901760
    %2636 = vmatprep.subr.mxu0 %v2635
    %v2637 = vand.u32 %v131, 4294901760
    %2638 = vmatpush1.msra.mxu0 %v2637
    %2639 = vmatprep.subr.mxu0 0.0
    %2640 = vmatpush1.msra.mxu0 0.0
    %2641 = vmatprep.subr.mxu0 0.0
    %2642 = vmatpush1.msra.mxu0 0.0
    %2643 = vmatprep.subr.mxu0 0.0
    %2644 = vmatpush1.msra.mxu0 0.0
    %2645 = vmatprep.subr.mxu0 0.0
    %2646 = vmatpush1.msra.mxu0 0.0
    %2647 = vmatprep.subr.mxu0 0.0
    %2648 = vmatpush1.msra.mxu0 0.0
    %2649 = vmatprep.subr.mxu0 0.0
    %2650 = vmatpush1.msra.mxu0 0.0
    %2651 = vmatprep.subr.mxu0 0.0
    %2652 = vmatpush1.msra.mxu0 0.0
    %2653 = vmatprep.subr.mxu0 0.0
    %2654 = vmatpush1.msra.mxu0 0.0
    %2655 = vmatprep.subr.mxu0 0.0
    %2656 = vmatpush1.msra.mxu0 0.0
    %2657 = vmatprep.subr.mxu0 0.0
    %2658 = vmatpush1.msra.mxu0 0.0
    %2659 = vmatprep.subr.mxu0 0.0
    %2660 = vmatpush1.msra.mxu0 0.0
    %2661 = vmatprep.subr.mxu0 0.0
    %2662 = vmatpush1.msra.mxu0 0.0
    %2663 = vmatprep.subr.mxu0 0.0
    %2664 = vmatpush1.msra.mxu0 0.0
    %2665 = vmatprep.subr.mxu0 0.0
    %2666 = vmatpush1.msra.mxu0 0.0
    %2667 = vmatprep.subr.mxu0 0.0
    %2668 = vmatpush1.msra.mxu0 0.0
    %2669 = vmatprep.subr.mxu0 0.0
    %2670 = vmatpush1.msra.mxu0 0.0
    %2671 = vmatprep.subr.mxu0 0.0
    %2672 = vmatpush1.msra.mxu0 0.0
    %2673 = vmatprep.subr.mxu0 0.0
    %2674 = vmatpush1.msra.mxu0 0.0
    %2675 = vmatprep.subr.mxu0 0.0
    %2676 = vmatpush1.msra.mxu0 0.0
    %2677 = vmatprep.subr.mxu0 0.0
    %2678 = vmatpush1.msra.mxu0 0.0
    %2679 = vmatprep.subr.mxu0 0.0
    %2680 = vmatpush1.msra.mxu0 0.0
    %2681 = vmatprep.subr.mxu0 0.0
    %2682 = vmatpush1.msra.mxu0 0.0
    %2683 = vmatprep.subr.mxu0 0.0
    %2684 = vmatpush1.msra.mxu0 0.0
    %2685 = vmatprep.subr.mxu0 0.0
    %2686 = vmatpush1.msra.mxu0 0.0
    %2687 = vmatprep.mubr.f32.mxu0 0.0
    %v2688 = vand.u32 %v139, 4294901760
    %v2689 = vsub.f32 %v139, %v2688
    %v2690 = vand.u32 %v2689, 4294901760
    %2691 = vmatmul.mubr.f32.gmra.mrb[0].mxu0 %v2690
    %v2692 = vpop.f32.mrb[0].mxu0
    %v2693 = vadd.f32 %v2595, %v2692
    %v2694 = vpop.f32.mrb[0].mxu0
    %v2695 = vadd.f32 %v2597, %v2694
    %2696 = vmatprep.mubr.f32.mxu0 0.0
    %v2697 = vand.u32 %v142, 4294901760
    %v2698 = vsub.f32 %v142, %v2697
    %v2699 = vand.u32 %v2698, 4294901760
    %2700 = vmatmul.mubr.f32.gmra.mrb[0].mxu0 %v2699
    %v2701 = vpop.f32.mrb[0].mxu0
    %v2702 = vadd.f32 %v2603, %v2701
    %v2703 = vpop.f32.mrb[0].mxu0
    %v2704 = vadd.f32 %v2605, %v2703
    %2705 = vdwg.mxu0
    %v2706 = vand.u32 %v76, 4294901760
    %v2707 = vsub.f32 %v76, %v2706
    %v2708 = vand.u32 %v2707, 4294901760
    %2709 = vmatprep.subr.mxu0 %v2708
    %v2710 = vand.u32 %v75, 4294901760
    %v2711 = vsub.f32 %v75, %v2710
    %v2712 = vand.u32 %v2711, 4294901760
    %2713 = vmatpush1.msra.mxu0 %v2712
    %v2714 = vand.u32 %v84, 4294901760
    %v2715 = vsub.f32 %v84, %v2714
    %v2716 = vand.u32 %v2715, 4294901760
    %2717 = vmatprep.subr.mxu0 %v2716
    %v2718 = vand.u32 %v83, 4294901760
    %v2719 = vsub.f32 %v83, %v2718
    %v2720 = vand.u32 %v2719, 4294901760
    %2721 = vmatpush1.msra.mxu0 %v2720
    %v2722 = vand.u32 %v92, 4294901760
    %v2723 = vsub.f32 %v92, %v2722
    %v2724 = vand.u32 %v2723, 4294901760
    %2725 = vmatprep.subr.mxu0 %v2724
    %v2726 = vand.u32 %v91, 4294901760
    %v2727 = vsub.f32 %v91, %v2726
    %v2728 = vand.u32 %v2727, 4294901760
    %2729 = vmatpush1.msra.mxu0 %v2728
    %v2730 = vand.u32 %v100, 4294901760
    %v2731 = vsub.f32 %v100, %v2730
    %v2732 = vand.u32 %v2731, 4294901760
    %2733 = vmatprep.subr.mxu0 %v2732
    %v2734 = vand.u32 %v99, 4294901760
    %v2735 = vsub.f32 %v99, %v2734
    %v2736 = vand.u32 %v2735, 4294901760
    %2737 = vmatpush1.msra.mxu0 %v2736
    %v2738 = vand.u32 %v108, 4294901760
    %v2739 = vsub.f32 %v108, %v2738
    %v2740 = vand.u32 %v2739, 4294901760
    %2741 = vmatprep.subr.mxu0 %v2740
    %v2742 = vand.u32 %v107, 4294901760
    %v2743 = vsub.f32 %v107, %v2742
    %v2744 = vand.u32 %v2743, 4294901760
    %2745 = vmatpush1.msra.mxu0 %v2744
    %v2746 = vand.u32 %v116, 4294901760
    %v2747 = vsub.f32 %v116, %v2746
    %v2748 = vand.u32 %v2747, 4294901760
    %2749 = vmatprep.subr.mxu0 %v2748
    %v2750 = vand.u32 %v115, 4294901760
    %v2751 = vsub.f32 %v115, %v2750
    %v2752 = vand.u32 %v2751, 4294901760
    %2753 = vmatpush1.msra.mxu0 %v2752
    %v2754 = vand.u32 %v124, 4294901760
    %v2755 = vsub.f32 %v124, %v2754
    %v2756 = vand.u32 %v2755, 4294901760
    %2757 = vmatprep.subr.mxu0 %v2756
    %v2758 = vand.u32 %v123, 4294901760
    %v2759 = vsub.f32 %v123, %v2758
    %v2760 = vand.u32 %v2759, 4294901760
    %2761 = vmatpush1.msra.mxu0 %v2760
    %v2762 = vand.u32 %v132, 4294901760
    %v2763 = vsub.f32 %v132, %v2762
    %v2764 = vand.u32 %v2763, 4294901760
    %2765 = vmatprep.subr.mxu0 %v2764
    %v2766 = vand.u32 %v131, 4294901760
    %v2767 = vsub.f32 %v131, %v2766
    %v2768 = vand.u32 %v2767, 4294901760
    %2769 = vmatpush1.msra.mxu0 %v2768
    %2770 = vmatprep.subr.mxu0 0.0
    %2771 = vmatpush1.msra.mxu0 0.0
    %2772 = vmatprep.subr.mxu0 0.0
    %2773 = vmatpush1.msra.mxu0 0.0
    %2774 = vmatprep.subr.mxu0 0.0
    %2775 = vmatpush1.msra.mxu0 0.0
    %2776 = vmatprep.subr.mxu0 0.0
    %2777 = vmatpush1.msra.mxu0 0.0
    %2778 = vmatprep.subr.mxu0 0.0
    %2779 = vmatpush1.msra.mxu0 0.0
    %2780 = vmatprep.subr.mxu0 0.0
    %2781 = vmatpush1.msra.mxu0 0.0
    %2782 = vmatprep.subr.mxu0 0.0
    %2783 = vmatpush1.msra.mxu0 0.0
    %2784 = vmatprep.subr.mxu0 0.0
    %2785 = vmatpush1.msra.mxu0 0.0
    %2786 = vmatprep.subr.mxu0 0.0
    %2787 = vmatpush1.msra.mxu0 0.0
    %2788 = vmatprep.subr.mxu0 0.0
    %2789 = vmatpush1.msra.mxu0 0.0
    %2790 = vmatprep.subr.mxu0 0.0
    %2791 = vmatpush1.msra.mxu0 0.0
    %2792 = vmatprep.subr.mxu0 0.0
    %2793 = vmatpush1.msra.mxu0 0.0
    %2794 = vmatprep.subr.mxu0 0.0
    %2795 = vmatpush1.msra.mxu0 0.0
    %2796 = vmatprep.subr.mxu0 0.0
    %2797 = vmatpush1.msra.mxu0 0.0
    %2798 = vmatprep.subr.mxu0 0.0
    %2799 = vmatpush1.msra.mxu0 0.0
    %2800 = vmatprep.subr.mxu0 0.0
    %2801 = vmatpush1.msra.mxu0 0.0
    %2802 = vmatprep.subr.mxu0 0.0
    %2803 = vmatpush1.msra.mxu0 0.0
    %2804 = vmatprep.subr.mxu0 0.0
    %2805 = vmatpush1.msra.mxu0 0.0
    %2806 = vmatprep.subr.mxu0 0.0
    %2807 = vmatpush1.msra.mxu0 0.0
    %2808 = vmatprep.subr.mxu0 0.0
    %2809 = vmatpush1.msra.mxu0 0.0
    %2810 = vmatprep.subr.mxu0 0.0
    %2811 = vmatpush1.msra.mxu0 0.0
    %2812 = vmatprep.subr.mxu0 0.0
    %2813 = vmatpush1.msra.mxu0 0.0
    %2814 = vmatprep.subr.mxu0 0.0
    %2815 = vmatpush1.msra.mxu0 0.0
    %2816 = vmatprep.subr.mxu0 0.0
    %2817 = vmatpush1.msra.mxu0 0.0
    %2818 = vmatprep.mubr.f32.mxu0 0.0
    %v2819 = vand.u32 %v139, 4294901760
    %2820 = vmatmul.mubr.f32.gmra.mrb[0].mxu0 %v2819
    %v2821 = vpop.f32.mrb[0].mxu0
    %v2822 = vadd.f32 %v2693, %v2821
    %v2823 = vpop.f32.mrb[0].mxu0
    %v2824 = vadd.f32 %v2695, %v2823
    %2825 = vmatprep.mubr.f32.mxu0 0.0
    %v2826 = vand.u32 %v142, 4294901760
    %2827 = vmatmul.mubr.f32.gmra.mrb[0].mxu0 %v2826
    %v2828 = vpop.f32.mrb[0].mxu0
    %v2829 = vadd.f32 %v2702, %v2828
    %v2830 = vpop.f32.mrb[0].mxu0
    %v2831 = vadd.f32 %v2704, %v2830
    %2832 = vdwg.mxu0
    %v2833 = vand.u32 %v76, 4294901760
    %2834 = vmatprep.subr.mxu0 %v2833
    %v2835 = vand.u32 %v75, 4294901760
    %2836 = vmatpush1.msra.mxu0 %v2835
    %v2837 = vand.u32 %v84, 4294901760
    %2838 = vmatprep.subr.mxu0 %v2837
    %v2839 = vand.u32 %v83, 4294901760
    %2840 = vmatpush1.msra.mxu0 %v2839
    %v2841 = vand.u32 %v92, 4294901760
    %2842 = vmatprep.subr.mxu0 %v2841
    %v2843 = vand.u32 %v91, 4294901760
    %2844 = vmatpush1.msra.mxu0 %v2843
    %v2845 = vand.u32 %v100, 4294901760
    %2846 = vmatprep.subr.mxu0 %v2845
    %v2847 = vand.u32 %v99, 4294901760
    %2848 = vmatpush1.msra.mxu0 %v2847
    %v2849 = vand.u32 %v108, 4294901760
    %2850 = vmatprep.subr.mxu0 %v2849
    %v2851 = vand.u32 %v107, 4294901760
    %2852 = vmatpush1.msra.mxu0 %v2851
    %v2853 = vand.u32 %v116, 4294901760
    %2854 = vmatprep.subr.mxu0 %v2853
    %v2855 = vand.u32 %v115, 4294901760
    %2856 = vmatpush1.msra.mxu0 %v2855
    %v2857 = vand.u32 %v124, 4294901760
    %2858 = vmatprep.subr.mxu0 %v2857
    %v2859 = vand.u32 %v123, 4294901760
    %2860 = vmatpush1.msra.mxu0 %v2859
    %v2861 = vand.u32 %v132, 4294901760
    %2862 = vmatprep.subr.mxu0 %v2861
    %v2863 = vand.u32 %v131, 4294901760
    %2864 = vmatpush1.msra.mxu0 %v2863
    %2865 = vmatprep.subr.mxu0 0.0
    %2866 = vmatpush1.msra.mxu0 0.0
    %2867 = vmatprep.subr.mxu0 0.0
    %2868 = vmatpush1.msra.mxu0 0.0
    %2869 = vmatprep.subr.mxu0 0.0
    %2870 = vmatpush1.msra.mxu0 0.0
    %2871 = vmatprep.subr.mxu0 0.0
    %2872 = vmatpush1.msra.mxu0 0.0
    %2873 = vmatprep.subr.mxu0 0.0
    %2874 = vmatpush1.msra.mxu0 0.0
    %2875 = vmatprep.subr.mxu0 0.0
    %2876 = vmatpush1.msra.mxu0 0.0
    %2877 = vmatprep.subr.mxu0 0.0
    %2878 = vmatpush1.msra.mxu0 0.0
    %2879 = vmatprep.subr.mxu0 0.0
    %2880 = vmatpush1.msra.mxu0 0.0
    %2881 = vmatprep.subr.mxu0 0.0
    %2882 = vmatpush1.msra.mxu0 0.0
    %2883 = vmatprep.subr.mxu0 0.0
    %2884 = vmatpush1.msra.mxu0 0.0
    %2885 = vmatprep.subr.mxu0 0.0
    %2886 = vmatpush1.msra.mxu0 0.0
    %2887 = vmatprep.subr.mxu0 0.0
    %2888 = vmatpush1.msra.mxu0 0.0
    %2889 = vmatprep.subr.mxu0 0.0
    %2890 = vmatpush1.msra.mxu0 0.0
    %2891 = vmatprep.subr.mxu0 0.0
    %2892 = vmatpush1.msra.mxu0 0.0
    %2893 = vmatprep.subr.mxu0 0.0
    %2894 = vmatpush1.msra.mxu0 0.0
    %2895 = vmatprep.subr.mxu0 0.0
    %2896 = vmatpush1.msra.mxu0 0.0
    %2897 = vmatprep.subr.mxu0 0.0
    %2898 = vmatpush1.msra.mxu0 0.0
    %2899 = vmatprep.subr.mxu0 0.0
    %2900 = vmatpush1.msra.mxu0 0.0
    %2901 = vmatprep.subr.mxu0 0.0
    %2902 = vmatpush1.msra.mxu0 0.0
    %2903 = vmatprep.subr.mxu0 0.0
    %2904 = vmatpush1.msra.mxu0 0.0
    %2905 = vmatprep.subr.mxu0 0.0
    %2906 = vmatpush1.msra.mxu0 0.0
    %2907 = vmatprep.subr.mxu0 0.0
    %2908 = vmatpush1.msra.mxu0 0.0
    %2909 = vmatprep.subr.mxu0 0.0
    %2910 = vmatpush1.msra.mxu0 0.0
    %2911 = vmatprep.subr.mxu0 0.0
    %2912 = vmatpush1.msra.mxu0 0.0
    %2913 = vmatprep.mubr.f32.mxu0 0.0
    %v2914 = vand.u32 %v139, 4294901760
    %2915 = vmatmul.mubr.f32.gmra.mrb[0].mxu0 %v2914
    %v2916 = vpop.f32.mrb[0].mxu0
    %v2917 = vadd.f32 %v2822, %v2916
    %v2918 = vpop.f32.mrb[0].mxu0
    %v2919 = vadd.f32 %v2824, %v2918
    %2920 = vmatprep.mubr.f32.mxu0 0.0
    %v2921 = vand.u32 %v142, 4294901760
    %2922 = vmatmul.mubr.f32.gmra.mrb[0].mxu0 %v2921
    %v2923 = vpop.f32.mrb[0].mxu0
    %v2924 = vadd.f32 %v2829, %v2923
    %v2925 = vpop.f32.mrb[0].mxu0
    %v2926 = vadd.f32 %v2831, %v2925
    %2927 = vdwg.mxu0
    %v2929 = vlaneseq
    %v2930 = vshrl.u32 %v2929, 7
    %v2931 = vsub.s32 0, %v2930
    %v2932 = vrot.slane %v133, %v2931
    %v2933 = vlaneseq
    %v2934 = vshrl.u32 %v2933, 7
    %v2935 = vsub.s32 1, %v2934
    %v2936 = vrot.slane %v133, %v2935
    %v2937 = vlaneseq
    %v2938 = vshrl.u32 %v2937, 7
    %v2939 = vsub.s32 2, %v2938
    %v2940 = vrot.slane %v133, %v2939
    %v2941 = vlaneseq
    %v2942 = vshrl.u32 %v2941, 7
    %v2943 = vsub.s32 3, %v2942
    %v2944 = vrot.slane %v133, %v2943
    %v2945 = vlaneseq
    %v2946 = vshrl.u32 %v2945, 7
    %v2947 = vsub.s32 4, %v2946
    %v2948 = vrot.slane %v133, %v2947
    %v2949 = vlaneseq
    %v2950 = vshrl.u32 %v2949, 7
    %v2951 = vsub.s32 5, %v2950
    %v2952 = vrot.slane %v133, %v2951
    %v2953 = vlaneseq
    %v2954 = vshrl.u32 %v2953, 7
    %v2955 = vsub.s32 6, %v2954
    %v2956 = vrot.slane %v133, %v2955
    %v2957 = vlaneseq
    %v2958 = vshrl.u32 %v2957, 7
    %v2959 = vsub.s32 7, %v2958
    %v2960 = vrot.slane %v133, %v2959
    %v2969 = vmul.f32 %v829, %v2932
    %v2970 = vmul.f32 %v831, %v2936
    %v2971 = vmul.f32 %v1525, %v2940
    %v2972 = vmul.f32 %v1527, %v2944
    %v2973 = vmul.f32 %v2221, %v2948
    %v2974 = vmul.f32 %v2223, %v2952
    %v2975 = vmul.f32 %v2917, %v2956
    %v2976 = vmul.f32 %v2919, %v2960
    %v2977 = vmul.f32 %v836, %v2932
    %v2978 = vmul.f32 %v838, %v2936
    %v2979 = vmul.f32 %v1532, %v2940
    %v2980 = vmul.f32 %v1534, %v2944
    %v2981 = vmul.f32 %v2228, %v2948
    %v2982 = vmul.f32 %v2230, %v2952
    %v2983 = vmul.f32 %v2924, %v2956
    %v2984 = vmul.f32 %v2926, %v2960
    %v2986 = vlaneseq
    %v2987 = vshrl.u32 %v2986, 7
    %v2988 = vsub.s32 0, %v2987
    %v2989 = vrot.slane %v134, %v2988
    %v2990 = vlaneseq
    %v2991 = vshrl.u32 %v2990, 7
    %v2992 = vsub.s32 1, %v2991
    %v2993 = vrot.slane %v134, %v2992
    %v2994 = vlaneseq
    %v2995 = vshrl.u32 %v2994, 7
    %v2996 = vsub.s32 2, %v2995
    %v2997 = vrot.slane %v134, %v2996
    %v2998 = vlaneseq
    %v2999 = vshrl.u32 %v2998, 7
    %v3000 = vsub.s32 3, %v2999
    %v3001 = vrot.slane %v134, %v3000
    %v3002 = vlaneseq
    %v3003 = vshrl.u32 %v3002, 7
    %v3004 = vsub.s32 4, %v3003
    %v3005 = vrot.slane %v134, %v3004
    %v3006 = vlaneseq
    %v3007 = vshrl.u32 %v3006, 7
    %v3008 = vsub.s32 5, %v3007
    %v3009 = vrot.slane %v134, %v3008
    %v3010 = vlaneseq
    %v3011 = vshrl.u32 %v3010, 7
    %v3012 = vsub.s32 6, %v3011
    %v3013 = vrot.slane %v134, %v3012
    %v3014 = vlaneseq
    %v3015 = vshrl.u32 %v3014, 7
    %v3016 = vsub.s32 7, %v3015
    %v3017 = vrot.slane %v134, %v3016
    %v3026 = vadd.f32 %v2969, %v2989
    %v3027 = vadd.f32 %v2970, %v2993
    %v3028 = vadd.f32 %v2971, %v2997
    %v3029 = vadd.f32 %v2972, %v3001
    %v3030 = vadd.f32 %v2973, %v3005
    %v3031 = vadd.f32 %v2974, %v3009
    %v3032 = vadd.f32 %v2975, %v3013
    %v3033 = vadd.f32 %v2976, %v3017
    %v3034 = vadd.f32 %v2977, %v2989
    %v3035 = vadd.f32 %v2978, %v2993
    %v3036 = vadd.f32 %v2979, %v2997
    %v3037 = vadd.f32 %v2980, %v3001
    %v3038 = vadd.f32 %v2981, %v3005
    %v3039 = vadd.f32 %v2982, %v3009
    %v3040 = vadd.f32 %v2983, %v3013
    %v3041 = vadd.f32 %v2984, %v3017
    %v3042 = vand.u32 2147483647, %v3026
    %vm3043 = vcmp.le.f32.partialorder %v3042, 0.7853982
    %vm3044 = vcmp.lt.s32.totalorder %v3026, 0
    %v3045 = vand.u32 %v3026, 2139095040
    %v3046 = vshrl.u32 %v3045, 23
    %v3047 = vsub.s32 %v3046, 127
    %v3048 = vand.u32 2147483647, %v3026
    %v3049 = vand.u32 %v3048, 8388607
    %v3050 = vor.u32 %v3049, 8388608
    %v3051 = vsub.s32 0, %v3050
    %v3052 = vadd.s32 %v3047, 1
    %vm3053 = vcmp.gt.s32.totalorder %v3052, 0
    %v3054 = vsel %vm3053, %v3052, 0
    %v3055 = vshrl.u32 %v3054, 5
    %v3056 = vand.u32 %v3054, 31
    %v3057 = vsub.s32 32, %v3056
    %v3058 = vshrl.u32 683565275, %v3057
    %v3059 = vshll.u32 683565275, %v3056
    %v3060 = vshrl.u32 2475754826, %v3057
    %v3061 = vor.u32 %v3059, %v3060
    %v3062 = vshll.u32 2475754826, %v3056
    %v3063 = vshrl.u32 2131351028, %v3057
    %v3064 = vor.u32 %v3062, %v3063
    %v3065 = vshll.u32 2131351028, %v3056
    %v3066 = vshrl.u32 2102212464, %v3057
    %v3067 = vor.u32 %v3065, %v3066
    %v3068 = vshll.u32 2102212464, %v3056
    %v3069 = vshrl.u32 920167782, %v3057
    %v3070 = vor.u32 %v3068, %v3069
    %v3071 = vshll.u32 920167782, %v3056
    %v3072 = vshrl.u32 1326507024, %v3057
    %v3073 = vor.u32 %v3071, %v3072
    %vm3074 = vcmp.lt.s32.totalorder %v3055, 1
    %vm3075 = vcmp.lt.s32.totalorder %v3055, 2
    %vm3076 = vcmp.lt.s32.totalorder %v3055, 3
    %vm3077 = vcmp.lt.s32.totalorder %v3055, 4
    %v3078 = vsel %vm3074, %v3058, %v3061
    %v3079 = vsel %vm3077, %v3067, 2102212464
    %v3080 = vsel %vm3076, %v3064, %v3079
    %v3081 = vsel %vm3075, %v3078, %v3080
    %v3082 = vsel %vm3074, %v3061, %v3064
    %v3083 = vsel %vm3077, %v3070, 920167782
    %v3084 = vsel %vm3076, %v3067, %v3083
    %v3085 = vsel %vm3075, %v3082, %v3084
    %v3086 = vsel %vm3074, %v3064, %v3067
    %v3087 = vsel %vm3077, %v3073, 1326507024
    %v3088 = vsel %vm3076, %v3070, %v3087
    %v3089 = vsel %vm3075, %v3086, %v3088
    %v3090 = vshll.u32 %v3050, 8
    %v3091 = vmul.u32.u64.compose %v3090, %v3089
    %v3092 = vextract.low.u32 %v3091
    %v3093 = vextract.high.u32 %v3091
    %v3094 = vmul.u32.u64.compose %v3090, %v3085
    %v3095 = vextract.low.u32 %v3094
    %v3096 = vextract.high.u32 %v3094
    %v3097 = vmul.u32 %v3090, %v3081
    %v3098 = vadd.s32 %v3093, %v3095
    %vm3099 = vc.u32 %v3093, %v3095
    %v3100 = vadd.s32 %v3096, 1
    %v3101 = vsel %vm3099, %v3100, %v3096
    %v3102 = vadd.s32 %v3097, %v3101
    %v3103 = vadd.s32 %v3102, 536870912
    %v3104 = vshrl.u32 %v3103, 30
    %v3105 = vshll.u32 %v3104, 30
    %v3106 = vsub.s32 %v3102, %v3105
    %vm3107 = vcmp.lt.s32.totalorder %v3106, 0
    %v3108 = vsub.s32 0, %v3106
    %v3109 = vsel %vm3107, %v3108, %v3106
    %v3110 = vclz %v3109
    %v3111 = vsub.s32 %v3110, 2
    %vm3112 = vcmp.gt.s32.totalorder 0, %v3111
    %v3113 = vsel %vm3112, 0, %v3111
    %v3114 = vsub.s32 32, %v3113
    %v3115 = vshll.u32 %v3106, %v3113
    %v3116 = vshrl.u32 %v3098, %v3114
    %v3117 = vor.u32 %v3115, %v3116
    %v3118 = vsub.s32 4294967266, %v3113
    %v3119 = vadd.s32 %v3118, 127
    %v3120 = vshll.u32 %v3119, 23
    %v3121 = vor.u32 4788187, %v3120
    %v3122 = vand.u32 2147483647, %v3121
    %v3124 = vcvt.s32.f32 %v3117
    %v3125 = vmul.f32 %v3124, %v3122
    %v3126 = vxor.u32 %v3125, 2147483648
    %v3127 = vsel %vm3044, %v3126, %v3125
    %v3128 = vsub.s32 4, %v3104
    %v3129 = vsel %vm3044, %v3128, %v3104
    %v3130 = vsel %vm3043, %v3026, %v3127
    %v3131 = vsel %vm3043, 0, %v3129
    %v3132 = vcosq.f32.pop %v3130
    %v3133 = vsinq.f32.pop %v3130
    %vm3134 = vweird.f32 %v3026
    %v3135 = vadd.s32 %v3131, 3
    %v3136 = vand.u32 %v3135, 3
    %vm3137 = vcmp.lt.s32.totalorder %v3136, 2
    %vm3138 = vcmp.eq.s32.totalorder %v3136, 0
    %v3139 = vxor.u32 %v3133, 2147483648
    %v3140 = vsel %vm3138, %v3132, %v3139
    %vm3141 = vcmp.eq.s32.totalorder %v3136, 2
    %v3142 = vxor.u32 %v3132, 2147483648
    %v3143 = vsel %vm3141, %v3142, %v3133
    %v3144 = vsel %vm3137, %v3140, %v3143
    %v3145 = vsel %vm3134, nan, %v3144
    %v3146 = vand.u32 2147483647, %v3027
    %vm3147 = vcmp.le.f32.partialorder %v3146, 0.7853982
    %vm3148 = vcmp.lt.s32.totalorder %v3027, 0
    %v3149 = vand.u32 %v3027, 2139095040
    %v3150 = vshrl.u32 %v3149, 23
    %v3151 = vsub.s32 %v3150, 127
    %v3152 = vand.u32 2147483647, %v3027
    %v3153 = vand.u32 %v3152, 8388607
    %v3154 = vor.u32 %v3153, 8388608
    %v3155 = vsub.s32 0, %v3154
    %v3156 = vadd.s32 %v3151, 1
    %vm3157 = vcmp.gt.s32.totalorder %v3156, 0
    %v3158 = vsel %vm3157, %v3156, 0
    %v3159 = vshrl.u32 %v3158, 5
    %v3160 = vand.u32 %v3158, 31
    %v3161 = vsub.s32 32, %v3160
    %v3162 = vshrl.u32 683565275, %v3161
    %v3163 = vshll.u32 683565275, %v3160
    %v3164 = vshrl.u32 2475754826, %v3161
    %v3165 = vor.u32 %v3163, %v3164
    %v3166 = vshll.u32 2475754826, %v3160
    %v3167 = vshrl.u32 2131351028, %v3161
    %v3168 = vor.u32 %v3166, %v3167
    %v3169 = vshll.u32 2131351028, %v3160
    %v3170 = vshrl.u32 2102212464, %v3161
    %v3171 = vor.u32 %v3169, %v3170
    %v3172 = vshll.u32 2102212464, %v3160
    %v3173 = vshrl.u32 920167782, %v3161
    %v3174 = vor.u32 %v3172, %v3173
    %v3175 = vshll.u32 920167782, %v3160
    %v3176 = vshrl.u32 1326507024, %v3161
    %v3177 = vor.u32 %v3175, %v3176
    %vm3178 = vcmp.lt.s32.totalorder %v3159, 1
    %vm3179 = vcmp.lt.s32.totalorder %v3159, 2
    %vm3180 = vcmp.lt.s32.totalorder %v3159, 3
    %vm3181 = vcmp.lt.s32.totalorder %v3159, 4
    %v3182 = vsel %vm3178, %v3162, %v3165
    %v3183 = vsel %vm3181, %v3171, 2102212464
    %v3184 = vsel %vm3180, %v3168, %v3183
    %v3185 = vsel %vm3179, %v3182, %v3184
    %v3186 = vsel %vm3178, %v3165, %v3168
    %v3187 = vsel %vm3181, %v3174, 920167782
    %v3188 = vsel %vm3180, %v3171, %v3187
    %v3189 = vsel %vm3179, %v3186, %v3188
    %v3190 = vsel %vm3178, %v3168, %v3171
    %v3191 = vsel %vm3181, %v3177, 1326507024
    %v3192 = vsel %vm3180, %v3174, %v3191
    %v3193 = vsel %vm3179, %v3190, %v3192
    %v3194 = vshll.u32 %v3154, 8
    %v3195 = vmul.u32.u64.compose %v3194, %v3193
    %v3196 = vextract.low.u32 %v3195
    %v3197 = vextract.high.u32 %v3195
    %v3198 = vmul.u32.u64.compose %v3194, %v3189
    %v3199 = vextract.low.u32 %v3198
    %v3200 = vextract.high.u32 %v3198
    %v3201 = vmul.u32 %v3194, %v3185
    %v3202 = vadd.s32 %v3197, %v3199
    %vm3203 = vc.u32 %v3197, %v3199
    %v3204 = vadd.s32 %v3200, 1
    %v3205 = vsel %vm3203, %v3204, %v3200
    %v3206 = vadd.s32 %v3201, %v3205
    %v3207 = vadd.s32 %v3206, 536870912
    %v3208 = vshrl.u32 %v3207, 30
    %v3209 = vshll.u32 %v3208, 30
    %v3210 = vsub.s32 %v3206, %v3209
    %vm3211 = vcmp.lt.s32.totalorder %v3210, 0
    %v3212 = vsub.s32 0, %v3210
    %v3213 = vsel %vm3211, %v3212, %v3210
    %v3214 = vclz %v3213
    %v3215 = vsub.s32 %v3214, 2
    %vm3216 = vcmp.gt.s32.totalorder 0, %v3215
    %v3217 = vsel %vm3216, 0, %v3215
    %v3218 = vsub.s32 32, %v3217
    %v3219 = vshll.u32 %v3210, %v3217
    %v3220 = vshrl.u32 %v3202, %v3218
    %v3221 = vor.u32 %v3219, %v3220
    %v3222 = vsub.s32 4294967266, %v3217
    %v3223 = vadd.s32 %v3222, 127
    %v3224 = vshll.u32 %v3223, 23
    %v3225 = vor.u32 4788187, %v3224
    %v3226 = vand.u32 2147483647, %v3225
    %v3228 = vcvt.s32.f32 %v3221
    %v3229 = vmul.f32 %v3228, %v3226
    %v3230 = vxor.u32 %v3229, 2147483648
    %v3231 = vsel %vm3148, %v3230, %v3229
    %v3232 = vsub.s32 4, %v3208
    %v3233 = vsel %vm3148, %v3232, %v3208
    %v3234 = vsel %vm3147, %v3027, %v3231
    %v3235 = vsel %vm3147, 0, %v3233
    %v3236 = vcosq.f32.pop %v3234
    %v3237 = vsinq.f32.pop %v3234
    %vm3238 = vweird.f32 %v3027
    %v3239 = vadd.s32 %v3235, 3
    %v3240 = vand.u32 %v3239, 3
    %vm3241 = vcmp.lt.s32.totalorder %v3240, 2
    %vm3242 = vcmp.eq.s32.totalorder %v3240, 0
    %v3243 = vxor.u32 %v3237, 2147483648
    %v3244 = vsel %vm3242, %v3236, %v3243
    %vm3245 = vcmp.eq.s32.totalorder %v3240, 2
    %v3246 = vxor.u32 %v3236, 2147483648
    %v3247 = vsel %vm3245, %v3246, %v3237
    %v3248 = vsel %vm3241, %v3244, %v3247
    %v3249 = vsel %vm3238, nan, %v3248
    %v3250 = vand.u32 2147483647, %v3028
    %vm3251 = vcmp.le.f32.partialorder %v3250, 0.7853982
    %vm3252 = vcmp.lt.s32.totalorder %v3028, 0
    %v3253 = vand.u32 %v3028, 2139095040
    %v3254 = vshrl.u32 %v3253, 23
    %v3255 = vsub.s32 %v3254, 127
    %v3256 = vand.u32 2147483647, %v3028
    %v3257 = vand.u32 %v3256, 8388607
    %v3258 = vor.u32 %v3257, 8388608
    %v3259 = vsub.s32 0, %v3258
    %v3260 = vadd.s32 %v3255, 1
    %vm3261 = vcmp.gt.s32.totalorder %v3260, 0
    %v3262 = vsel %vm3261, %v3260, 0
    %v3263 = vshrl.u32 %v3262, 5
    %v3264 = vand.u32 %v3262, 31
    %v3265 = vsub.s32 32, %v3264
    %v3266 = vshrl.u32 683565275, %v3265
    %v3267 = vshll.u32 683565275, %v3264
    %v3268 = vshrl.u32 2475754826, %v3265
    %v3269 = vor.u32 %v3267, %v3268
    %v3270 = vshll.u32 2475754826, %v3264
    %v3271 = vshrl.u32 2131351028, %v3265
    %v3272 = vor.u32 %v3270, %v3271
    %v3273 = vshll.u32 2131351028, %v3264
    %v3274 = vshrl.u32 2102212464, %v3265
    %v3275 = vor.u32 %v3273, %v3274
    %v3276 = vshll.u32 2102212464, %v3264
    %v3277 = vshrl.u32 920167782, %v3265
    %v3278 = vor.u32 %v3276, %v3277
    %v3279 = vshll.u32 920167782, %v3264
    %v3280 = vshrl.u32 1326507024, %v3265
    %v3281 = vor.u32 %v3279, %v3280
    %vm3282 = vcmp.lt.s32.totalorder %v3263, 1
    %vm3283 = vcmp.lt.s32.totalorder %v3263, 2
    %vm3284 = vcmp.lt.s32.totalorder %v3263, 3
    %vm3285 = vcmp.lt.s32.totalorder %v3263, 4
    %v3286 = vsel %vm3282, %v3266, %v3269
    %v3287 = vsel %vm3285, %v3275, 2102212464
    %v3288 = vsel %vm3284, %v3272, %v3287
    %v3289 = vsel %vm3283, %v3286, %v3288
    %v3290 = vsel %vm3282, %v3269, %v3272
    %v3291 = vsel %vm3285, %v3278, 920167782
    %v3292 = vsel %vm3284, %v3275, %v3291
    %v3293 = vsel %vm3283, %v3290, %v3292
    %v3294 = vsel %vm3282, %v3272, %v3275
    %v3295 = vsel %vm3285, %v3281, 1326507024
    %v3296 = vsel %vm3284, %v3278, %v3295
    %v3297 = vsel %vm3283, %v3294, %v3296
    %v3298 = vshll.u32 %v3258, 8
    %v3299 = vmul.u32.u64.compose %v3298, %v3297
    %v3300 = vextract.low.u32 %v3299
    %v3301 = vextract.high.u32 %v3299
    %v3302 = vmul.u32.u64.compose %v3298, %v3293
    %v3303 = vextract.low.u32 %v3302
    %v3304 = vextract.high.u32 %v3302
    %v3305 = vmul.u32 %v3298, %v3289
    %v3306 = vadd.s32 %v3301, %v3303
    %vm3307 = vc.u32 %v3301, %v3303
    %v3308 = vadd.s32 %v3304, 1
    %v3309 = vsel %vm3307, %v3308, %v3304
    %v3310 = vadd.s32 %v3305, %v3309
    %v3311 = vadd.s32 %v3310, 536870912
    %v3312 = vshrl.u32 %v3311, 30
    %v3313 = vshll.u32 %v3312, 30
    %v3314 = vsub.s32 %v3310, %v3313
    %vm3315 = vcmp.lt.s32.totalorder %v3314, 0
    %v3316 = vsub.s32 0, %v3314
    %v3317 = vsel %vm3315, %v3316, %v3314
    %v3318 = vclz %v3317
    %v3319 = vsub.s32 %v3318, 2
    %vm3320 = vcmp.gt.s32.totalorder 0, %v3319
    %v3321 = vsel %vm3320, 0, %v3319
    %v3322 = vsub.s32 32, %v3321
    %v3323 = vshll.u32 %v3314, %v3321
    %v3324 = vshrl.u32 %v3306, %v3322
    %v3325 = vor.u32 %v3323, %v3324
    %v3326 = vsub.s32 4294967266, %v3321
    %v3327 = vadd.s32 %v3326, 127
    %v3328 = vshll.u32 %v3327, 23
    %v3329 = vor.u32 4788187, %v3328
    %v3330 = vand.u32 2147483647, %v3329
    %v3332 = vcvt.s32.f32 %v3325
    %v3333 = vmul.f32 %v3332, %v3330
    %v3334 = vxor.u32 %v3333, 2147483648
    %v3335 = vsel %vm3252, %v3334, %v3333
    %v3336 = vsub.s32 4, %v3312
    %v3337 = vsel %vm3252, %v3336, %v3312
    %v3338 = vsel %vm3251, %v3028, %v3335
    %v3339 = vsel %vm3251, 0, %v3337
    %v3340 = vcosq.f32.pop %v3338
    %v3341 = vsinq.f32.pop %v3338
    %vm3342 = vweird.f32 %v3028
    %v3343 = vadd.s32 %v3339, 3
    %v3344 = vand.u32 %v3343, 3
    %vm3345 = vcmp.lt.s32.totalorder %v3344, 2
    %vm3346 = vcmp.eq.s32.totalorder %v3344, 0
    %v3347 = vxor.u32 %v3341, 2147483648
    %v3348 = vsel %vm3346, %v3340, %v3347
    %vm3349 = vcmp.eq.s32.totalorder %v3344, 2
    %v3350 = vxor.u32 %v3340, 2147483648
    %v3351 = vsel %vm3349, %v3350, %v3341
    %v3352 = vsel %vm3345, %v3348, %v3351
    %v3353 = vsel %vm3342, nan, %v3352
    %v3354 = vand.u32 2147483647, %v3029
    %vm3355 = vcmp.le.f32.partialorder %v3354, 0.7853982
    %vm3356 = vcmp.lt.s32.totalorder %v3029, 0
    %v3357 = vand.u32 %v3029, 2139095040
    %v3358 = vshrl.u32 %v3357, 23
    %v3359 = vsub.s32 %v3358, 127
    %v3360 = vand.u32 2147483647, %v3029
    %v3361 = vand.u32 %v3360, 8388607
    %v3362 = vor.u32 %v3361, 8388608
    %v3363 = vsub.s32 0, %v3362
    %v3364 = vadd.s32 %v3359, 1
    %vm3365 = vcmp.gt.s32.totalorder %v3364, 0
    %v3366 = vsel %vm3365, %v3364, 0
    %v3367 = vshrl.u32 %v3366, 5
    %v3368 = vand.u32 %v3366, 31
    %v3369 = vsub.s32 32, %v3368
    %v3370 = vshrl.u32 683565275, %v3369
    %v3371 = vshll.u32 683565275, %v3368
    %v3372 = vshrl.u32 2475754826, %v3369
    %v3373 = vor.u32 %v3371, %v3372
    %v3374 = vshll.u32 2475754826, %v3368
    %v3375 = vshrl.u32 2131351028, %v3369
    %v3376 = vor.u32 %v3374, %v3375
    %v3377 = vshll.u32 2131351028, %v3368
    %v3378 = vshrl.u32 2102212464, %v3369
    %v3379 = vor.u32 %v3377, %v3378
    %v3380 = vshll.u32 2102212464, %v3368
    %v3381 = vshrl.u32 920167782, %v3369
    %v3382 = vor.u32 %v3380, %v3381
    %v3383 = vshll.u32 920167782, %v3368
    %v3384 = vshrl.u32 1326507024, %v3369
    %v3385 = vor.u32 %v3383, %v3384
    %vm3386 = vcmp.lt.s32.totalorder %v3367, 1
    %vm3387 = vcmp.lt.s32.totalorder %v3367, 2
    %vm3388 = vcmp.lt.s32.totalorder %v3367, 3
    %vm3389 = vcmp.lt.s32.totalorder %v3367, 4
    %v3390 = vsel %vm3386, %v3370, %v3373
    %v3391 = vsel %vm3389, %v3379, 2102212464
    %v3392 = vsel %vm3388, %v3376, %v3391
    %v3393 = vsel %vm3387, %v3390, %v3392
    %v3394 = vsel %vm3386, %v3373, %v3376
    %v3395 = vsel %vm3389, %v3382, 920167782
    %v3396 = vsel %vm3388, %v3379, %v3395
    %v3397 = vsel %vm3387, %v3394, %v3396
    %v3398 = vsel %vm3386, %v3376, %v3379
    %v3399 = vsel %vm3389, %v3385, 1326507024
    %v3400 = vsel %vm3388, %v3382, %v3399
    %v3401 = vsel %vm3387, %v3398, %v3400
    %v3402 = vshll.u32 %v3362, 8
    %v3403 = vmul.u32.u64.compose %v3402, %v3401
    %v3404 = vextract.low.u32 %v3403
    %v3405 = vextract.high.u32 %v3403
    %v3406 = vmul.u32.u64.compose %v3402, %v3397
    %v3407 = vextract.low.u32 %v3406
    %v3408 = vextract.high.u32 %v3406
    %v3409 = vmul.u32 %v3402, %v3393
    %v3410 = vadd.s32 %v3405, %v3407
    %vm3411 = vc.u32 %v3405, %v3407
    %v3412 = vadd.s32 %v3408, 1
    %v3413 = vsel %vm3411, %v3412, %v3408
    %v3414 = vadd.s32 %v3409, %v3413
    %v3415 = vadd.s32 %v3414, 536870912
    %v3416 = vshrl.u32 %v3415, 30
    %v3417 = vshll.u32 %v3416, 30
    %v3418 = vsub.s32 %v3414, %v3417
    %vm3419 = vcmp.lt.s32.totalorder %v3418, 0
    %v3420 = vsub.s32 0, %v3418
    %v3421 = vsel %vm3419, %v3420, %v3418
    %v3422 = vclz %v3421
    %v3423 = vsub.s32 %v3422, 2
    %vm3424 = vcmp.gt.s32.totalorder 0, %v3423
    %v3425 = vsel %vm3424, 0, %v3423
    %v3426 = vsub.s32 32, %v3425
    %v3427 = vshll.u32 %v3418, %v3425
    %v3428 = vshrl.u32 %v3410, %v3426
    %v3429 = vor.u32 %v3427, %v3428
    %v3430 = vsub.s32 4294967266, %v3425
    %v3431 = vadd.s32 %v3430, 127
    %v3432 = vshll.u32 %v3431, 23
    %v3433 = vor.u32 4788187, %v3432
    %v3434 = vand.u32 2147483647, %v3433
    %v3436 = vcvt.s32.f32 %v3429
    %v3437 = vmul.f32 %v3436, %v3434
    %v3438 = vxor.u32 %v3437, 2147483648
    %v3439 = vsel %vm3356, %v3438, %v3437
    %v3440 = vsub.s32 4, %v3416
    %v3441 = vsel %vm3356, %v3440, %v3416
    %v3442 = vsel %vm3355, %v3029, %v3439
    %v3443 = vsel %vm3355, 0, %v3441
    %v3444 = vcosq.f32.pop %v3442
    %v3445 = vsinq.f32.pop %v3442
    %vm3446 = vweird.f32 %v3029
    %v3447 = vadd.s32 %v3443, 3
    %v3448 = vand.u32 %v3447, 3
    %vm3449 = vcmp.lt.s32.totalorder %v3448, 2
    %vm3450 = vcmp.eq.s32.totalorder %v3448, 0
    %v3451 = vxor.u32 %v3445, 2147483648
    %v3452 = vsel %vm3450, %v3444, %v3451
    %vm3453 = vcmp.eq.s32.totalorder %v3448, 2
    %v3454 = vxor.u32 %v3444, 2147483648
    %v3455 = vsel %vm3453, %v3454, %v3445
    %v3456 = vsel %vm3449, %v3452, %v3455
    %v3457 = vsel %vm3446, nan, %v3456
    %v3458 = vand.u32 2147483647, %v3030
    %vm3459 = vcmp.le.f32.partialorder %v3458, 0.7853982
    %vm3460 = vcmp.lt.s32.totalorder %v3030, 0
    %v3461 = vand.u32 %v3030, 2139095040
    %v3462 = vshrl.u32 %v3461, 23
    %v3463 = vsub.s32 %v3462, 127
    %v3464 = vand.u32 2147483647, %v3030
    %v3465 = vand.u32 %v3464, 8388607
    %v3466 = vor.u32 %v3465, 8388608
    %v3467 = vsub.s32 0, %v3466
    %v3468 = vadd.s32 %v3463, 1
    %vm3469 = vcmp.gt.s32.totalorder %v3468, 0
    %v3470 = vsel %vm3469, %v3468, 0
    %v3471 = vshrl.u32 %v3470, 5
    %v3472 = vand.u32 %v3470, 31
    %v3473 = vsub.s32 32, %v3472
    %v3474 = vshrl.u32 683565275, %v3473
    %v3475 = vshll.u32 683565275, %v3472
    %v3476 = vshrl.u32 2475754826, %v3473
    %v3477 = vor.u32 %v3475, %v3476
    %v3478 = vshll.u32 2475754826, %v3472
    %v3479 = vshrl.u32 2131351028, %v3473
    %v3480 = vor.u32 %v3478, %v3479
    %v3481 = vshll.u32 2131351028, %v3472
    %v3482 = vshrl.u32 2102212464, %v3473
    %v3483 = vor.u32 %v3481, %v3482
    %v3484 = vshll.u32 2102212464, %v3472
    %v3485 = vshrl.u32 920167782, %v3473
    %v3486 = vor.u32 %v3484, %v3485
    %v3487 = vshll.u32 920167782, %v3472
    %v3488 = vshrl.u32 1326507024, %v3473
    %v3489 = vor.u32 %v3487, %v3488
    %vm3490 = vcmp.lt.s32.totalorder %v3471, 1
    %vm3491 = vcmp.lt.s32.totalorder %v3471, 2
    %vm3492 = vcmp.lt.s32.totalorder %v3471, 3
    %vm3493 = vcmp.lt.s32.totalorder %v3471, 4
    %v3494 = vsel %vm3490, %v3474, %v3477
    %v3495 = vsel %vm3493, %v3483, 2102212464
    %v3496 = vsel %vm3492, %v3480, %v3495
    %v3497 = vsel %vm3491, %v3494, %v3496
    %v3498 = vsel %vm3490, %v3477, %v3480
    %v3499 = vsel %vm3493, %v3486, 920167782
    %v3500 = vsel %vm3492, %v3483, %v3499
    %v3501 = vsel %vm3491, %v3498, %v3500
    %v3502 = vsel %vm3490, %v3480, %v3483
    %v3503 = vsel %vm3493, %v3489, 1326507024
    %v3504 = vsel %vm3492, %v3486, %v3503
    %v3505 = vsel %vm3491, %v3502, %v3504
    %v3506 = vshll.u32 %v3466, 8
    %v3507 = vmul.u32.u64.compose %v3506, %v3505
    %v3508 = vextract.low.u32 %v3507
    %v3509 = vextract.high.u32 %v3507
    %v3510 = vmul.u32.u64.compose %v3506, %v3501
    %v3511 = vextract.low.u32 %v3510
    %v3512 = vextract.high.u32 %v3510
    %v3513 = vmul.u32 %v3506, %v3497
    %v3514 = vadd.s32 %v3509, %v3511
    %vm3515 = vc.u32 %v3509, %v3511
    %v3516 = vadd.s32 %v3512, 1
    %v3517 = vsel %vm3515, %v3516, %v3512
    %v3518 = vadd.s32 %v3513, %v3517
    %v3519 = vadd.s32 %v3518, 536870912
    %v3520 = vshrl.u32 %v3519, 30
    %v3521 = vshll.u32 %v3520, 30
    %v3522 = vsub.s32 %v3518, %v3521
    %vm3523 = vcmp.lt.s32.totalorder %v3522, 0
    %v3524 = vsub.s32 0, %v3522
    %v3525 = vsel %vm3523, %v3524, %v3522
    %v3526 = vclz %v3525
    %v3527 = vsub.s32 %v3526, 2
    %vm3528 = vcmp.gt.s32.totalorder 0, %v3527
    %v3529 = vsel %vm3528, 0, %v3527
    %v3530 = vsub.s32 32, %v3529
    %v3531 = vshll.u32 %v3522, %v3529
    %v3532 = vshrl.u32 %v3514, %v3530
    %v3533 = vor.u32 %v3531, %v3532
    %v3534 = vsub.s32 4294967266, %v3529
    %v3535 = vadd.s32 %v3534, 127
    %v3536 = vshll.u32 %v3535, 23
    %v3537 = vor.u32 4788187, %v3536
    %v3538 = vand.u32 2147483647, %v3537
    %v3540 = vcvt.s32.f32 %v3533
    %v3541 = vmul.f32 %v3540, %v3538
    %v3542 = vxor.u32 %v3541, 2147483648
    %v3543 = vsel %vm3460, %v3542, %v3541
    %v3544 = vsub.s32 4, %v3520
    %v3545 = vsel %vm3460, %v3544, %v3520
    %v3546 = vsel %vm3459, %v3030, %v3543
    %v3547 = vsel %vm3459, 0, %v3545
    %v3548 = vcosq.f32.pop %v3546
    %v3549 = vsinq.f32.pop %v3546
    %vm3550 = vweird.f32 %v3030
    %v3551 = vadd.s32 %v3547, 3
    %v3552 = vand.u32 %v3551, 3
    %vm3553 = vcmp.lt.s32.totalorder %v3552, 2
    %vm3554 = vcmp.eq.s32.totalorder %v3552, 0
    %v3555 = vxor.u32 %v3549, 2147483648
    %v3556 = vsel %vm3554, %v3548, %v3555
    %vm3557 = vcmp.eq.s32.totalorder %v3552, 2
    %v3558 = vxor.u32 %v3548, 2147483648
    %v3559 = vsel %vm3557, %v3558, %v3549
    %v3560 = vsel %vm3553, %v3556, %v3559
    %v3561 = vsel %vm3550, nan, %v3560
    %v3562 = vand.u32 2147483647, %v3031
    %vm3563 = vcmp.le.f32.partialorder %v3562, 0.7853982
    %vm3564 = vcmp.lt.s32.totalorder %v3031, 0
    %v3565 = vand.u32 %v3031, 2139095040
    %v3566 = vshrl.u32 %v3565, 23
    %v3567 = vsub.s32 %v3566, 127
    %v3568 = vand.u32 2147483647, %v3031
    %v3569 = vand.u32 %v3568, 8388607
    %v3570 = vor.u32 %v3569, 8388608
    %v3571 = vsub.s32 0, %v3570
    %v3572 = vadd.s32 %v3567, 1
    %vm3573 = vcmp.gt.s32.totalorder %v3572, 0
    %v3574 = vsel %vm3573, %v3572, 0
    %v3575 = vshrl.u32 %v3574, 5
    %v3576 = vand.u32 %v3574, 31
    %v3577 = vsub.s32 32, %v3576
    %v3578 = vshrl.u32 683565275, %v3577
    %v3579 = vshll.u32 683565275, %v3576
    %v3580 = vshrl.u32 2475754826, %v3577
    %v3581 = vor.u32 %v3579, %v3580
    %v3582 = vshll.u32 2475754826, %v3576
    %v3583 = vshrl.u32 2131351028, %v3577
    %v3584 = vor.u32 %v3582, %v3583
    %v3585 = vshll.u32 2131351028, %v3576
    %v3586 = vshrl.u32 2102212464, %v3577
    %v3587 = vor.u32 %v3585, %v3586
    %v3588 = vshll.u32 2102212464, %v3576
    %v3589 = vshrl.u32 920167782, %v3577
    %v3590 = vor.u32 %v3588, %v3589
    %v3591 = vshll.u32 920167782, %v3576
    %v3592 = vshrl.u32 1326507024, %v3577
    %v3593 = vor.u32 %v3591, %v3592
    %vm3594 = vcmp.lt.s32.totalorder %v3575, 1
    %vm3595 = vcmp.lt.s32.totalorder %v3575, 2
    %vm3596 = vcmp.lt.s32.totalorder %v3575, 3
    %vm3597 = vcmp.lt.s32.totalorder %v3575, 4
    %v3598 = vsel %vm3594, %v3578, %v3581
    %v3599 = vsel %vm3597, %v3587, 2102212464
    %v3600 = vsel %vm3596, %v3584, %v3599
    %v3601 = vsel %vm3595, %v3598, %v3600
    %v3602 = vsel %vm3594, %v3581, %v3584
    %v3603 = vsel %vm3597, %v3590, 920167782
    %v3604 = vsel %vm3596, %v3587, %v3603
    %v3605 = vsel %vm3595, %v3602, %v3604
    %v3606 = vsel %vm3594, %v3584, %v3587
    %v3607 = vsel %vm3597, %v3593, 1326507024
    %v3608 = vsel %vm3596, %v3590, %v3607
    %v3609 = vsel %vm3595, %v3606, %v3608
    %v3610 = vshll.u32 %v3570, 8
    %v3611 = vmul.u32.u64.compose %v3610, %v3609
    %v3612 = vextract.low.u32 %v3611
    %v3613 = vextract.high.u32 %v3611
    %v3614 = vmul.u32.u64.compose %v3610, %v3605
    %v3615 = vextract.low.u32 %v3614
    %v3616 = vextract.high.u32 %v3614
    %v3617 = vmul.u32 %v3610, %v3601
    %v3618 = vadd.s32 %v3613, %v3615
    %vm3619 = vc.u32 %v3613, %v3615
    %v3620 = vadd.s32 %v3616, 1
    %v3621 = vsel %vm3619, %v3620, %v3616
    %v3622 = vadd.s32 %v3617, %v3621
    %v3623 = vadd.s32 %v3622, 536870912
    %v3624 = vshrl.u32 %v3623, 30
    %v3625 = vshll.u32 %v3624, 30
    %v3626 = vsub.s32 %v3622, %v3625
    %vm3627 = vcmp.lt.s32.totalorder %v3626, 0
    %v3628 = vsub.s32 0, %v3626
    %v3629 = vsel %vm3627, %v3628, %v3626
    %v3630 = vclz %v3629
    %v3631 = vsub.s32 %v3630, 2
    %vm3632 = vcmp.gt.s32.totalorder 0, %v3631
    %v3633 = vsel %vm3632, 0, %v3631
    %v3634 = vsub.s32 32, %v3633
    %v3635 = vshll.u32 %v3626, %v3633
    %v3636 = vshrl.u32 %v3618, %v3634
    %v3637 = vor.u32 %v3635, %v3636
    %v3638 = vsub.s32 4294967266, %v3633
    %v3639 = vadd.s32 %v3638, 127
    %v3640 = vshll.u32 %v3639, 23
    %v3641 = vor.u32 4788187, %v3640
    %v3642 = vand.u32 2147483647, %v3641
    %v3644 = vcvt.s32.f32 %v3637
    %v3645 = vmul.f32 %v3644, %v3642
    %v3646 = vxor.u32 %v3645, 2147483648
    %v3647 = vsel %vm3564, %v3646, %v3645
    %v3648 = vsub.s32 4, %v3624
    %v3649 = vsel %vm3564, %v3648, %v3624
    %v3650 = vsel %vm3563, %v3031, %v3647
    %v3651 = vsel %vm3563, 0, %v3649
    %v3652 = vcosq.f32.pop %v3650
    %v3653 = vsinq.f32.pop %v3650
    %vm3654 = vweird.f32 %v3031
    %v3655 = vadd.s32 %v3651, 3
    %v3656 = vand.u32 %v3655, 3
    %vm3657 = vcmp.lt.s32.totalorder %v3656, 2
    %vm3658 = vcmp.eq.s32.totalorder %v3656, 0
    %v3659 = vxor.u32 %v3653, 2147483648
    %v3660 = vsel %vm3658, %v3652, %v3659
    %vm3661 = vcmp.eq.s32.totalorder %v3656, 2
    %v3662 = vxor.u32 %v3652, 2147483648
    %v3663 = vsel %vm3661, %v3662, %v3653
    %v3664 = vsel %vm3657, %v3660, %v3663
    %v3665 = vsel %vm3654, nan, %v3664
    %v3666 = vand.u32 2147483647, %v3032
    %vm3667 = vcmp.le.f32.partialorder %v3666, 0.7853982
    %vm3668 = vcmp.lt.s32.totalorder %v3032, 0
    %v3669 = vand.u32 %v3032, 2139095040
    %v3670 = vshrl.u32 %v3669, 23
    %v3671 = vsub.s32 %v3670, 127
    %v3672 = vand.u32 2147483647, %v3032
    %v3673 = vand.u32 %v3672, 8388607
    %v3674 = vor.u32 %v3673, 8388608
    %v3675 = vsub.s32 0, %v3674
    %v3676 = vadd.s32 %v3671, 1
    %vm3677 = vcmp.gt.s32.totalorder %v3676, 0
    %v3678 = vsel %vm3677, %v3676, 0
    %v3679 = vshrl.u32 %v3678, 5
    %v3680 = vand.u32 %v3678, 31
    %v3681 = vsub.s32 32, %v3680
    %v3682 = vshrl.u32 683565275, %v3681
    %v3683 = vshll.u32 683565275, %v3680
    %v3684 = vshrl.u32 2475754826, %v3681
    %v3685 = vor.u32 %v3683, %v3684
    %v3686 = vshll.u32 2475754826, %v3680
    %v3687 = vshrl.u32 2131351028, %v3681
    %v3688 = vor.u32 %v3686, %v3687
    %v3689 = vshll.u32 2131351028, %v3680
    %v3690 = vshrl.u32 2102212464, %v3681
    %v3691 = vor.u32 %v3689, %v3690
    %v3692 = vshll.u32 2102212464, %v3680
    %v3693 = vshrl.u32 920167782, %v3681
    %v3694 = vor.u32 %v3692, %v3693
    %v3695 = vshll.u32 920167782, %v3680
    %v3696 = vshrl.u32 1326507024, %v3681
    %v3697 = vor.u32 %v3695, %v3696
    %vm3698 = vcmp.lt.s32.totalorder %v3679, 1
    %vm3699 = vcmp.lt.s32.totalorder %v3679, 2
    %vm3700 = vcmp.lt.s32.totalorder %v3679, 3
    %vm3701 = vcmp.lt.s32.totalorder %v3679, 4
    %v3702 = vsel %vm3698, %v3682, %v3685
    %v3703 = vsel %vm3701, %v3691, 2102212464
    %v3704 = vsel %vm3700, %v3688, %v3703
    %v3705 = vsel %vm3699, %v3702, %v3704
    %v3706 = vsel %vm3698, %v3685, %v3688
    %v3707 = vsel %vm3701, %v3694, 920167782
    %v3708 = vsel %vm3700, %v3691, %v3707
    %v3709 = vsel %vm3699, %v3706, %v3708
    %v3710 = vsel %vm3698, %v3688, %v3691
    %v3711 = vsel %vm3701, %v3697, 1326507024
    %v3712 = vsel %vm3700, %v3694, %v3711
    %v3713 = vsel %vm3699, %v3710, %v3712
    %v3714 = vshll.u32 %v3674, 8
    %v3715 = vmul.u32.u64.compose %v3714, %v3713
    %v3716 = vextract.low.u32 %v3715
    %v3717 = vextract.high.u32 %v3715
    %v3718 = vmul.u32.u64.compose %v3714, %v3709
    %v3719 = vextract.low.u32 %v3718
    %v3720 = vextract.high.u32 %v3718
    %v3721 = vmul.u32 %v3714, %v3705
    %v3722 = vadd.s32 %v3717, %v3719
    %vm3723 = vc.u32 %v3717, %v3719
    %v3724 = vadd.s32 %v3720, 1
    %v3725 = vsel %vm3723, %v3724, %v3720
    %v3726 = vadd.s32 %v3721, %v3725
    %v3727 = vadd.s32 %v3726, 536870912
    %v3728 = vshrl.u32 %v3727, 30
    %v3729 = vshll.u32 %v3728, 30
    %v3730 = vsub.s32 %v3726, %v3729
    %vm3731 = vcmp.lt.s32.totalorder %v3730, 0
    %v3732 = vsub.s32 0, %v3730
    %v3733 = vsel %vm3731, %v3732, %v3730
    %v3734 = vclz %v3733
    %v3735 = vsub.s32 %v3734, 2
    %vm3736 = vcmp.gt.s32.totalorder 0, %v3735
    %v3737 = vsel %vm3736, 0, %v3735
    %v3738 = vsub.s32 32, %v3737
    %v3739 = vshll.u32 %v3730, %v3737
    %v3740 = vshrl.u32 %v3722, %v3738
    %v3741 = vor.u32 %v3739, %v3740
    %v3742 = vsub.s32 4294967266, %v3737
    %v3743 = vadd.s32 %v3742, 127
    %v3744 = vshll.u32 %v3743, 23
    %v3745 = vor.u32 4788187, %v3744
    %v3746 = vand.u32 2147483647, %v3745
    %v3748 = vcvt.s32.f32 %v3741
    %v3749 = vmul.f32 %v3748, %v3746
    %v3750 = vxor.u32 %v3749, 2147483648
    %v3751 = vsel %vm3668, %v3750, %v3749
    %v3752 = vsub.s32 4, %v3728
    %v3753 = vsel %vm3668, %v3752, %v3728
    %v3754 = vsel %vm3667, %v3032, %v3751
    %v3755 = vsel %vm3667, 0, %v3753
    %v3756 = vcosq.f32.pop %v3754
    %v3757 = vsinq.f32.pop %v3754
    %vm3758 = vweird.f32 %v3032
    %v3759 = vadd.s32 %v3755, 3
    %v3760 = vand.u32 %v3759, 3
    %vm3761 = vcmp.lt.s32.totalorder %v3760, 2
    %vm3762 = vcmp.eq.s32.totalorder %v3760, 0
    %v3763 = vxor.u32 %v3757, 2147483648
    %v3764 = vsel %vm3762, %v3756, %v3763
    %vm3765 = vcmp.eq.s32.totalorder %v3760, 2
    %v3766 = vxor.u32 %v3756, 2147483648
    %v3767 = vsel %vm3765, %v3766, %v3757
    %v3768 = vsel %vm3761, %v3764, %v3767
    %v3769 = vsel %vm3758, nan, %v3768
    %v3770 = vand.u32 2147483647, %v3033
    %vm3771 = vcmp.le.f32.partialorder %v3770, 0.7853982
    %vm3772 = vcmp.lt.s32.totalorder %v3033, 0
    %v3773 = vand.u32 %v3033, 2139095040
    %v3774 = vshrl.u32 %v3773, 23
    %v3775 = vsub.s32 %v3774, 127
    %v3776 = vand.u32 2147483647, %v3033
    %v3777 = vand.u32 %v3776, 8388607
    %v3778 = vor.u32 %v3777, 8388608
    %v3779 = vsub.s32 0, %v3778
    %v3780 = vadd.s32 %v3775, 1
    %vm3781 = vcmp.gt.s32.totalorder %v3780, 0
    %v3782 = vsel %vm3781, %v3780, 0
    %v3783 = vshrl.u32 %v3782, 5
    %v3784 = vand.u32 %v3782, 31
    %v3785 = vsub.s32 32, %v3784
    %v3786 = vshrl.u32 683565275, %v3785
    %v3787 = vshll.u32 683565275, %v3784
    %v3788 = vshrl.u32 2475754826, %v3785
    %v3789 = vor.u32 %v3787, %v3788
    %v3790 = vshll.u32 2475754826, %v3784
    %v3791 = vshrl.u32 2131351028, %v3785
    %v3792 = vor.u32 %v3790, %v3791
    %v3793 = vshll.u32 2131351028, %v3784
    %v3794 = vshrl.u32 2102212464, %v3785
    %v3795 = vor.u32 %v3793, %v3794
    %v3796 = vshll.u32 2102212464, %v3784
    %v3797 = vshrl.u32 920167782, %v3785
    %v3798 = vor.u32 %v3796, %v3797
    %v3799 = vshll.u32 920167782, %v3784
    %v3800 = vshrl.u32 1326507024, %v3785
    %v3801 = vor.u32 %v3799, %v3800
    %vm3802 = vcmp.lt.s32.totalorder %v3783, 1
    %vm3803 = vcmp.lt.s32.totalorder %v3783, 2
    %vm3804 = vcmp.lt.s32.totalorder %v3783, 3
    %vm3805 = vcmp.lt.s32.totalorder %v3783, 4
    %v3806 = vsel %vm3802, %v3786, %v3789
    %v3807 = vsel %vm3805, %v3795, 2102212464
    %v3808 = vsel %vm3804, %v3792, %v3807
    %v3809 = vsel %vm3803, %v3806, %v3808
    %v3810 = vsel %vm3802, %v3789, %v3792
    %v3811 = vsel %vm3805, %v3798, 920167782
    %v3812 = vsel %vm3804, %v3795, %v3811
    %v3813 = vsel %vm3803, %v3810, %v3812
    %v3814 = vsel %vm3802, %v3792, %v3795
    %v3815 = vsel %vm3805, %v3801, 1326507024
    %v3816 = vsel %vm3804, %v3798, %v3815
    %v3817 = vsel %vm3803, %v3814, %v3816
    %v3818 = vshll.u32 %v3778, 8
    %v3819 = vmul.u32.u64.compose %v3818, %v3817
    %v3820 = vextract.low.u32 %v3819
    %v3821 = vextract.high.u32 %v3819
    %v3822 = vmul.u32.u64.compose %v3818, %v3813
    %v3823 = vextract.low.u32 %v3822
    %v3824 = vextract.high.u32 %v3822
    %v3825 = vmul.u32 %v3818, %v3809
    %v3826 = vadd.s32 %v3821, %v3823
    %vm3827 = vc.u32 %v3821, %v3823
    %v3828 = vadd.s32 %v3824, 1
    %v3829 = vsel %vm3827, %v3828, %v3824
    %v3830 = vadd.s32 %v3825, %v3829
    %v3831 = vadd.s32 %v3830, 536870912
    %v3832 = vshrl.u32 %v3831, 30
    %v3833 = vshll.u32 %v3832, 30
    %v3834 = vsub.s32 %v3830, %v3833
    %vm3835 = vcmp.lt.s32.totalorder %v3834, 0
    %v3836 = vsub.s32 0, %v3834
    %v3837 = vsel %vm3835, %v3836, %v3834
    %v3838 = vclz %v3837
    %v3839 = vsub.s32 %v3838, 2
    %vm3840 = vcmp.gt.s32.totalorder 0, %v3839
    %v3841 = vsel %vm3840, 0, %v3839
    %v3842 = vsub.s32 32, %v3841
    %v3843 = vshll.u32 %v3834, %v3841
    %v3844 = vshrl.u32 %v3826, %v3842
    %v3845 = vor.u32 %v3843, %v3844
    %v3846 = vsub.s32 4294967266, %v3841
    %v3847 = vadd.s32 %v3846, 127
    %v3848 = vshll.u32 %v3847, 23
    %v3849 = vor.u32 4788187, %v3848
    %v3850 = vand.u32 2147483647, %v3849
    %v3852 = vcvt.s32.f32 %v3845
    %v3853 = vmul.f32 %v3852, %v3850
    %v3854 = vxor.u32 %v3853, 2147483648
    %v3855 = vsel %vm3772, %v3854, %v3853
    %v3856 = vsub.s32 4, %v3832
    %v3857 = vsel %vm3772, %v3856, %v3832
    %v3858 = vsel %vm3771, %v3033, %v3855
    %v3859 = vsel %vm3771, 0, %v3857
    %v3860 = vcosq.f32.pop %v3858
    %v3861 = vsinq.f32.pop %v3858
    %vm3862 = vweird.f32 %v3033
    %v3863 = vadd.s32 %v3859, 3
    %v3864 = vand.u32 %v3863, 3
    %vm3865 = vcmp.lt.s32.totalorder %v3864, 2
    %vm3866 = vcmp.eq.s32.totalorder %v3864, 0
    %v3867 = vxor.u32 %v3861, 2147483648
    %v3868 = vsel %vm3866, %v3860, %v3867
    %vm3869 = vcmp.eq.s32.totalorder %v3864, 2
    %v3870 = vxor.u32 %v3860, 2147483648
    %v3871 = vsel %vm3869, %v3870, %v3861
    %v3872 = vsel %vm3865, %v3868, %v3871
    %v3873 = vsel %vm3862, nan, %v3872
    %v3874 = vand.u32 2147483647, %v3034
    %vm3875 = vcmp.le.f32.partialorder %v3874, 0.7853982
    %vm3876 = vcmp.lt.s32.totalorder %v3034, 0
    %v3877 = vand.u32 %v3034, 2139095040
    %v3878 = vshrl.u32 %v3877, 23
    %v3879 = vsub.s32 %v3878, 127
    %v3880 = vand.u32 2147483647, %v3034
    %v3881 = vand.u32 %v3880, 8388607
    %v3882 = vor.u32 %v3881, 8388608
    %v3883 = vsub.s32 0, %v3882
    %v3884 = vadd.s32 %v3879, 1
    %vm3885 = vcmp.gt.s32.totalorder %v3884, 0
    %v3886 = vsel %vm3885, %v3884, 0
    %v3887 = vshrl.u32 %v3886, 5
    %v3888 = vand.u32 %v3886, 31
    %v3889 = vsub.s32 32, %v3888
    %v3890 = vshrl.u32 683565275, %v3889
    %v3891 = vshll.u32 683565275, %v3888
    %v3892 = vshrl.u32 2475754826, %v3889
    %v3893 = vor.u32 %v3891, %v3892
    %v3894 = vshll.u32 2475754826, %v3888
    %v3895 = vshrl.u32 2131351028, %v3889
    %v3896 = vor.u32 %v3894, %v3895
    %v3897 = vshll.u32 2131351028, %v3888
    %v3898 = vshrl.u32 2102212464, %v3889
    %v3899 = vor.u32 %v3897, %v3898
    %v3900 = vshll.u32 2102212464, %v3888
    %v3901 = vshrl.u32 920167782, %v3889
    %v3902 = vor.u32 %v3900, %v3901
    %v3903 = vshll.u32 920167782, %v3888
    %v3904 = vshrl.u32 1326507024, %v3889
    %v3905 = vor.u32 %v3903, %v3904
    %vm3906 = vcmp.lt.s32.totalorder %v3887, 1
    %vm3907 = vcmp.lt.s32.totalorder %v3887, 2
    %vm3908 = vcmp.lt.s32.totalorder %v3887, 3
    %vm3909 = vcmp.lt.s32.totalorder %v3887, 4
    %v3910 = vsel %vm3906, %v3890, %v3893
    %v3911 = vsel %vm3909, %v3899, 2102212464
    %v3912 = vsel %vm3908, %v3896, %v3911
    %v3913 = vsel %vm3907, %v3910, %v3912
    %v3914 = vsel %vm3906, %v3893, %v3896
    %v3915 = vsel %vm3909, %v3902, 920167782
    %v3916 = vsel %vm3908, %v3899, %v3915
    %v3917 = vsel %vm3907, %v3914, %v3916
    %v3918 = vsel %vm3906, %v3896, %v3899
    %v3919 = vsel %vm3909, %v3905, 1326507024
    %v3920 = vsel %vm3908, %v3902, %v3919
    %v3921 = vsel %vm3907, %v3918, %v3920
    %v3922 = vshll.u32 %v3882, 8
    %v3923 = vmul.u32.u64.compose %v3922, %v3921
    %v3924 = vextract.low.u32 %v3923
    %v3925 = vextract.high.u32 %v3923
    %v3926 = vmul.u32.u64.compose %v3922, %v3917
    %v3927 = vextract.low.u32 %v3926
    %v3928 = vextract.high.u32 %v3926
    %v3929 = vmul.u32 %v3922, %v3913
    %v3930 = vadd.s32 %v3925, %v3927
    %vm3931 = vc.u32 %v3925, %v3927
    %v3932 = vadd.s32 %v3928, 1
    %v3933 = vsel %vm3931, %v3932, %v3928
    %v3934 = vadd.s32 %v3929, %v3933
    %v3935 = vadd.s32 %v3934, 536870912
    %v3936 = vshrl.u32 %v3935, 30
    %v3937 = vshll.u32 %v3936, 30
    %v3938 = vsub.s32 %v3934, %v3937
    %vm3939 = vcmp.lt.s32.totalorder %v3938, 0
    %v3940 = vsub.s32 0, %v3938
    %v3941 = vsel %vm3939, %v3940, %v3938
    %v3942 = vclz %v3941
    %v3943 = vsub.s32 %v3942, 2
    %vm3944 = vcmp.gt.s32.totalorder 0, %v3943
    %v3945 = vsel %vm3944, 0, %v3943
    %v3946 = vsub.s32 32, %v3945
    %v3947 = vshll.u32 %v3938, %v3945
    %v3948 = vshrl.u32 %v3930, %v3946
    %v3949 = vor.u32 %v3947, %v3948
    %v3950 = vsub.s32 4294967266, %v3945
    %v3951 = vadd.s32 %v3950, 127
    %v3952 = vshll.u32 %v3951, 23
    %v3953 = vor.u32 4788187, %v3952
    %v3954 = vand.u32 2147483647, %v3953
    %v3956 = vcvt.s32.f32 %v3949
    %v3957 = vmul.f32 %v3956, %v3954
    %v3958 = vxor.u32 %v3957, 2147483648
    %v3959 = vsel %vm3876, %v3958, %v3957
    %v3960 = vsub.s32 4, %v3936
    %v3961 = vsel %vm3876, %v3960, %v3936
    %v3962 = vsel %vm3875, %v3034, %v3959
    %v3963 = vsel %vm3875, 0, %v3961
    %v3964 = vcosq.f32.pop %v3962
    %v3965 = vsinq.f32.pop %v3962
    %vm3966 = vweird.f32 %v3034
    %v3967 = vadd.s32 %v3963, 3
    %v3968 = vand.u32 %v3967, 3
    %vm3969 = vcmp.lt.s32.totalorder %v3968, 2
    %vm3970 = vcmp.eq.s32.totalorder %v3968, 0
    %v3971 = vxor.u32 %v3965, 2147483648
    %v3972 = vsel %vm3970, %v3964, %v3971
    %vm3973 = vcmp.eq.s32.totalorder %v3968, 2
    %v3974 = vxor.u32 %v3964, 2147483648
    %v3975 = vsel %vm3973, %v3974, %v3965
    %v3976 = vsel %vm3969, %v3972, %v3975
    %v3977 = vsel %vm3966, nan, %v3976
    %v3978 = vand.u32 2147483647, %v3035
    %vm3979 = vcmp.le.f32.partialorder %v3978, 0.7853982
    %vm3980 = vcmp.lt.s32.totalorder %v3035, 0
    %v3981 = vand.u32 %v3035, 2139095040
    %v3982 = vshrl.u32 %v3981, 23
    %v3983 = vsub.s32 %v3982, 127
    %v3984 = vand.u32 2147483647, %v3035
    %v3985 = vand.u32 %v3984, 8388607
    %v3986 = vor.u32 %v3985, 8388608
    %v3987 = vsub.s32 0, %v3986
    %v3988 = vadd.s32 %v3983, 1
    %vm3989 = vcmp.gt.s32.totalorder %v3988, 0
    %v3990 = vsel %vm3989, %v3988, 0
    %v3991 = vshrl.u32 %v3990, 5
    %v3992 = vand.u32 %v3990, 31
    %v3993 = vsub.s32 32, %v3992
    %v3994 = vshrl.u32 683565275, %v3993
    %v3995 = vshll.u32 683565275, %v3992
    %v3996 = vshrl.u32 2475754826, %v3993
    %v3997 = vor.u32 %v3995, %v3996
    %v3998 = vshll.u32 2475754826, %v3992
    %v3999 = vshrl.u32 2131351028, %v3993
    %v4000 = vor.u32 %v3998, %v3999
    %v4001 = vshll.u32 2131351028, %v3992
    %v4002 = vshrl.u32 2102212464, %v3993
    %v4003 = vor.u32 %v4001, %v4002
    %v4004 = vshll.u32 2102212464, %v3992
    %v4005 = vshrl.u32 920167782, %v3993
    %v4006 = vor.u32 %v4004, %v4005
    %v4007 = vshll.u32 920167782, %v3992
    %v4008 = vshrl.u32 1326507024, %v3993
    %v4009 = vor.u32 %v4007, %v4008
    %vm4010 = vcmp.lt.s32.totalorder %v3991, 1
    %vm4011 = vcmp.lt.s32.totalorder %v3991, 2
    %vm4012 = vcmp.lt.s32.totalorder %v3991, 3
    %vm4013 = vcmp.lt.s32.totalorder %v3991, 4
    %v4014 = vsel %vm4010, %v3994, %v3997
    %v4015 = vsel %vm4013, %v4003, 2102212464
    %v4016 = vsel %vm4012, %v4000, %v4015
    %v4017 = vsel %vm4011, %v4014, %v4016
    %v4018 = vsel %vm4010, %v3997, %v4000
    %v4019 = vsel %vm4013, %v4006, 920167782
    %v4020 = vsel %vm4012, %v4003, %v4019
    %v4021 = vsel %vm4011, %v4018, %v4020
    %v4022 = vsel %vm4010, %v4000, %v4003
    %v4023 = vsel %vm4013, %v4009, 1326507024
    %v4024 = vsel %vm4012, %v4006, %v4023
    %v4025 = vsel %vm4011, %v4022, %v4024
    %v4026 = vshll.u32 %v3986, 8
    %v4027 = vmul.u32.u64.compose %v4026, %v4025
    %v4028 = vextract.low.u32 %v4027
    %v4029 = vextract.high.u32 %v4027
    %v4030 = vmul.u32.u64.compose %v4026, %v4021
    %v4031 = vextract.low.u32 %v4030
    %v4032 = vextract.high.u32 %v4030
    %v4033 = vmul.u32 %v4026, %v4017
    %v4034 = vadd.s32 %v4029, %v4031
    %vm4035 = vc.u32 %v4029, %v4031
    %v4036 = vadd.s32 %v4032, 1
    %v4037 = vsel %vm4035, %v4036, %v4032
    %v4038 = vadd.s32 %v4033, %v4037
    %v4039 = vadd.s32 %v4038, 536870912
    %v4040 = vshrl.u32 %v4039, 30
    %v4041 = vshll.u32 %v4040, 30
    %v4042 = vsub.s32 %v4038, %v4041
    %vm4043 = vcmp.lt.s32.totalorder %v4042, 0
    %v4044 = vsub.s32 0, %v4042
    %v4045 = vsel %vm4043, %v4044, %v4042
    %v4046 = vclz %v4045
    %v4047 = vsub.s32 %v4046, 2
    %vm4048 = vcmp.gt.s32.totalorder 0, %v4047
    %v4049 = vsel %vm4048, 0, %v4047
    %v4050 = vsub.s32 32, %v4049
    %v4051 = vshll.u32 %v4042, %v4049
    %v4052 = vshrl.u32 %v4034, %v4050
    %v4053 = vor.u32 %v4051, %v4052
    %v4054 = vsub.s32 4294967266, %v4049
    %v4055 = vadd.s32 %v4054, 127
    %v4056 = vshll.u32 %v4055, 23
    %v4057 = vor.u32 4788187, %v4056
    %v4058 = vand.u32 2147483647, %v4057
    %v4060 = vcvt.s32.f32 %v4053
    %v4061 = vmul.f32 %v4060, %v4058
    %v4062 = vxor.u32 %v4061, 2147483648
    %v4063 = vsel %vm3980, %v4062, %v4061
    %v4064 = vsub.s32 4, %v4040
    %v4065 = vsel %vm3980, %v4064, %v4040
    %v4066 = vsel %vm3979, %v3035, %v4063
    %v4067 = vsel %vm3979, 0, %v4065
    %v4068 = vcosq.f32.pop %v4066
    %v4069 = vsinq.f32.pop %v4066
    %vm4070 = vweird.f32 %v3035
    %v4071 = vadd.s32 %v4067, 3
    %v4072 = vand.u32 %v4071, 3
    %vm4073 = vcmp.lt.s32.totalorder %v4072, 2
    %vm4074 = vcmp.eq.s32.totalorder %v4072, 0
    %v4075 = vxor.u32 %v4069, 2147483648
    %v4076 = vsel %vm4074, %v4068, %v4075
    %vm4077 = vcmp.eq.s32.totalorder %v4072, 2
    %v4078 = vxor.u32 %v4068, 2147483648
    %v4079 = vsel %vm4077, %v4078, %v4069
    %v4080 = vsel %vm4073, %v4076, %v4079
    %v4081 = vsel %vm4070, nan, %v4080
    %v4082 = vand.u32 2147483647, %v3036
    %vm4083 = vcmp.le.f32.partialorder %v4082, 0.7853982
    %vm4084 = vcmp.lt.s32.totalorder %v3036, 0
    %v4085 = vand.u32 %v3036, 2139095040
    %v4086 = vshrl.u32 %v4085, 23
    %v4087 = vsub.s32 %v4086, 127
    %v4088 = vand.u32 2147483647, %v3036
    %v4089 = vand.u32 %v4088, 8388607
    %v4090 = vor.u32 %v4089, 8388608
    %v4091 = vsub.s32 0, %v4090
    %v4092 = vadd.s32 %v4087, 1
    %vm4093 = vcmp.gt.s32.totalorder %v4092, 0
    %v4094 = vsel %vm4093, %v4092, 0
    %v4095 = vshrl.u32 %v4094, 5
    %v4096 = vand.u32 %v4094, 31
    %v4097 = vsub.s32 32, %v4096
    %v4098 = vshrl.u32 683565275, %v4097
    %v4099 = vshll.u32 683565275, %v4096
    %v4100 = vshrl.u32 2475754826, %v4097
    %v4101 = vor.u32 %v4099, %v4100
    %v4102 = vshll.u32 2475754826, %v4096
    %v4103 = vshrl.u32 2131351028, %v4097
    %v4104 = vor.u32 %v4102, %v4103
    %v4105 = vshll.u32 2131351028, %v4096
    %v4106 = vshrl.u32 2102212464, %v4097
    %v4107 = vor.u32 %v4105, %v4106
    %v4108 = vshll.u32 2102212464, %v4096
    %v4109 = vshrl.u32 920167782, %v4097
    %v4110 = vor.u32 %v4108, %v4109
    %v4111 = vshll.u32 920167782, %v4096
    %v4112 = vshrl.u32 1326507024, %v4097
    %v4113 = vor.u32 %v4111, %v4112
    %vm4114 = vcmp.lt.s32.totalorder %v4095, 1
    %vm4115 = vcmp.lt.s32.totalorder %v4095, 2
    %vm4116 = vcmp.lt.s32.totalorder %v4095, 3
    %vm4117 = vcmp.lt.s32.totalorder %v4095, 4
    %v4118 = vsel %vm4114, %v4098, %v4101
    %v4119 = vsel %vm4117, %v4107, 2102212464
    %v4120 = vsel %vm4116, %v4104, %v4119
    %v4121 = vsel %vm4115, %v4118, %v4120
    %v4122 = vsel %vm4114, %v4101, %v4104
    %v4123 = vsel %vm4117, %v4110, 920167782
    %v4124 = vsel %vm4116, %v4107, %v4123
    %v4125 = vsel %vm4115, %v4122, %v4124
    %v4126 = vsel %vm4114, %v4104, %v4107
    %v4127 = vsel %vm4117, %v4113, 1326507024
    %v4128 = vsel %vm4116, %v4110, %v4127
    %v4129 = vsel %vm4115, %v4126, %v4128
    %v4130 = vshll.u32 %v4090, 8
    %v4131 = vmul.u32.u64.compose %v4130, %v4129
    %v4132 = vextract.low.u32 %v4131
    %v4133 = vextract.high.u32 %v4131
    %v4134 = vmul.u32.u64.compose %v4130, %v4125
    %v4135 = vextract.low.u32 %v4134
    %v4136 = vextract.high.u32 %v4134
    %v4137 = vmul.u32 %v4130, %v4121
    %v4138 = vadd.s32 %v4133, %v4135
    %vm4139 = vc.u32 %v4133, %v4135
    %v4140 = vadd.s32 %v4136, 1
    %v4141 = vsel %vm4139, %v4140, %v4136
    %v4142 = vadd.s32 %v4137, %v4141
    %v4143 = vadd.s32 %v4142, 536870912
    %v4144 = vshrl.u32 %v4143, 30
    %v4145 = vshll.u32 %v4144, 30
    %v4146 = vsub.s32 %v4142, %v4145
    %vm4147 = vcmp.lt.s32.totalorder %v4146, 0
    %v4148 = vsub.s32 0, %v4146
    %v4149 = vsel %vm4147, %v4148, %v4146
    %v4150 = vclz %v4149
    %v4151 = vsub.s32 %v4150, 2
    %vm4152 = vcmp.gt.s32.totalorder 0, %v4151
    %v4153 = vsel %vm4152, 0, %v4151
    %v4154 = vsub.s32 32, %v4153
    %v4155 = vshll.u32 %v4146, %v4153
    %v4156 = vshrl.u32 %v4138, %v4154
    %v4157 = vor.u32 %v4155, %v4156
    %v4158 = vsub.s32 4294967266, %v4153
    %v4159 = vadd.s32 %v4158, 127
    %v4160 = vshll.u32 %v4159, 23
    %v4161 = vor.u32 4788187, %v4160
    %v4162 = vand.u32 2147483647, %v4161
    %v4164 = vcvt.s32.f32 %v4157
    %v4165 = vmul.f32 %v4164, %v4162
    %v4166 = vxor.u32 %v4165, 2147483648
    %v4167 = vsel %vm4084, %v4166, %v4165
    %v4168 = vsub.s32 4, %v4144
    %v4169 = vsel %vm4084, %v4168, %v4144
    %v4170 = vsel %vm4083, %v3036, %v4167
    %v4171 = vsel %vm4083, 0, %v4169
    %v4172 = vcosq.f32.pop %v4170
    %v4173 = vsinq.f32.pop %v4170
    %vm4174 = vweird.f32 %v3036
    %v4175 = vadd.s32 %v4171, 3
    %v4176 = vand.u32 %v4175, 3
    %vm4177 = vcmp.lt.s32.totalorder %v4176, 2
    %vm4178 = vcmp.eq.s32.totalorder %v4176, 0
    %v4179 = vxor.u32 %v4173, 2147483648
    %v4180 = vsel %vm4178, %v4172, %v4179
    %vm4181 = vcmp.eq.s32.totalorder %v4176, 2
    %v4182 = vxor.u32 %v4172, 2147483648
    %v4183 = vsel %vm4181, %v4182, %v4173
    %v4184 = vsel %vm4177, %v4180, %v4183
    %v4185 = vsel %vm4174, nan, %v4184
    %v4186 = vand.u32 2147483647, %v3037
    %vm4187 = vcmp.le.f32.partialorder %v4186, 0.7853982
    %vm4188 = vcmp.lt.s32.totalorder %v3037, 0
    %v4189 = vand.u32 %v3037, 2139095040
    %v4190 = vshrl.u32 %v4189, 23
    %v4191 = vsub.s32 %v4190, 127
    %v4192 = vand.u32 2147483647, %v3037
    %v4193 = vand.u32 %v4192, 8388607
    %v4194 = vor.u32 %v4193, 8388608
    %v4195 = vsub.s32 0, %v4194
    %v4196 = vadd.s32 %v4191, 1
    %vm4197 = vcmp.gt.s32.totalorder %v4196, 0
    %v4198 = vsel %vm4197, %v4196, 0
    %v4199 = vshrl.u32 %v4198, 5
    %v4200 = vand.u32 %v4198, 31
    %v4201 = vsub.s32 32, %v4200
    %v4202 = vshrl.u32 683565275, %v4201
    %v4203 = vshll.u32 683565275, %v4200
    %v4204 = vshrl.u32 2475754826, %v4201
    %v4205 = vor.u32 %v4203, %v4204
    %v4206 = vshll.u32 2475754826, %v4200
    %v4207 = vshrl.u32 2131351028, %v4201
    %v4208 = vor.u32 %v4206, %v4207
    %v4209 = vshll.u32 2131351028, %v4200
    %v4210 = vshrl.u32 2102212464, %v4201
    %v4211 = vor.u32 %v4209, %v4210
    %v4212 = vshll.u32 2102212464, %v4200
    %v4213 = vshrl.u32 920167782, %v4201
    %v4214 = vor.u32 %v4212, %v4213
    %v4215 = vshll.u32 920167782, %v4200
    %v4216 = vshrl.u32 1326507024, %v4201
    %v4217 = vor.u32 %v4215, %v4216
    %vm4218 = vcmp.lt.s32.totalorder %v4199, 1
    %vm4219 = vcmp.lt.s32.totalorder %v4199, 2
    %vm4220 = vcmp.lt.s32.totalorder %v4199, 3
    %vm4221 = vcmp.lt.s32.totalorder %v4199, 4
    %v4222 = vsel %vm4218, %v4202, %v4205
    %v4223 = vsel %vm4221, %v4211, 2102212464
    %v4224 = vsel %vm4220, %v4208, %v4223
    %v4225 = vsel %vm4219, %v4222, %v4224
    %v4226 = vsel %vm4218, %v4205, %v4208
    %v4227 = vsel %vm4221, %v4214, 920167782
    %v4228 = vsel %vm4220, %v4211, %v4227
    %v4229 = vsel %vm4219, %v4226, %v4228
    %v4230 = vsel %vm4218, %v4208, %v4211
    %v4231 = vsel %vm4221, %v4217, 1326507024
    %v4232 = vsel %vm4220, %v4214, %v4231
    %v4233 = vsel %vm4219, %v4230, %v4232
    %v4234 = vshll.u32 %v4194, 8
    %v4235 = vmul.u32.u64.compose %v4234, %v4233
    %v4236 = vextract.low.u32 %v4235
    %v4237 = vextract.high.u32 %v4235
    %v4238 = vmul.u32.u64.compose %v4234, %v4229
    %v4239 = vextract.low.u32 %v4238
    %v4240 = vextract.high.u32 %v4238
    %v4241 = vmul.u32 %v4234, %v4225
    %v4242 = vadd.s32 %v4237, %v4239
    %vm4243 = vc.u32 %v4237, %v4239
    %v4244 = vadd.s32 %v4240, 1
    %v4245 = vsel %vm4243, %v4244, %v4240
    %v4246 = vadd.s32 %v4241, %v4245
    %v4247 = vadd.s32 %v4246, 536870912
    %v4248 = vshrl.u32 %v4247, 30
    %v4249 = vshll.u32 %v4248, 30
    %v4250 = vsub.s32 %v4246, %v4249
    %vm4251 = vcmp.lt.s32.totalorder %v4250, 0
    %v4252 = vsub.s32 0, %v4250
    %v4253 = vsel %vm4251, %v4252, %v4250
    %v4254 = vclz %v4253
    %v4255 = vsub.s32 %v4254, 2
    %vm4256 = vcmp.gt.s32.totalorder 0, %v4255
    %v4257 = vsel %vm4256, 0, %v4255
    %v4258 = vsub.s32 32, %v4257
    %v4259 = vshll.u32 %v4250, %v4257
    %v4260 = vshrl.u32 %v4242, %v4258
    %v4261 = vor.u32 %v4259, %v4260
    %v4262 = vsub.s32 4294967266, %v4257
    %v4263 = vadd.s32 %v4262, 127
    %v4264 = vshll.u32 %v4263, 23
    %v4265 = vor.u32 4788187, %v4264
    %v4266 = vand.u32 2147483647, %v4265
    %v4268 = vcvt.s32.f32 %v4261
    %v4269 = vmul.f32 %v4268, %v4266
    %v4270 = vxor.u32 %v4269, 2147483648
    %v4271 = vsel %vm4188, %v4270, %v4269
    %v4272 = vsub.s32 4, %v4248
    %v4273 = vsel %vm4188, %v4272, %v4248
    %v4274 = vsel %vm4187, %v3037, %v4271
    %v4275 = vsel %vm4187, 0, %v4273
    %v4276 = vcosq.f32.pop %v4274
    %v4277 = vsinq.f32.pop %v4274
    %vm4278 = vweird.f32 %v3037
    %v4279 = vadd.s32 %v4275, 3
    %v4280 = vand.u32 %v4279, 3
    %vm4281 = vcmp.lt.s32.totalorder %v4280, 2
    %vm4282 = vcmp.eq.s32.totalorder %v4280, 0
    %v4283 = vxor.u32 %v4277, 2147483648
    %v4284 = vsel %vm4282, %v4276, %v4283
    %vm4285 = vcmp.eq.s32.totalorder %v4280, 2
    %v4286 = vxor.u32 %v4276, 2147483648
    %v4287 = vsel %vm4285, %v4286, %v4277
    %v4288 = vsel %vm4281, %v4284, %v4287
    %v4289 = vsel %vm4278, nan, %v4288
    %v4290 = vand.u32 2147483647, %v3038
    %vm4291 = vcmp.le.f32.partialorder %v4290, 0.7853982
    %vm4292 = vcmp.lt.s32.totalorder %v3038, 0
    %v4293 = vand.u32 %v3038, 2139095040
    %v4294 = vshrl.u32 %v4293, 23
    %v4295 = vsub.s32 %v4294, 127
    %v4296 = vand.u32 2147483647, %v3038
    %v4297 = vand.u32 %v4296, 8388607
    %v4298 = vor.u32 %v4297, 8388608
    %v4299 = vsub.s32 0, %v4298
    %v4300 = vadd.s32 %v4295, 1
    %vm4301 = vcmp.gt.s32.totalorder %v4300, 0
    %v4302 = vsel %vm4301, %v4300, 0
    %v4303 = vshrl.u32 %v4302, 5
    %v4304 = vand.u32 %v4302, 31
    %v4305 = vsub.s32 32, %v4304
    %v4306 = vshrl.u32 683565275, %v4305
    %v4307 = vshll.u32 683565275, %v4304
    %v4308 = vshrl.u32 2475754826, %v4305
    %v4309 = vor.u32 %v4307, %v4308
    %v4310 = vshll.u32 2475754826, %v4304
    %v4311 = vshrl.u32 2131351028, %v4305
    %v4312 = vor.u32 %v4310, %v4311
    %v4313 = vshll.u32 2131351028, %v4304
    %v4314 = vshrl.u32 2102212464, %v4305
    %v4315 = vor.u32 %v4313, %v4314
    %v4316 = vshll.u32 2102212464, %v4304
    %v4317 = vshrl.u32 920167782, %v4305
    %v4318 = vor.u32 %v4316, %v4317
    %v4319 = vshll.u32 920167782, %v4304
    %v4320 = vshrl.u32 1326507024, %v4305
    %v4321 = vor.u32 %v4319, %v4320
    %vm4322 = vcmp.lt.s32.totalorder %v4303, 1
    %vm4323 = vcmp.lt.s32.totalorder %v4303, 2
    %vm4324 = vcmp.lt.s32.totalorder %v4303, 3
    %vm4325 = vcmp.lt.s32.totalorder %v4303, 4
    %v4326 = vsel %vm4322, %v4306, %v4309
    %v4327 = vsel %vm4325, %v4315, 2102212464
    %v4328 = vsel %vm4324, %v4312, %v4327
    %v4329 = vsel %vm4323, %v4326, %v4328
    %v4330 = vsel %vm4322, %v4309, %v4312
    %v4331 = vsel %vm4325, %v4318, 920167782
    %v4332 = vsel %vm4324, %v4315, %v4331
    %v4333 = vsel %vm4323, %v4330, %v4332
    %v4334 = vsel %vm4322, %v4312, %v4315
    %v4335 = vsel %vm4325, %v4321, 1326507024
    %v4336 = vsel %vm4324, %v4318, %v4335
    %v4337 = vsel %vm4323, %v4334, %v4336
    %v4338 = vshll.u32 %v4298, 8
    %v4339 = vmul.u32.u64.compose %v4338, %v4337
    %v4340 = vextract.low.u32 %v4339
    %v4341 = vextract.high.u32 %v4339
    %v4342 = vmul.u32.u64.compose %v4338, %v4333
    %v4343 = vextract.low.u32 %v4342
    %v4344 = vextract.high.u32 %v4342
    %v4345 = vmul.u32 %v4338, %v4329
    %v4346 = vadd.s32 %v4341, %v4343
    %vm4347 = vc.u32 %v4341, %v4343
    %v4348 = vadd.s32 %v4344, 1
    %v4349 = vsel %vm4347, %v4348, %v4344
    %v4350 = vadd.s32 %v4345, %v4349
    %v4351 = vadd.s32 %v4350, 536870912
    %v4352 = vshrl.u32 %v4351, 30
    %v4353 = vshll.u32 %v4352, 30
    %v4354 = vsub.s32 %v4350, %v4353
    %vm4355 = vcmp.lt.s32.totalorder %v4354, 0
    %v4356 = vsub.s32 0, %v4354
    %v4357 = vsel %vm4355, %v4356, %v4354
    %v4358 = vclz %v4357
    %v4359 = vsub.s32 %v4358, 2
    %vm4360 = vcmp.gt.s32.totalorder 0, %v4359
    %v4361 = vsel %vm4360, 0, %v4359
    %v4362 = vsub.s32 32, %v4361
    %v4363 = vshll.u32 %v4354, %v4361
    %v4364 = vshrl.u32 %v4346, %v4362
    %v4365 = vor.u32 %v4363, %v4364
    %v4366 = vsub.s32 4294967266, %v4361
    %v4367 = vadd.s32 %v4366, 127
    %v4368 = vshll.u32 %v4367, 23
    %v4369 = vor.u32 4788187, %v4368
    %v4370 = vand.u32 2147483647, %v4369
    %v4372 = vcvt.s32.f32 %v4365
    %v4373 = vmul.f32 %v4372, %v4370
    %v4374 = vxor.u32 %v4373, 2147483648
    %v4375 = vsel %vm4292, %v4374, %v4373
    %v4376 = vsub.s32 4, %v4352
    %v4377 = vsel %vm4292, %v4376, %v4352
    %v4378 = vsel %vm4291, %v3038, %v4375
    %v4379 = vsel %vm4291, 0, %v4377
    %v4380 = vcosq.f32.pop %v4378
    %v4381 = vsinq.f32.pop %v4378
    %vm4382 = vweird.f32 %v3038
    %v4383 = vadd.s32 %v4379, 3
    %v4384 = vand.u32 %v4383, 3
    %vm4385 = vcmp.lt.s32.totalorder %v4384, 2
    %vm4386 = vcmp.eq.s32.totalorder %v4384, 0
    %v4387 = vxor.u32 %v4381, 2147483648
    %v4388 = vsel %vm4386, %v4380, %v4387
    %vm4389 = vcmp.eq.s32.totalorder %v4384, 2
    %v4390 = vxor.u32 %v4380, 2147483648
    %v4391 = vsel %vm4389, %v4390, %v4381
    %v4392 = vsel %vm4385, %v4388, %v4391
    %v4393 = vsel %vm4382, nan, %v4392
    %v4394 = vand.u32 2147483647, %v3039
    %vm4395 = vcmp.le.f32.partialorder %v4394, 0.7853982
    %vm4396 = vcmp.lt.s32.totalorder %v3039, 0
    %v4397 = vand.u32 %v3039, 2139095040
    %v4398 = vshrl.u32 %v4397, 23
    %v4399 = vsub.s32 %v4398, 127
    %v4400 = vand.u32 2147483647, %v3039
    %v4401 = vand.u32 %v4400, 8388607
    %v4402 = vor.u32 %v4401, 8388608
    %v4403 = vsub.s32 0, %v4402
    %v4404 = vadd.s32 %v4399, 1
    %vm4405 = vcmp.gt.s32.totalorder %v4404, 0
    %v4406 = vsel %vm4405, %v4404, 0
    %v4407 = vshrl.u32 %v4406, 5
    %v4408 = vand.u32 %v4406, 31
    %v4409 = vsub.s32 32, %v4408
    %v4410 = vshrl.u32 683565275, %v4409
    %v4411 = vshll.u32 683565275, %v4408
    %v4412 = vshrl.u32 2475754826, %v4409
    %v4413 = vor.u32 %v4411, %v4412
    %v4414 = vshll.u32 2475754826, %v4408
    %v4415 = vshrl.u32 2131351028, %v4409
    %v4416 = vor.u32 %v4414, %v4415
    %v4417 = vshll.u32 2131351028, %v4408
    %v4418 = vshrl.u32 2102212464, %v4409
    %v4419 = vor.u32 %v4417, %v4418
    %v4420 = vshll.u32 2102212464, %v4408
    %v4421 = vshrl.u32 920167782, %v4409
    %v4422 = vor.u32 %v4420, %v4421
    %v4423 = vshll.u32 920167782, %v4408
    %v4424 = vshrl.u32 1326507024, %v4409
    %v4425 = vor.u32 %v4423, %v4424
    %vm4426 = vcmp.lt.s32.totalorder %v4407, 1
    %vm4427 = vcmp.lt.s32.totalorder %v4407, 2
    %vm4428 = vcmp.lt.s32.totalorder %v4407, 3
    %vm4429 = vcmp.lt.s32.totalorder %v4407, 4
    %v4430 = vsel %vm4426, %v4410, %v4413
    %v4431 = vsel %vm4429, %v4419, 2102212464
    %v4432 = vsel %vm4428, %v4416, %v4431
    %v4433 = vsel %vm4427, %v4430, %v4432
    %v4434 = vsel %vm4426, %v4413, %v4416
    %v4435 = vsel %vm4429, %v4422, 920167782
    %v4436 = vsel %vm4428, %v4419, %v4435
    %v4437 = vsel %vm4427, %v4434, %v4436
    %v4438 = vsel %vm4426, %v4416, %v4419
    %v4439 = vsel %vm4429, %v4425, 1326507024
    %v4440 = vsel %vm4428, %v4422, %v4439
    %v4441 = vsel %vm4427, %v4438, %v4440
    %v4442 = vshll.u32 %v4402, 8
    %v4443 = vmul.u32.u64.compose %v4442, %v4441
    %v4444 = vextract.low.u32 %v4443
    %v4445 = vextract.high.u32 %v4443
    %v4446 = vmul.u32.u64.compose %v4442, %v4437
    %v4447 = vextract.low.u32 %v4446
    %v4448 = vextract.high.u32 %v4446
    %v4449 = vmul.u32 %v4442, %v4433
    %v4450 = vadd.s32 %v4445, %v4447
    %vm4451 = vc.u32 %v4445, %v4447
    %v4452 = vadd.s32 %v4448, 1
    %v4453 = vsel %vm4451, %v4452, %v4448
    %v4454 = vadd.s32 %v4449, %v4453
    %v4455 = vadd.s32 %v4454, 536870912
    %v4456 = vshrl.u32 %v4455, 30
    %v4457 = vshll.u32 %v4456, 30
    %v4458 = vsub.s32 %v4454, %v4457
    %vm4459 = vcmp.lt.s32.totalorder %v4458, 0
    %v4460 = vsub.s32 0, %v4458
    %v4461 = vsel %vm4459, %v4460, %v4458
    %v4462 = vclz %v4461
    %v4463 = vsub.s32 %v4462, 2
    %vm4464 = vcmp.gt.s32.totalorder 0, %v4463
    %v4465 = vsel %vm4464, 0, %v4463
    %v4466 = vsub.s32 32, %v4465
    %v4467 = vshll.u32 %v4458, %v4465
    %v4468 = vshrl.u32 %v4450, %v4466
    %v4469 = vor.u32 %v4467, %v4468
    %v4470 = vsub.s32 4294967266, %v4465
    %v4471 = vadd.s32 %v4470, 127
    %v4472 = vshll.u32 %v4471, 23
    %v4473 = vor.u32 4788187, %v4472
    %v4474 = vand.u32 2147483647, %v4473
    %v4476 = vcvt.s32.f32 %v4469
    %v4477 = vmul.f32 %v4476, %v4474
    %v4478 = vxor.u32 %v4477, 2147483648
    %v4479 = vsel %vm4396, %v4478, %v4477
    %v4480 = vsub.s32 4, %v4456
    %v4481 = vsel %vm4396, %v4480, %v4456
    %v4482 = vsel %vm4395, %v3039, %v4479
    %v4483 = vsel %vm4395, 0, %v4481
    %v4484 = vcosq.f32.pop %v4482
    %v4485 = vsinq.f32.pop %v4482
    %vm4486 = vweird.f32 %v3039
    %v4487 = vadd.s32 %v4483, 3
    %v4488 = vand.u32 %v4487, 3
    %vm4489 = vcmp.lt.s32.totalorder %v4488, 2
    %vm4490 = vcmp.eq.s32.totalorder %v4488, 0
    %v4491 = vxor.u32 %v4485, 2147483648
    %v4492 = vsel %vm4490, %v4484, %v4491
    %vm4493 = vcmp.eq.s32.totalorder %v4488, 2
    %v4494 = vxor.u32 %v4484, 2147483648
    %v4495 = vsel %vm4493, %v4494, %v4485
    %v4496 = vsel %vm4489, %v4492, %v4495
    %v4497 = vsel %vm4486, nan, %v4496
    %v4498 = vand.u32 2147483647, %v3040
    %vm4499 = vcmp.le.f32.partialorder %v4498, 0.7853982
    %vm4500 = vcmp.lt.s32.totalorder %v3040, 0
    %v4501 = vand.u32 %v3040, 2139095040
    %v4502 = vshrl.u32 %v4501, 23
    %v4503 = vsub.s32 %v4502, 127
    %v4504 = vand.u32 2147483647, %v3040
    %v4505 = vand.u32 %v4504, 8388607
    %v4506 = vor.u32 %v4505, 8388608
    %v4507 = vsub.s32 0, %v4506
    %v4508 = vadd.s32 %v4503, 1
    %vm4509 = vcmp.gt.s32.totalorder %v4508, 0
    %v4510 = vsel %vm4509, %v4508, 0
    %v4511 = vshrl.u32 %v4510, 5
    %v4512 = vand.u32 %v4510, 31
    %v4513 = vsub.s32 32, %v4512
    %v4514 = vshrl.u32 683565275, %v4513
    %v4515 = vshll.u32 683565275, %v4512
    %v4516 = vshrl.u32 2475754826, %v4513
    %v4517 = vor.u32 %v4515, %v4516
    %v4518 = vshll.u32 2475754826, %v4512
    %v4519 = vshrl.u32 2131351028, %v4513
    %v4520 = vor.u32 %v4518, %v4519
    %v4521 = vshll.u32 2131351028, %v4512
    %v4522 = vshrl.u32 2102212464, %v4513
    %v4523 = vor.u32 %v4521, %v4522
    %v4524 = vshll.u32 2102212464, %v4512
    %v4525 = vshrl.u32 920167782, %v4513
    %v4526 = vor.u32 %v4524, %v4525
    %v4527 = vshll.u32 920167782, %v4512
    %v4528 = vshrl.u32 1326507024, %v4513
    %v4529 = vor.u32 %v4527, %v4528
    %vm4530 = vcmp.lt.s32.totalorder %v4511, 1
    %vm4531 = vcmp.lt.s32.totalorder %v4511, 2
    %vm4532 = vcmp.lt.s32.totalorder %v4511, 3
    %vm4533 = vcmp.lt.s32.totalorder %v4511, 4
    %v4534 = vsel %vm4530, %v4514, %v4517
    %v4535 = vsel %vm4533, %v4523, 2102212464
    %v4536 = vsel %vm4532, %v4520, %v4535
    %v4537 = vsel %vm4531, %v4534, %v4536
    %v4538 = vsel %vm4530, %v4517, %v4520
    %v4539 = vsel %vm4533, %v4526, 920167782
    %v4540 = vsel %vm4532, %v4523, %v4539
    %v4541 = vsel %vm4531, %v4538, %v4540
    %v4542 = vsel %vm4530, %v4520, %v4523
    %v4543 = vsel %vm4533, %v4529, 1326507024
    %v4544 = vsel %vm4532, %v4526, %v4543
    %v4545 = vsel %vm4531, %v4542, %v4544
    %v4546 = vshll.u32 %v4506, 8
    %v4547 = vmul.u32.u64.compose %v4546, %v4545
    %v4548 = vextract.low.u32 %v4547
    %v4549 = vextract.high.u32 %v4547
    %v4550 = vmul.u32.u64.compose %v4546, %v4541
    %v4551 = vextract.low.u32 %v4550
    %v4552 = vextract.high.u32 %v4550
    %v4553 = vmul.u32 %v4546, %v4537
    %v4554 = vadd.s32 %v4549, %v4551
    %vm4555 = vc.u32 %v4549, %v4551
    %v4556 = vadd.s32 %v4552, 1
    %v4557 = vsel %vm4555, %v4556, %v4552
    %v4558 = vadd.s32 %v4553, %v4557
    %v4559 = vadd.s32 %v4558, 536870912
    %v4560 = vshrl.u32 %v4559, 30
    %v4561 = vshll.u32 %v4560, 30
    %v4562 = vsub.s32 %v4558, %v4561
    %vm4563 = vcmp.lt.s32.totalorder %v4562, 0
    %v4564 = vsub.s32 0, %v4562
    %v4565 = vsel %vm4563, %v4564, %v4562
    %v4566 = vclz %v4565
    %v4567 = vsub.s32 %v4566, 2
    %vm4568 = vcmp.gt.s32.totalorder 0, %v4567
    %v4569 = vsel %vm4568, 0, %v4567
    %v4570 = vsub.s32 32, %v4569
    %v4571 = vshll.u32 %v4562, %v4569
    %v4572 = vshrl.u32 %v4554, %v4570
    %v4573 = vor.u32 %v4571, %v4572
    %v4574 = vsub.s32 4294967266, %v4569
    %v4575 = vadd.s32 %v4574, 127
    %v4576 = vshll.u32 %v4575, 23
    %v4577 = vor.u32 4788187, %v4576
    %v4578 = vand.u32 2147483647, %v4577
    %v4580 = vcvt.s32.f32 %v4573
    %v4581 = vmul.f32 %v4580, %v4578
    %v4582 = vxor.u32 %v4581, 2147483648
    %v4583 = vsel %vm4500, %v4582, %v4581
    %v4584 = vsub.s32 4, %v4560
    %v4585 = vsel %vm4500, %v4584, %v4560
    %v4586 = vsel %vm4499, %v3040, %v4583
    %v4587 = vsel %vm4499, 0, %v4585
    %v4588 = vcosq.f32.pop %v4586
    %v4589 = vsinq.f32.pop %v4586
    %vm4590 = vweird.f32 %v3040
    %v4591 = vadd.s32 %v4587, 3
    %v4592 = vand.u32 %v4591, 3
    %vm4593 = vcmp.lt.s32.totalorder %v4592, 2
    %vm4594 = vcmp.eq.s32.totalorder %v4592, 0
    %v4595 = vxor.u32 %v4589, 2147483648
    %v4596 = vsel %vm4594, %v4588, %v4595
    %vm4597 = vcmp.eq.s32.totalorder %v4592, 2
    %v4598 = vxor.u32 %v4588, 2147483648
    %v4599 = vsel %vm4597, %v4598, %v4589
    %v4600 = vsel %vm4593, %v4596, %v4599
    %v4601 = vsel %vm4590, nan, %v4600
    %v4602 = vand.u32 2147483647, %v3041
    %vm4603 = vcmp.le.f32.partialorder %v4602, 0.7853982
    %vm4604 = vcmp.lt.s32.totalorder %v3041, 0
    %v4605 = vand.u32 %v3041, 2139095040
    %v4606 = vshrl.u32 %v4605, 23
    %v4607 = vsub.s32 %v4606, 127
    %v4608 = vand.u32 2147483647, %v3041
    %v4609 = vand.u32 %v4608, 8388607
    %v4610 = vor.u32 %v4609, 8388608
    %v4611 = vsub.s32 0, %v4610
    %v4612 = vadd.s32 %v4607, 1
    %vm4613 = vcmp.gt.s32.totalorder %v4612, 0
    %v4614 = vsel %vm4613, %v4612, 0
    %v4615 = vshrl.u32 %v4614, 5
    %v4616 = vand.u32 %v4614, 31
    %v4617 = vsub.s32 32, %v4616
    %v4618 = vshrl.u32 683565275, %v4617
    %v4619 = vshll.u32 683565275, %v4616
    %v4620 = vshrl.u32 2475754826, %v4617
    %v4621 = vor.u32 %v4619, %v4620
    %v4622 = vshll.u32 2475754826, %v4616
    %v4623 = vshrl.u32 2131351028, %v4617
    %v4624 = vor.u32 %v4622, %v4623
    %v4625 = vshll.u32 2131351028, %v4616
    %v4626 = vshrl.u32 2102212464, %v4617
    %v4627 = vor.u32 %v4625, %v4626
    %v4628 = vshll.u32 2102212464, %v4616
    %v4629 = vshrl.u32 920167782, %v4617
    %v4630 = vor.u32 %v4628, %v4629
    %v4631 = vshll.u32 920167782, %v4616
    %v4632 = vshrl.u32 1326507024, %v4617
    %v4633 = vor.u32 %v4631, %v4632
    %vm4634 = vcmp.lt.s32.totalorder %v4615, 1
    %vm4635 = vcmp.lt.s32.totalorder %v4615, 2
    %vm4636 = vcmp.lt.s32.totalorder %v4615, 3
    %vm4637 = vcmp.lt.s32.totalorder %v4615, 4
    %v4638 = vsel %vm4634, %v4618, %v4621
    %v4639 = vsel %vm4637, %v4627, 2102212464
    %v4640 = vsel %vm4636, %v4624, %v4639
    %v4641 = vsel %vm4635, %v4638, %v4640
    %v4642 = vsel %vm4634, %v4621, %v4624
    %v4643 = vsel %vm4637, %v4630, 920167782
    %v4644 = vsel %vm4636, %v4627, %v4643
    %v4645 = vsel %vm4635, %v4642, %v4644
    %v4646 = vsel %vm4634, %v4624, %v4627
    %v4647 = vsel %vm4637, %v4633, 1326507024
    %v4648 = vsel %vm4636, %v4630, %v4647
    %v4649 = vsel %vm4635, %v4646, %v4648
    %v4650 = vshll.u32 %v4610, 8
    %v4651 = vmul.u32.u64.compose %v4650, %v4649
    %v4652 = vextract.low.u32 %v4651
    %v4653 = vextract.high.u32 %v4651
    %v4654 = vmul.u32.u64.compose %v4650, %v4645
    %v4655 = vextract.low.u32 %v4654
    %v4656 = vextract.high.u32 %v4654
    %v4657 = vmul.u32 %v4650, %v4641
    %v4658 = vadd.s32 %v4653, %v4655
    %vm4659 = vc.u32 %v4653, %v4655
    %v4660 = vadd.s32 %v4656, 1
    %v4661 = vsel %vm4659, %v4660, %v4656
    %v4662 = vadd.s32 %v4657, %v4661
    %v4663 = vadd.s32 %v4662, 536870912
    %v4664 = vshrl.u32 %v4663, 30
    %v4665 = vshll.u32 %v4664, 30
    %v4666 = vsub.s32 %v4662, %v4665
    %vm4667 = vcmp.lt.s32.totalorder %v4666, 0
    %v4668 = vsub.s32 0, %v4666
    %v4669 = vsel %vm4667, %v4668, %v4666
    %v4670 = vclz %v4669
    %v4671 = vsub.s32 %v4670, 2
    %vm4672 = vcmp.gt.s32.totalorder 0, %v4671
    %v4673 = vsel %vm4672, 0, %v4671
    %v4674 = vsub.s32 32, %v4673
    %v4675 = vshll.u32 %v4666, %v4673
    %v4676 = vshrl.u32 %v4658, %v4674
    %v4677 = vor.u32 %v4675, %v4676
    %v4678 = vsub.s32 4294967266, %v4673
    %v4679 = vadd.s32 %v4678, 127
    %v4680 = vshll.u32 %v4679, 23
    %v4681 = vor.u32 4788187, %v4680
    %v4682 = vand.u32 2147483647, %v4681
    %v4684 = vcvt.s32.f32 %v4677
    %v4685 = vmul.f32 %v4684, %v4682
    %v4686 = vxor.u32 %v4685, 2147483648
    %v4687 = vsel %vm4604, %v4686, %v4685
    %v4688 = vsub.s32 4, %v4664
    %v4689 = vsel %vm4604, %v4688, %v4664
    %v4690 = vsel %vm4603, %v3041, %v4687
    %v4691 = vsel %vm4603, 0, %v4689
    %v4692 = vcosq.f32.pop %v4690
    %v4693 = vsinq.f32.pop %v4690
    %vm4694 = vweird.f32 %v3041
    %v4695 = vadd.s32 %v4691, 3
    %v4696 = vand.u32 %v4695, 3
    %vm4697 = vcmp.lt.s32.totalorder %v4696, 2
    %vm4698 = vcmp.eq.s32.totalorder %v4696, 0
    %v4699 = vxor.u32 %v4693, 2147483648
    %v4700 = vsel %vm4698, %v4692, %v4699
    %vm4701 = vcmp.eq.s32.totalorder %v4696, 2
    %v4702 = vxor.u32 %v4692, 2147483648
    %v4703 = vsel %vm4701, %v4702, %v4693
    %v4704 = vsel %vm4697, %v4700, %v4703
    %v4705 = vsel %vm4694, nan, %v4704
    %s4706 = smul.u32 0, 8
    %s4707 = smul.addr %s4706, 8
    %s4708 = scalar_lea.vmem [#allocation10], %s4707
    %4709 = vst [vmem:[%s4708] sm:$0xff] %v3145
    %4710 = vst [vmem:[%s4708 + $0x8] sm:$0xff] %v3249
    %4711 = vst [vmem:[%s4708 + $0x10] sm:$0xff] %v3353
    %4712 = vst [vmem:[%s4708 + $0x18] sm:$0xff] %v3457
    %4713 = vst [vmem:[%s4708 + $0x20] sm:$0xff] %v3561
    %4714 = vst [vmem:[%s4708 + $0x28] sm:$0xff] %v3665
    %4715 = vst [vmem:[%s4708 + $0x30] sm:$0xff] %v3769
    %4716 = vst [vmem:[%s4708 + $0x38] sm:$0xff] %v3873
    %4717 = vst [vmem:[%s4708 + $0x40] sm:$0xff] %v3977
    %4718 = vst [vmem:[%s4708 + $0x48] sm:$0xff] %v4081
    %4719 = vst [vmem:[%s4708 + $0x50] sm:$0xff] %v4185
    %4720 = vst [vmem:[%s4708 + $0x58] sm:$0xff] %v4289
    %4721 = vst [vmem:[%s4708 + $0x60] sm:$0xff] %v4393
    %4722 = vst [vmem:[%s4708 + $0x68] sm:$0xff] %v4497
    %4723 = vst [vmem:[%s4708 + $0x70] sm:$0xff] %v4601
    %4724 = vst [vmem:[%s4708 + $0x78] sm:$0xff] %v4705
    // Predicated region
    $region34: #{tpu_custom_call.1} parent=1 // pred_check
      _
    $region35: #{tpu_custom_call.1} parent=1 // pred_check_branch
      %4726 = sbr.rel (0) target = $region37
    $region36: #{tpu_custom_call.1} parent=1 // pred_region
      %s4728 = ssub.s32 2048, 2048
      %4729 = vsyncadd [#allocation4], %s4728
      %s4730 = sshll.u32 [#allocation10], 4
      %s4731 = int_to_ptr.vmem [resolvable:$true] %s4730
      %4736 = dma.vmem_to_hbm [thread:$0]  %s4731, 2048, %s4, [#allocation4], 1024, 1024, 64
    $region37: #{tpu_custom_call.1} parent=1 // pred_fallthru
      _
    // Predicated region
    $region38: #{tpu_custom_call.1} parent=1 // pred_check
      _
    $region39: #{tpu_custom_call.1} parent=1 // pred_check_branch
      %4738 = sbr.rel (0) target = $region41
    $region40: #{tpu_custom_call.1} parent=1 // pred_region
      %4739 = dma.done [#allocation4], 2048
    $region41: #{tpu_custom_call.1} parent=1 // pred_fallthru
      _
    %4740 = vsyncpa [#allocation3], 1
    %4741 = vsyncpa [#allocation6], 1
    %4742 = vsyncpa [#allocation9], 1
    %4743 = vsyncpa [#allocation4], 1

</llo_original>
